<compile_context>
chip_gen: v6e
topology: v6e:2x2x1
jax: 0.10.0
libtpu: 0.0.40
codegen_flags: <defaults>
</compile_context>

<pallas_src>
import jax
import jax.numpy as jnp
from jax.experimental import pallas as pl
from jax.experimental.pallas import tpu as pltpu

NEG_SLOPE = 0.01  # nn.LeakyReLU() default


def _leaky(x):
    return jnp.where(x > 0, x, NEG_SLOPE * x)


def block_kernel(x_ref, w1t_ref, b1t_ref, w2_ref, b2_ref, w3t_ref, b3t_ref,
                 o_ref, g_ref):
    NB, C, HW = x_ref.shape
    H = g_ref.shape[1] - 2
    W = g_ref.shape[2]
    Cmid = w1t_ref.shape[0]
    f32 = jnp.float32
    bf16 = jnp.bfloat16

    # Zero only the 2 halo rows of the im2col scratch.  Re-done every step:
    # required for correctness under "parallel" megacore sharding (each core
    # owns its own scratch and may never see grid index 0).
    g_ref[:, 0:1] = jnp.zeros((NB, 1, W, 3 * Cmid), f32)
    g_ref[:, H + 1:H + 2] = jnp.zeros((NB, 1, W, 3 * Cmid), f32)

    # Bias loads hoisted out of the unrolled image loop (JAX does not CSE).
    b1v = b1t_ref[...]            # (Cmid, 1)
    b2v = b2_ref[...]             # (1, Cmid)
    b3v = b3t_ref[...]            # (C, 1)

    for n in range(NB):  # NB is small and static -> unrolled
        # ---- conv1 (1x1, BN1 scale folded into w1t), computed TRANSPOSED:
        #      h1^T = (w1*s1)^T @ x^T  -> no input transpose, MXU sees N = HW.
        #      bf16 operands, f32 accumulate; bias + LeakyReLU in f32.
        h1T = jnp.dot(w1t_ref[...], x_ref[n].astype(bf16),
                      preferred_element_type=f32)            # (Cmid, HW) f32
        h1T = _leaky(h1T + b1v)
        h1_3d = jnp.transpose(h1T).reshape(H, W, Cmid)       # (H, W, Cmid)

        # ---- kx-im2col into the VMEM scratch:
        #      g[y+1, x, kx*Cmid + c] = h1[y, x+kx-1, c]  (zero out of range)
        g_ref[n, 1:H + 1, :, Cmid:2 * Cmid] = h1_3d                    # centre
        g_ref[n, 1:H + 1, 0:1, 0:Cmid] = jnp.zeros((H, 1, Cmid), f32)  # left
        g_ref[n, 1:H + 1, 1:W, 0:Cmid] = h1_3d[:, :W - 1, :]
        g_ref[n, 1:H + 1, 0:W - 1, 2 * Cmid:3 * Cmid] = h1_3d[:, 1:, :]  # right
        g_ref[n, 1:H + 1, W - 1:W, 2 * Cmid:3 * Cmid] = jnp.zeros(
            (H, 1, Cmid), f32)

        # ---- conv2 (3x3) = 3 fat bf16 matmuls (K = 3*Cmid), tile-aligned ky
        #      offsets along the leading H axis; summed in ONE expression
        #      (no accumulator read-modify-write through VMEM).
        d0 = jnp.dot(g_ref[n, 0:H].reshape(HW, 3 * Cmid).astype(bf16),
                     w2_ref[0], preferred_element_type=f32)
        d1 = jnp.dot(g_ref[n, 1:H + 1].reshape(HW, 3 * Cmid).astype(bf16),
                     w2_ref[1], preferred_element_type=f32)
        d2 = jnp.dot(g_ref[n, 2:H + 2].reshape(HW, 3 * Cmid).astype(bf16),
                     w2_ref[2], preferred_element_type=f32)
        h2 = _leaky(d0 + d1 + d2 + b2v)                      # (HW, Cmid) f32

        # ---- conv3 (1x1 + bias), computed TRANSPOSED, then residual + leaky.
        h2T = jnp.transpose(h2).astype(bf16)                 # (Cmid, HW)
        outT = jnp.dot(w3t_ref[...], h2T,
                       preferred_element_type=f32)           # (C, HW) f32
        # Re-read x here (don't hold the (C,HW) residual live across the body).
        o_ref[n] = _leaky(outT + b3v + x_ref[n])


def _pick_nb(n_images, num_cores=2, min_steps_per_core=2):
    # Keep >= min_steps_per_core grid steps per TensorCore (v7x has 2 TCs);
    # only batch images per step when the batch is large enough.
    for cand in (8, 4, 2):
        if n_images % cand == 0 and n_images // cand >= num_cores * min_steps_per_core:
            return cand
    return 1


def block_forward(x_nchw, params):
    """x: (N, C, H, W) float32 (PyTorch layout).  Returns (N, C, H, W)."""
    w1, s1, b1, w2, s2, b2, w3, b3 = params
    N, C, H, W = x_nchw.shape
    Cmid = w1.shape[1]
    HW = H * W
    assert W % 8 == 0, "W must be a multiple of 8 (sublane tiling)"
    assert HW % 128 == 0, "H*W must be a multiple of 128 (lane tiling)"
    assert Cmid % 128 == 0, "C//2 must be a multiple of 128 (lane bands)"

    nb = _pick_nb(N)
    f32, bf16 = jnp.float32, jnp.bfloat16

    # Fold BN scales into the conv weights (MXU absorbs the scale) and cast
    # the MXU operands to bf16; only additive shifts remain (kept in f32).
    w1t = jnp.transpose(w1 * s1.reshape(1, Cmid)).astype(bf16)        # (Cmid,C)
    b1t = b1.reshape(Cmid, 1).astype(f32)
    # (ky, kx, cin, cout) -> (ky, kx*Cmid + cin, cout): matches the kx-im2col
    # lane-band layout used by the kernel.
    w2r = (w2 * s2.reshape(1, 1, 1, Cmid)).reshape(3, 3 * Cmid, Cmid).astype(bf16)
    b2r = b2.reshape(1, Cmid).astype(f32)
    w3t = jnp.transpose(w3).astype(bf16)                              # (C,Cmid)
    b3t = b3.reshape(C, 1).astype(f32)

    # Free metadata reshape (no data movement): NCHW stays NCHW, spatial is
    # flattened onto the lane axis.  NO wrapper-side layout transposes.
    x_flat = x_nchw.reshape(N, C, HW)

    def rep(a):  # whole-array block, same block every grid step
        nd = a.ndim
        return pl.BlockSpec(a.shape, lambda n, _nd=nd: (0,) * _nd)

    # VMEM budget check (v7x: 64 MiB physical / 32 MiB default scoped).
    vmem_limit = 32 * 1024 * 1024
    est = (2 * 2 * nb * C * HW * 4                       # in + out, 2 buffers
           + 2 * (w1t.size + w2r.size + w3t.size) * 2    # bf16 weights, 2 bufs
           + 2 * (b1t.size + b2r.size + b3t.size) * 4    # f32 biases, 2 bufs
           + nb * (H + 2) * W * 3 * Cmid * 4)            # im2col scratch
    assert est < vmem_limit, f"VMEM budget exceeded: {est} bytes"

    out_flat = pl.pallas_call(
        block_kernel,
        out_shape=jax.ShapeDtypeStruct((N, C, HW), jnp.float32),
        grid_spec=pltpu.PrefetchScalarGridSpec(
            num_scalar_prefetch=0,
            grid=(N // nb,),
            in_specs=[
                pl.BlockSpec((nb, C, HW), lambda n: (n, 0, 0)),
                rep(w1t), rep(b1t), rep(w2r), rep(b2r), rep(w3t), rep(b3t),
            ],
            out_specs=pl.BlockSpec((nb, C, HW), lambda n: (n, 0, 0)),
            scratch_shapes=[
                pltpu.VMEM((nb, H + 2, W, 3 * Cmid), jnp.float32),  # im2col
            ],
        ),
        compiler_params=pltpu.CompilerParams(
            # batch blocks are independent -> shard across v7x's 2 TensorCores
            dimension_semantics=("parallel",),
            vmem_limit_bytes=vmem_limit),
    )(x_flat, w1t, b1t, w2r, b2r, w3t, b3t)

    return out_flat.reshape(N, C, H, W)


def block_reference(x_nchw, params):
    """Pure-JAX f32 reference with identical math (for verification)."""
    w1, s1, b1, w2, s2, b2, w3, b3 = params
    x = jnp.transpose(x_nchw, (0, 2, 3, 1))
    N, H, W, C = x.shape
    h1 = _leaky(jnp.einsum('nhwc,co->nhwo', x, w1) * s1 + b1)
    h1p = jnp.pad(h1, ((0, 0), (1, 1), (1, 1), (0, 0)))
    h2 = jnp.zeros((N, H, W, w2.shape[-1]), jnp.float32)
    for ky in range(3):
        for kx in range(3):
            h2 = h2 + jnp.einsum('nhwc,co->nhwo',
                                 h1p[:, ky:ky + H, kx:kx + W, :], w2[ky, kx])
    h2 = _leaky(h2 * s2 + b2)
    out = _leaky(jnp.einsum('nhwc,co->nhwo', h2, w3) + b3 + x)
    return jnp.transpose(out, (0, 3, 1, 2))


if __name__ == "__main__":
    key = jax.random.PRNGKey(0)
    # NCHW (PyTorch convention).  C=256 -> Cmid=128 keeps lane dims dense.
    N, C, H, W = 4, 256, 16, 16
    Cmid = C // 2
    ks = jax.random.split(key, 13)

    x_nchw = jax.random.normal(ks[0], (N, C, H, W), jnp.float32)

    def bn_fold(kg, kb, km, kv, ch):
        # inference-mode BatchNorm folded to a per-channel scale / shift
        gamma = jax.random.uniform(kg, (1, ch), minval=0.5, maxval=1.5)
        beta = 0.1 * jax.random.normal(kb, (1, ch))
        mean = 0.1 * jax.random.normal(km, (1, ch))
        var = jax.random.uniform(kv, (1, ch), minval=0.5, maxval=1.5)
        scale = gamma / jnp.sqrt(var + 1e-5)
        return (scale.astype(jnp.float32),
                (beta - mean * scale).astype(jnp.float32))

    # conv weights stored as (Cin, Cout) / (kh, kw, Cin, Cout); fan-in scaled
    # so activations stay O(1) and the bf16-operand error stays small.
    w1 = jax.random.normal(ks[1], (C, Cmid), jnp.float32) / jnp.sqrt(C * 1.0)
    s1, b1 = bn_fold(ks[2], ks[3], ks[4], ks[5], Cmid)
    w2 = jax.random.normal(ks[6], (3, 3, Cmid, Cmid),
                           jnp.float32) / jnp.sqrt(9.0 * Cmid)
    s2, b2 = bn_fold(ks[7], ks[8], ks[9], ks[10], Cmid)
    w3 = jax.random.normal(ks[11], (Cmid, C), jnp.float32) / jnp.sqrt(Cmid * 1.0)
    b3 = 0.1 * jax.random.normal(ks[12], (1, C), jnp.float32)
    params = (w1, s1, b1, w2, s2, b2, w3, b3)

    out = jax.block_until_ready(jax.jit(block_forward)(x_nchw, params))

    ref = block_reference(x_nchw, params)
    assert out.shape == (N, C, H, W)
    err = float(jnp.max(jnp.abs(out - ref)))
    # bf16 MXU operands (f32 accumulation) vs. a pure-f32 reference.
    assert jnp.allclose(out, ref, atol=1e-1, rtol=1e-1), err
    print("KERNEL_OK")
</pallas_src>

<mosaic_0001>
module attributes {stable_mosaic.version = 11 : i64} {
  func.func @block_kernel(%arg0: i32, %arg1: memref<1x256x256xf32, #tpu.memory_space<vmem>>, %arg2: memref<128x256xbf16, #tpu.memory_space<vmem>>, %arg3: memref<128x1xf32, #tpu.memory_space<vmem>>, %arg4: memref<3x384x128xbf16, #tpu.memory_space<vmem>>, %arg5: memref<1x128xf32, #tpu.memory_space<vmem>>, %arg6: memref<256x128xbf16, #tpu.memory_space<vmem>>, %arg7: memref<256x1xf32, #tpu.memory_space<vmem>>, %arg8: memref<1x256x256xf32, #tpu.memory_space<vmem>>, %arg9: memref<1x18x16x384xf32, #tpu.memory_space<vmem>>) attributes {dimension_semantics = [#tpu.dimension_semantics<parallel>], iteration_bounds = array<i64: 4>, scalar_prefetch = 0 : i64, scratch_operands = 1 : i64, tpu.core_type = #tpu.core_type<tc>, window_params = [{transform_indices = @transform_0, window_bounds = array<i64: 1, 256, 256>}, {pipeline_mode = #tpu.pipeline_mode<synchronous>, transform_indices = @transform_1, window_bounds = array<i64: 128, 256>}, {pipeline_mode = #tpu.pipeline_mode<synchronous>, transform_indices = @transform_2, window_bounds = array<i64: 128, 1>}, {pipeline_mode = #tpu.pipeline_mode<synchronous>, transform_indices = @transform_3, window_bounds = array<i64: 3, 384, 128>}, {pipeline_mode = #tpu.pipeline_mode<synchronous>, transform_indices = @transform_4, window_bounds = array<i64: 1, 128>}, {pipeline_mode = #tpu.pipeline_mode<synchronous>, transform_indices = @transform_5, window_bounds = array<i64: 256, 128>}, {pipeline_mode = #tpu.pipeline_mode<synchronous>, transform_indices = @transform_6, window_bounds = array<i64: 256, 1>}, {transform_indices = @transform_7, window_bounds = array<i64: 1, 256, 256>}]} {
    %cst = arith.constant 0.000000e+00 : f32
    %0 = vector.broadcast %cst : f32 to vector<1x1x16x384xf32>
    %c0 = arith.constant 0 : index
    %c0_0 = arith.constant 0 : index
    %c0_1 = arith.constant 0 : index
    %c0_2 = arith.constant 0 : index
    %1 = vector.load %arg9[%c0, %c0_0, %c0_1, %c0_2] : memref<1x18x16x384xf32, #tpu.memory_space<vmem>>, vector<1x1x16x384xf32>
    tpu.vector_store %arg9[%c0, %c0_0, %c0_1, %c0_2], %0 {strides = array<i32>} : memref<1x18x16x384xf32, #tpu.memory_space<vmem>>, vector<1x1x16x384xf32>,
    %cst_3 = arith.constant 0.000000e+00 : f32
    %2 = vector.broadcast %cst_3 : f32 to vector<1x1x16x384xf32>
    %c0_4 = arith.constant 0 : index
    %c17 = arith.constant 17 : index
    %c0_5 = arith.constant 0 : index
    %c0_6 = arith.constant 0 : index
    %3 = vector.load %arg9[%c0_4, %c17, %c0_5, %c0_6] : memref<1x18x16x384xf32, #tpu.memory_space<vmem>>, vector<1x1x16x384xf32>
    tpu.vector_store %arg9[%c0_4, %c17, %c0_5, %c0_6], %2 {strides = array<i32>} : memref<1x18x16x384xf32, #tpu.memory_space<vmem>>, vector<1x1x16x384xf32>,
    %c0_7 = arith.constant 0 : index
    %c0_8 = arith.constant 0 : index
    %4 = vector.load %arg3[%c0_7, %c0_8] : memref<128x1xf32, #tpu.memory_space<vmem>>, vector<128x1xf32>
    %c0_9 = arith.constant 0 : index
    %c0_10 = arith.constant 0 : index
    %5 = vector.load %arg5[%c0_9, %c0_10] : memref<1x128xf32, #tpu.memory_space<vmem>>, vector<1x128xf32>
    %c0_11 = arith.constant 0 : index
    %c0_12 = arith.constant 0 : index
    %6 = vector.load %arg7[%c0_11, %c0_12] : memref<256x1xf32, #tpu.memory_space<vmem>>, vector<256x1xf32>
    %c0_13 = arith.constant 0 : index
    %c0_14 = arith.constant 0 : index
    %7 = vector.load %arg2[%c0_13, %c0_14] : memref<128x256xbf16, #tpu.memory_space<vmem>>, vector<128x256xbf16>
    %c0_15 = arith.constant 0 : index
    %c0_16 = arith.constant 0 : index
    %c0_17 = arith.constant 0 : index
    %8 = vector.load %arg1[%c0_15, %c0_16, %c0_17] : memref<1x256x256xf32, #tpu.memory_space<vmem>>, vector<1x256x256xf32>
    %9 = vector.shape_cast %8 : vector<1x256x256xf32> to vector<256x256xf32>
    %10 = arith.truncf %9 : vector<256x256xf32> to vector<256x256xbf16>
    %cst_18 = arith.constant dense<0.000000e+00> : vector<128x256xf32>
    %11 = tpu.matmul %7, %10, %cst_18 {dimension_numbers = #tpu.dot_dimension_numbers<[1], [0], [0], [1], [0, 0, 1, 1], [], []>} : vector<128x256xbf16>, vector<256x256xbf16>, vector<128x256xf32> -> vector<128x256xf32>
    %12 = vector.broadcast %4 : vector<128x1xf32> to vector<128x256xf32>
    %13 = arith.addf %11, %12 : vector<128x256xf32>
    %cst_19 = arith.constant 0.000000e+00 : f32
    %14 = vector.broadcast %cst_19 : f32 to vector<128x256xf32>
    %15 = arith.cmpf ogt, %13, %14 : vector<128x256xf32>
    %cst_20 = arith.constant 0.00999999977 : f32
    %16 = vector.broadcast %cst_20 : f32 to vector<128x256xf32>
    %17 = arith.mulf %16, %13 : vector<128x256xf32>
    %18 = arith.select %15, %13, %17 : vector<128x256xi1>, vector<128x256xf32>
    %19 = tpu.transpose %18, [1, 0] : vector<128x256xf32> -> vector<256x128xf32>
    %20 = vector.shape_cast %19 : vector<256x128xf32> to vector<16x16x128xf32>
    %c0_21 = arith.constant 0 : index
    %c1 = arith.constant 1 : index
    %c0_22 = arith.constant 0 : index
    %c128 = arith.constant 128 : index
    %21 = vector.load %arg9[%c0_21, %c1, %c0_22, %c128] : memref<1x18x16x384xf32, #tpu.memory_space<vmem>>, vector<1x16x16x128xf32>
    %22 = vector.shape_cast %21 : vector<1x16x16x128xf32> to vector<16x16x128xf32>
    %23 = vector.shape_cast %20 : vector<16x16x128xf32> to vector<1x16x16x128xf32>
    tpu.vector_store %arg9[%c0_21, %c1, %c0_22, %c128], %23 {strides = array<i32>} : memref<1x18x16x384xf32, #tpu.memory_space<vmem>>, vector<1x16x16x128xf32>,
    %cst_23 = arith.constant 0.000000e+00 : f32
    %24 = vector.broadcast %cst_23 : f32 to vector<16x1x128xf32>
    %c0_24 = arith.constant 0 : index
    %c1_25 = arith.constant 1 : index
    %c0_26 = arith.constant 0 : index
    %c0_27 = arith.constant 0 : index
    %25 = vector.load %arg9[%c0_24, %c1_25, %c0_26, %c0_27] : memref<1x18x16x384xf32, #tpu.memory_space<vmem>>, vector<1x16x1x128xf32>
    %26 = vector.shape_cast %25 : vector<1x16x1x128xf32> to vector<16x1x128xf32>
    %27 = vector.shape_cast %24 : vector<16x1x128xf32> to vector<1x16x1x128xf32>
    tpu.vector_store %arg9[%c0_24, %c1_25, %c0_26, %c0_27], %27 {strides = array<i32>} : memref<1x18x16x384xf32, #tpu.memory_space<vmem>>, vector<1x16x1x128xf32>,
    %28 = vector.extract_strided_slice %20 {offsets = [0, 0, 0], sizes = [16, 15, 128], strides = [1, 1, 1]} : vector<16x16x128xf32> to vector<16x15x128xf32>
    %c0_28 = arith.constant 0 : index
    %c1_29 = arith.constant 1 : index
    %c1_30 = arith.constant 1 : index
    %c0_31 = arith.constant 0 : index
    %29 = vector.load %arg9[%c0_28, %c1_29, %c1_30, %c0_31] : memref<1x18x16x384xf32, #tpu.memory_space<vmem>>, vector<1x16x15x128xf32>
    %30 = vector.shape_cast %29 : vector<1x16x15x128xf32> to vector<16x15x128xf32>
    %31 = vector.shape_cast %28 : vector<16x15x128xf32> to vector<1x16x15x128xf32>
    tpu.vector_store %arg9[%c0_28, %c1_29, %c1_30, %c0_31], %31 {strides = array<i32>} : memref<1x18x16x384xf32, #tpu.memory_space<vmem>>, vector<1x16x15x128xf32>,
    %32 = vector.extract_strided_slice %20 {offsets = [0, 1, 0], sizes = [16, 15, 128], strides = [1, 1, 1]} : vector<16x16x128xf32> to vector<16x15x128xf32>
    %c0_32 = arith.constant 0 : index
    %c1_33 = arith.constant 1 : index
    %c0_34 = arith.constant 0 : index
    %c256 = arith.constant 256 : index
    %33 = vector.load %arg9[%c0_32, %c1_33, %c0_34, %c256] : memref<1x18x16x384xf32, #tpu.memory_space<vmem>>, vector<1x16x15x128xf32>
    %34 = vector.shape_cast %33 : vector<1x16x15x128xf32> to vector<16x15x128xf32>
    %35 = vector.shape_cast %32 : vector<16x15x128xf32> to vector<1x16x15x128xf32>
    tpu.vector_store %arg9[%c0_32, %c1_33, %c0_34, %c256], %35 {strides = array<i32>} : memref<1x18x16x384xf32, #tpu.memory_space<vmem>>, vector<1x16x15x128xf32>,
    %cst_35 = arith.constant 0.000000e+00 : f32
    %36 = vector.broadcast %cst_35 : f32 to vector<16x1x128xf32>
    %c0_36 = arith.constant 0 : index
    %c1_37 = arith.constant 1 : index
    %c15 = arith.constant 15 : index
    %c256_38 = arith.constant 256 : index
    %37 = vector.load %arg9[%c0_36, %c1_37, %c15, %c256_38] : memref<1x18x16x384xf32, #tpu.memory_space<vmem>>, vector<1x16x1x128xf32>
    %38 = vector.shape_cast %37 : vector<1x16x1x128xf32> to vector<16x1x128xf32>
    %39 = vector.shape_cast %36 : vector<16x1x128xf32> to vector<1x16x1x128xf32>
    tpu.vector_store %arg9[%c0_36, %c1_37, %c15, %c256_38], %39 {strides = array<i32>} : memref<1x18x16x384xf32, #tpu.memory_space<vmem>>, vector<1x16x1x128xf32>,
    %c0_39 = arith.constant 0 : index
    %c0_40 = arith.constant 0 : index
    %c0_41 = arith.constant 0 : index
    %c0_42 = arith.constant 0 : index
    %40 = vector.load %arg9[%c0_39, %c0_40, %c0_41, %c0_42] : memref<1x18x16x384xf32, #tpu.memory_space<vmem>>, vector<1x16x16x384xf32>
    %41 = vector.shape_cast %40 : vector<1x16x16x384xf32> to vector<16x16x384xf32>
    %42 = vector.shape_cast %41 : vector<16x16x384xf32> to vector<256x384xf32>
    %43 = arith.truncf %42 : vector<256x384xf32> to vector<256x384xbf16>
    %c0_43 = arith.constant 0 : index
    %c0_44 = arith.constant 0 : index
    %c0_45 = arith.constant 0 : index
    %44 = vector.load %arg4[%c0_43, %c0_44, %c0_45] : memref<3x384x128xbf16, #tpu.memory_space<vmem>>, vector<1x384x128xbf16>
    %45 = vector.shape_cast %44 : vector<1x384x128xbf16> to vector<384x128xbf16>
    %cst_46 = arith.constant dense<0.000000e+00> : vector<256x128xf32>
    %46 = tpu.matmul %43, %45, %cst_46 {dimension_numbers = #tpu.dot_dimension_numbers<[1], [0], [0], [1], [0, 0, 1, 1], [], []>} : vector<256x384xbf16>, vector<384x128xbf16>, vector<256x128xf32> -> vector<256x128xf32>
    %c0_47 = arith.constant 0 : index
    %c1_48 = arith.constant 1 : index
    %c0_49 = arith.constant 0 : index
    %c0_50 = arith.constant 0 : index
    %47 = vector.load %arg9[%c0_47, %c1_48, %c0_49, %c0_50] : memref<1x18x16x384xf32, #tpu.memory_space<vmem>>, vector<1x16x16x384xf32>
    %48 = vector.shape_cast %47 : vector<1x16x16x384xf32> to vector<16x16x384xf32>
    %49 = vector.shape_cast %48 : vector<16x16x384xf32> to vector<256x384xf32>
    %50 = arith.truncf %49 : vector<256x384xf32> to vector<256x384xbf16>
    %c1_51 = arith.constant 1 : index
    %c0_52 = arith.constant 0 : index
    %c0_53 = arith.constant 0 : index
    %51 = vector.load %arg4[%c1_51, %c0_52, %c0_53] : memref<3x384x128xbf16, #tpu.memory_space<vmem>>, vector<1x384x128xbf16>
    %52 = vector.shape_cast %51 : vector<1x384x128xbf16> to vector<384x128xbf16>
    %cst_54 = arith.constant dense<0.000000e+00> : vector<256x128xf32>
    %53 = tpu.matmul %50, %52, %cst_54 {dimension_numbers = #tpu.dot_dimension_numbers<[1], [0], [0], [1], [0, 0, 1, 1], [], []>} : vector<256x384xbf16>, vector<384x128xbf16>, vector<256x128xf32> -> vector<256x128xf32>
    %c0_55 = arith.constant 0 : index
    %c2 = arith.constant 2 : index
    %c0_56 = arith.constant 0 : index
    %c0_57 = arith.constant 0 : index
    %54 = vector.load %arg9[%c0_55, %c2, %c0_56, %c0_57] : memref<1x18x16x384xf32, #tpu.memory_space<vmem>>, vector<1x16x16x384xf32>
    %55 = vector.shape_cast %54 : vector<1x16x16x384xf32> to vector<16x16x384xf32>
    %56 = vector.shape_cast %55 : vector<16x16x384xf32> to vector<256x384xf32>
    %57 = arith.truncf %56 : vector<256x384xf32> to vector<256x384xbf16>
    %c2_58 = arith.constant 2 : index
    %c0_59 = arith.constant 0 : index
    %c0_60 = arith.constant 0 : index
    %58 = vector.load %arg4[%c2_58, %c0_59, %c0_60] : memref<3x384x128xbf16, #tpu.memory_space<vmem>>, vector<1x384x128xbf16>
    %59 = vector.shape_cast %58 : vector<1x384x128xbf16> to vector<384x128xbf16>
    %cst_61 = arith.constant dense<0.000000e+00> : vector<256x128xf32>
    %60 = tpu.matmul %57, %59, %cst_61 {dimension_numbers = #tpu.dot_dimension_numbers<[1], [0], [0], [1], [0, 0, 1, 1], [], []>} : vector<256x384xbf16>, vector<384x128xbf16>, vector<256x128xf32> -> vector<256x128xf32>
    %61 = arith.addf %46, %53 : vector<256x128xf32>
    %62 = arith.addf %61, %60 : vector<256x128xf32>
    %63 = vector.broadcast %5 : vector<1x128xf32> to vector<256x128xf32>
    %64 = arith.addf %62, %63 : vector<256x128xf32>
    %cst_62 = arith.constant 0.000000e+00 : f32
    %65 = vector.broadcast %cst_62 : f32 to vector<256x128xf32>
    %66 = arith.cmpf ogt, %64, %65 : vector<256x128xf32>
    %cst_63 = arith.constant 0.00999999977 : f32
    %67 = vector.broadcast %cst_63 : f32 to vector<256x128xf32>
    %68 = arith.mulf %67, %64 : vector<256x128xf32>
    %69 = arith.select %66, %64, %68 : vector<256x128xi1>, vector<256x128xf32>
    %70 = tpu.transpose %69, [1, 0] : vector<256x128xf32> -> vector<128x256xf32>
    %71 = arith.truncf %70 : vector<128x256xf32> to vector<128x256xbf16>
    %c0_64 = arith.constant 0 : index
    %c0_65 = arith.constant 0 : index
    %72 = vector.load %arg6[%c0_64, %c0_65] : memref<256x128xbf16, #tpu.memory_space<vmem>>, vector<256x128xbf16>
    %cst_66 = arith.constant dense<0.000000e+00> : vector<256x256xf32>
    %73 = tpu.matmul %72, %71, %cst_66 {dimension_numbers = #tpu.dot_dimension_numbers<[1], [0], [0], [1], [0, 0, 1, 1], [], []>} : vector<256x128xbf16>, vector<128x256xbf16>, vector<256x256xf32> -> vector<256x256xf32>
    %74 = vector.broadcast %6 : vector<256x1xf32> to vector<256x256xf32>
    %75 = arith.addf %73, %74 : vector<256x256xf32>
    %c0_67 = arith.constant 0 : index
    %c0_68 = arith.constant 0 : index
    %c0_69 = arith.constant 0 : index
    %76 = vector.load %arg1[%c0_67, %c0_68, %c0_69] : memref<1x256x256xf32, #tpu.memory_space<vmem>>, vector<1x256x256xf32>
    %77 = vector.shape_cast %76 : vector<1x256x256xf32> to vector<256x256xf32>
    %78 = arith.addf %75, %77 : vector<256x256xf32>
    %cst_70 = arith.constant 0.000000e+00 : f32
    %79 = vector.broadcast %cst_70 : f32 to vector<256x256xf32>
    %80 = arith.cmpf ogt, %78, %79 : vector<256x256xf32>
    %cst_71 = arith.constant 0.00999999977 : f32
    %81 = vector.broadcast %cst_71 : f32 to vector<256x256xf32>
    %82 = arith.mulf %81, %78 : vector<256x256xf32>
    %83 = arith.select %80, %78, %82 : vector<256x256xi1>, vector<256x256xf32>
    %c0_72 = arith.constant 0 : index
    %c0_73 = arith.constant 0 : index
    %c0_74 = arith.constant 0 : index
    %84 = vector.load %arg8[%c0_72, %c0_73, %c0_74] : memref<1x256x256xf32, #tpu.memory_space<vmem>>, vector<1x256x256xf32>
    %85 = vector.shape_cast %84 : vector<1x256x256xf32> to vector<256x256xf32>
    %86 = vector.shape_cast %83 : vector<256x256xf32> to vector<1x256x256xf32>
    tpu.vector_store %arg8[%c0_72, %c0_73, %c0_74], %86 {strides = array<i32>} : memref<1x256x256xf32, #tpu.memory_space<vmem>>, vector<1x256x256xf32>,
    return
  }
  func.func @transform_0(%arg0: i32) -> (i32, i32, i32) {
    %c0_i32 = arith.constant 0 : i32
    %c0_i32_0 = arith.constant 0 : i32
    %c0_i32_1 = arith.constant 0 : i32
    return %arg0, %c0_i32, %c0_i32_0 : i32, i32, i32
  }
  func.func @transform_1(%arg0: i32) -> (i32, i32) {
    %c0_i32 = arith.constant 0 : i32
    %c0_i32_0 = arith.constant 0 : i32
    %c0_i32_1 = arith.constant 0 : i32
    return %c0_i32, %c0_i32_0 : i32, i32
  }
  func.func @transform_2(%arg0: i32) -> (i32, i32) {
    %c0_i32 = arith.constant 0 : i32
    %c0_i32_0 = arith.constant 0 : i32
    %c0_i32_1 = arith.constant 0 : i32
    return %c0_i32, %c0_i32_0 : i32, i32
  }
  func.func @transform_3(%arg0: i32) -> (i32, i32, i32) {
    %c0_i32 = arith.constant 0 : i32
    %c0_i32_0 = arith.constant 0 : i32
    %c0_i32_1 = arith.constant 0 : i32
    %c0_i32_2 = arith.constant 0 : i32
    return %c0_i32, %c0_i32_0, %c0_i32_1 : i32, i32, i32
  }
  func.func @transform_4(%arg0: i32) -> (i32, i32) {
    %c0_i32 = arith.constant 0 : i32
    %c0_i32_0 = arith.constant 0 : i32
    %c0_i32_1 = arith.constant 0 : i32
    return %c0_i32, %c0_i32_0 : i32, i32
  }
  func.func @transform_5(%arg0: i32) -> (i32, i32) {
    %c0_i32 = arith.constant 0 : i32
    %c0_i32_0 = arith.constant 0 : i32
    %c0_i32_1 = arith.constant 0 : i32
    return %c0_i32, %c0_i32_0 : i32, i32
  }
  func.func @transform_6(%arg0: i32) -> (i32, i32) {
    %c0_i32 = arith.constant 0 : i32
    %c0_i32_0 = arith.constant 0 : i32
    %c0_i32_1 = arith.constant 0 : i32
    return %c0_i32, %c0_i32_0 : i32, i32
  }
  func.func @transform_7(%arg0: i32) -> (i32, i32, i32) {
    %c0_i32 = arith.constant 0 : i32
    %c0_i32_0 = arith.constant 0 : i32
    %c0_i32_1 = arith.constant 0 : i32
    return %arg0, %c0_i32, %c0_i32_0 : i32, i32, i32
  }
}

</mosaic_0001>

<llo_original>
// kernel: block_forward.1
$region0: #{block_forward.1}
  #allocation0 [shape = 'u32[]', space=smem, size = 0x4, offset = 0x4, fixed_abs, tag = 'smem constant byte address 0x4 - core index']
  #allocation1 [shape = 'u32[144,128]{1,0:T(1,128)}', space=vmem, size = 0x12000, scoped, tag = 'internal scratch']
  #allocation2 [shape = 'f32[1,18,16,384]{3,2,1,0:T(8,128)}', space=vmem, size = 0x6c000, scoped, tag = 'scratch operand']
  %s0 = inlined_call_operand.vmem [shape: f32[4,256,256], index: 0, kind: input, shape index: {}]
  %s1 = inlined_call_operand.vmem [shape: bf16[128,256], index: 1, kind: input, shape index: {}]
  %s2 = inlined_call_operand.vmem [shape: f32[128,1], index: 2, kind: input, shape index: {}]
  %s3 = inlined_call_operand.vmem [shape: bf16[3,384,128], index: 3, kind: input, shape index: {}]
  %s4 = inlined_call_operand.vmem [shape: f32[1,128], index: 4, kind: input, shape index: {}]
  %s5 = inlined_call_operand.vmem [shape: bf16[256,128], index: 5, kind: input, shape index: {}]
  %s6 = inlined_call_operand.vmem [shape: f32[256,1], index: 6, kind: input, shape index: {}]
  %s7 = inlined_call_operand.vmem [shape: f32[4,256,256], index: 7, kind: output, shape index: {}]
  %s8 = sld [smem:[#allocation0]]
  $region61: #{block_forward.1} parent=0
    _
  %s10 = ssub.s32 1, %s8
  %s11 = scalar_select 0, %s10, %s8
  loop: start=0, step=1, limit=6
  $region2: #{block_forward.1} parent=0 // loop_pre_header
    _
  $region3: #{block_forward.1} parent=0 // loop_header
    %s13 = sphi 0, %s17
    %p14 = scmp.ge.s32.totalorder %s13, 6
    %s23 = sphi 0, %s25
    %s26 = sphi 0, %s23
    %s27 = sphi 0, %s26
    %s43 = sphi 0, %s27
    %s47 = sphi 0, %s47
    %s49 = sphi 0, %s47
    %s50 = sphi 0, %s49
    %s64 = sphi 0, %s50
    %s68 = sphi 0, %s68
    %s70 = sphi 0, %s68
    %s71 = sphi 0, %s70
    %s85 = sphi 0, %s71
    %s89 = sphi 0, %s89
    %s91 = sphi 0, %s89
    %s92 = sphi 0, %s91
    %s106 = sphi 0, %s92
    %s110 = sphi 0, %s110
    %s112 = sphi 0, %s110
    %s113 = sphi 0, %s112
    %s127 = sphi 0, %s113
    %s131 = sphi 0, %s131
    %s133 = sphi 0, %s131
    %s134 = sphi 0, %s133
    %s148 = sphi 0, %s134
    %s152 = sphi 0, %s152
    %s154 = sphi 0, %s152
    %s155 = sphi 0, %s154
    %s169 = sphi 0, %s155
    %s175 = sphi 0, %s177
    %s178 = sphi 0, %s175
    %s179 = sphi 0, %s178
    %s195 = sphi 0, %s179
  $region4: #{block_forward.1} parent=0 // loop_header_branch
    %16 = sbr.rel (%p14) target = $region8
  $region5: #{block_forward.1} parent=0 // loop_body
    %s18 = ssub.s32 %s13, 1
    %s19 = ssub.s32 %s13, 2
    %s20 = sadd.s32 %s13, 1
    %s21 = ssub.s32 %s13, %s20
    %p22 = scmp.eq.s32.totalorder %s21, 0
    %s24 = sadd.s32 %s23, 1
    %s25 = scalar_select %p22, %s23, %s24
    %p28 = pneg %p22
    %p29 = scmp.eq.s32.totalorder %s13, 3
    %p30 = por %p28, %p29
    %p31 = scmp.ne.s32.totalorder %s23, %s26
    %p32 = scmp.eq.s32.totalorder %s13, 0
    %p33 = por %p31, %p32
    %p34 = scmp.ne.s32.totalorder %s23, %s26
    %p35 = scmp.eq.s32.totalorder %s18, 3
    %p36 = por %p34, %p35
    %p37 = scmp.ne.s32.totalorder %s26, %s27
    %p38 = scmp.eq.s32.totalorder %s18, 0
    %p39 = por %p37, %p38
    %p40 = scmp.ne.s32.totalorder %s26, %s27
    %p41 = scmp.eq.s32.totalorder %s19, 3
    %p42 = por %p40, %p41
    %p44 = scmp.ne.s32.totalorder %s27, %s43
    %p45 = scmp.eq.s32.totalorder %s19, 0
    %p46 = por %p44, %p45
    %s48 = sadd.s32 %s47, 1
    %p51 = scmp.eq.s32.totalorder %s13, 3
    %p52 = scmp.ne.s32.totalorder %s47, %s49
    %p53 = scmp.eq.s32.totalorder %s13, 0
    %p54 = por %p52, %p53
    %p55 = scmp.ne.s32.totalorder %s47, %s49
    %p56 = scmp.eq.s32.totalorder %s18, 3
    %p57 = por %p55, %p56
    %p58 = scmp.ne.s32.totalorder %s49, %s50
    %p59 = scmp.eq.s32.totalorder %s18, 0
    %p60 = por %p58, %p59
    %p61 = scmp.ne.s32.totalorder %s49, %s50
    %p62 = scmp.eq.s32.totalorder %s19, 3
    %p63 = por %p61, %p62
    %p65 = scmp.ne.s32.totalorder %s50, %s64
    %p66 = scmp.eq.s32.totalorder %s19, 0
    %p67 = por %p65, %p66
    %s69 = sadd.s32 %s68, 1
    %p72 = scmp.eq.s32.totalorder %s13, 3
    %p73 = scmp.ne.s32.totalorder %s68, %s70
    %p74 = scmp.eq.s32.totalorder %s13, 0
    %p75 = por %p73, %p74
    %p76 = scmp.ne.s32.totalorder %s68, %s70
    %p77 = scmp.eq.s32.totalorder %s18, 3
    %p78 = por %p76, %p77
    %p79 = scmp.ne.s32.totalorder %s70, %s71
    %p80 = scmp.eq.s32.totalorder %s18, 0
    %p81 = por %p79, %p80
    %p82 = scmp.ne.s32.totalorder %s70, %s71
    %p83 = scmp.eq.s32.totalorder %s19, 3
    %p84 = por %p82, %p83
    %p86 = scmp.ne.s32.totalorder %s71, %s85
    %p87 = scmp.eq.s32.totalorder %s19, 0
    %p88 = por %p86, %p87
    %s90 = sadd.s32 %s89, 1
    %p93 = scmp.eq.s32.totalorder %s13, 3
    %p94 = scmp.ne.s32.totalorder %s89, %s91
    %p95 = scmp.eq.s32.totalorder %s13, 0
    %p96 = por %p94, %p95
    %p97 = scmp.ne.s32.totalorder %s89, %s91
    %p98 = scmp.eq.s32.totalorder %s18, 3
    %p99 = por %p97, %p98
    %p100 = scmp.ne.s32.totalorder %s91, %s92
    %p101 = scmp.eq.s32.totalorder %s18, 0
    %p102 = por %p100, %p101
    %p103 = scmp.ne.s32.totalorder %s91, %s92
    %p104 = scmp.eq.s32.totalorder %s19, 3
    %p105 = por %p103, %p104
    %p107 = scmp.ne.s32.totalorder %s92, %s106
    %p108 = scmp.eq.s32.totalorder %s19, 0
    %p109 = por %p107, %p108
    %s111 = sadd.s32 %s110, 1
    %p114 = scmp.eq.s32.totalorder %s13, 3
    %p115 = scmp.ne.s32.totalorder %s110, %s112
    %p116 = scmp.eq.s32.totalorder %s13, 0
    %p117 = por %p115, %p116
    %p118 = scmp.ne.s32.totalorder %s110, %s112
    %p119 = scmp.eq.s32.totalorder %s18, 3
    %p120 = por %p118, %p119
    %p121 = scmp.ne.s32.totalorder %s112, %s113
    %p122 = scmp.eq.s32.totalorder %s18, 0
    %p123 = por %p121, %p122
    %p124 = scmp.ne.s32.totalorder %s112, %s113
    %p125 = scmp.eq.s32.totalorder %s19, 3
    %p126 = por %p124, %p125
    %p128 = scmp.ne.s32.totalorder %s113, %s127
    %p129 = scmp.eq.s32.totalorder %s19, 0
    %p130 = por %p128, %p129
    %s132 = sadd.s32 %s131, 1
    %p135 = scmp.eq.s32.totalorder %s13, 3
    %p136 = scmp.ne.s32.totalorder %s131, %s133
    %p137 = scmp.eq.s32.totalorder %s13, 0
    %p138 = por %p136, %p137
    %p139 = scmp.ne.s32.totalorder %s131, %s133
    %p140 = scmp.eq.s32.totalorder %s18, 3
    %p141 = por %p139, %p140
    %p142 = scmp.ne.s32.totalorder %s133, %s134
    %p143 = scmp.eq.s32.totalorder %s18, 0
    %p144 = por %p142, %p143
    %p145 = scmp.ne.s32.totalorder %s133, %s134
    %p146 = scmp.eq.s32.totalorder %s19, 3
    %p147 = por %p145, %p146
    %p149 = scmp.ne.s32.totalorder %s134, %s148
    %p150 = scmp.eq.s32.totalorder %s19, 0
    %p151 = por %p149, %p150
    %s153 = sadd.s32 %s152, 1
    %p156 = scmp.eq.s32.totalorder %s13, 3
    %p157 = scmp.ne.s32.totalorder %s152, %s154
    %p158 = scmp.eq.s32.totalorder %s13, 0
    %p159 = por %p157, %p158
    %p160 = scmp.ne.s32.totalorder %s152, %s154
    %p161 = scmp.eq.s32.totalorder %s18, 3
    %p162 = por %p160, %p161
    %p163 = scmp.ne.s32.totalorder %s154, %s155
    %p164 = scmp.eq.s32.totalorder %s18, 0
    %p165 = por %p163, %p164
    %p166 = scmp.ne.s32.totalorder %s154, %s155
    %p167 = scmp.eq.s32.totalorder %s19, 3
    %p168 = por %p166, %p167
    %p170 = scmp.ne.s32.totalorder %s155, %s169
    %p171 = scmp.eq.s32.totalorder %s19, 0
    %p172 = por %p170, %p171
    %s173 = ssub.s32 %s13, %s20
    %p174 = scmp.eq.s32.totalorder %s173, 0
    %s176 = sadd.s32 %s175, 1
    %s177 = scalar_select %p174, %s175, %s176
    %p180 = pneg %p174
    %p181 = scmp.eq.s32.totalorder %s13, 3
    %p182 = por %p180, %p181
    %p183 = scmp.ne.s32.totalorder %s175, %s178
    %p184 = scmp.eq.s32.totalorder %s13, 0
    %p185 = por %p183, %p184
    %p186 = scmp.ne.s32.totalorder %s175, %s178
    %p187 = scmp.eq.s32.totalorder %s18, 3
    %p188 = por %p186, %p187
    %p189 = scmp.ne.s32.totalorder %s178, %s179
    %p190 = scmp.eq.s32.totalorder %s18, 0
    %p191 = por %p189, %p190
    %p192 = scmp.ne.s32.totalorder %s178, %s179
    %p193 = scmp.eq.s32.totalorder %s19, 3
    %p194 = por %p192, %p193
    %p196 = scmp.ne.s32.totalorder %s179, %s195
    %p197 = scmp.eq.s32.totalorder %s19, 0
    %p198 = por %p196, %p197
    %p199 = scmp.le.s32.totalorder 1, %s13
    %p200 = scmp.lt.s32.totalorder %s13, 5
    %p201 = pnand %p199, %p200
    %p202 = pneg %p201
    // Predicated region
    $region9: #{block_forward.1} parent=5 // pred_check
      _
    $region10: #{block_forward.1} parent=5 // pred_check_branch
      %204 = sbr.rel (%p201) target = $region12
    $region11: #{block_forward.1} parent=5 // pred_region
      %s205 = ssub.s32 %s13, 1
      // Predicated region
      $region13: #{block_forward.1} parent=11 // pred_check
        %p206 = pneg %p60
      $region14: #{block_forward.1} parent=11 // pred_check_branch
        %208 = sbr.rel (%p206) target = $region16
      $region15: #{block_forward.1} parent=11 // pred_region
        _
      $region16: #{block_forward.1} parent=11 // pred_fallthru
        _
      // Predicated region
      $region17: #{block_forward.1} parent=11 // pred_check
        %p209 = pneg %p81
      $region18: #{block_forward.1} parent=11 // pred_check_branch
        %211 = sbr.rel (%p209) target = $region20
      $region19: #{block_forward.1} parent=11 // pred_region
        _
      $region20: #{block_forward.1} parent=11 // pred_fallthru
        _
      // Predicated region
      $region21: #{block_forward.1} parent=11 // pred_check
        %p212 = pneg %p102
      $region22: #{block_forward.1} parent=11 // pred_check_branch
        %214 = sbr.rel (%p212) target = $region24
      $region23: #{block_forward.1} parent=11 // pred_region
        _
      $region24: #{block_forward.1} parent=11 // pred_fallthru
        _
      // Predicated region
      $region25: #{block_forward.1} parent=11 // pred_check
        %p215 = pneg %p123
      $region26: #{block_forward.1} parent=11 // pred_check_branch
        %217 = sbr.rel (%p215) target = $region28
      $region27: #{block_forward.1} parent=11 // pred_region
        _
      $region28: #{block_forward.1} parent=11 // pred_fallthru
        _
      // Predicated region
      $region29: #{block_forward.1} parent=11 // pred_check
        %p218 = pneg %p144
      $region30: #{block_forward.1} parent=11 // pred_check_branch
        %220 = sbr.rel (%p218) target = $region32
      $region31: #{block_forward.1} parent=11 // pred_region
        _
      $region32: #{block_forward.1} parent=11 // pred_fallthru
        _
      // Predicated region
      $region33: #{block_forward.1} parent=11 // pred_check
        %p221 = pneg %p165
      $region34: #{block_forward.1} parent=11 // pred_check_branch
        %223 = sbr.rel (%p221) target = $region36
      $region35: #{block_forward.1} parent=11 // pred_region
        _
      $region36: #{block_forward.1} parent=11 // pred_fallthru
        _
    $region12: #{block_forward.1} parent=5 // pred_fallthru
      _
    %p224 = scmp.lt.s32.totalorder %s13, 4
    // Predicated region
    $region37: #{block_forward.1} parent=5 // pred_check
      %p225 = pneg %p224
    $region38: #{block_forward.1} parent=5 // pred_check_branch
      %227 = sbr.rel (%p225) target = $region40
    $region39: #{block_forward.1} parent=5 // pred_region
      // Predicated region
      $region41: #{block_forward.1} parent=39 // pred_check
        %p228 = pneg %p33
      $region42: #{block_forward.1} parent=39 // pred_check_branch
        %230 = sbr.rel (%p228) target = $region44
      $region43: #{block_forward.1} parent=39 // pred_region
        %p231 = scmp.lt.s32.totalorder %s13, 3
        %s232 = scalar_select %p231, %s13, 3
        %s233 = smul.addr %s232, 64
        %s234 = smul.addr %s233, 8
        %s235 = scalar_lea.vmem %s0, %s234
      $region44: #{block_forward.1} parent=39 // pred_fallthru
        _
    $region40: #{block_forward.1} parent=5 // pred_fallthru
      _
    %p236 = scmp.le.s32.totalorder 1, %s13
    %p237 = scmp.lt.s32.totalorder %s13, 5
    %p238 = pnand %p236, %p237
    %p239 = pneg %p238
    // Predicated region
    $region45: #{block_forward.1} parent=5 // pred_check
      _
    $region46: #{block_forward.1} parent=5 // pred_check_branch
      %241 = sbr.rel (%p238) target = $region48
    $region47: #{block_forward.1} parent=5 // pred_region
      %s242 = ssub.s32 %s13, 1
      %p243 = scmp.lt.s32.totalorder %s18, 3
      %s244 = scalar_select %p243, %s18, 3
      %s245 = smul.addr %s244, 64
      %s246 = smul.addr %s245, 8
      %s247 = scalar_lea.vmem %s0, %s246
      %p248 = pneg %p39
      %p249 = pneg %p36
      %p250 = pneg %p60
      %p251 = pneg %p57
      %p252 = pneg %p81
      %p253 = pneg %p78
      %p254 = pneg %p102
      %p255 = pneg %p99
      %p256 = pneg %p123
      %p257 = pneg %p120
      %p258 = pneg %p144
      %p259 = pneg %p141
      %p260 = pneg %p165
      %p261 = pneg %p162
      %p262 = pneg %p191
      %p263 = pneg %p188
      %p264 = scmp.lt.s32.totalorder %s18, 3
      %s265 = scalar_select %p264, %s18, 3
      %s266 = smul.addr %s265, 64
      %s267 = smul.addr %s266, 8
      %s268 = scalar_lea.vmem %s7, %s267
      %p269 = scmp.lt.s32.totalorder %s18, 3
      %s270 = scalar_select %p269, %s18, 3
      %s271 = smul.addr %s270, 64
      %s272 = smul.addr %s271, 8
      %s273 = scalar_lea.vmem %s0, %s272
      %p274 = scmp.lt.s32.totalorder %s18, 3
      %s275 = scalar_select %p274, %s18, 3
      %s276 = smul.addr %s275, 64
      %s277 = smul.addr %s276, 8
      %s278 = scalar_lea.vmem %s7, %s277
      %280 = vst [vmem:[#allocation2] sm:$0xff] 0.0
      %281 = vst [vmem:[#allocation2 + $0x8] sm:$0xff] 0.0
      %282 = vst [vmem:[#allocation2 + $0x10] sm:$0xff] 0.0
      %283 = vst [vmem:[#allocation2 + $0x18] sm:$0xff] 0.0
      %284 = vst [vmem:[#allocation2 + $0x20] sm:$0xff] 0.0
      %285 = vst [vmem:[#allocation2 + $0x28] sm:$0xff] 0.0
      %s286 = scalar_lea.vmem [#allocation2], 816
      %287 = vst [vmem:[%s286] sm:$0xff] 0.0
      %288 = vst [vmem:[%s286 + $0x8] sm:$0xff] 0.0
      %289 = vst [vmem:[%s286 + $0x10] sm:$0xff] 0.0
      %290 = vst [vmem:[%s286 + $0x18] sm:$0xff] 0.0
      %291 = vst [vmem:[%s286 + $0x20] sm:$0xff] 0.0
      %292 = vst [vmem:[%s286 + $0x28] sm:$0xff] 0.0
      %v293 = vld [vmem:[%s2] sm:$0xff]
      %v294 = vld [vmem:[%s2 + $0x8] sm:$0xff]
      %v295 = vld [vmem:[%s2 + $0x10] sm:$0xff]
      %v296 = vld [vmem:[%s2 + $0x18] sm:$0xff]
      %v297 = vld [vmem:[%s2 + $0x20] sm:$0xff]
      %v298 = vld [vmem:[%s2 + $0x28] sm:$0xff]
      %v299 = vld [vmem:[%s2 + $0x30] sm:$0xff]
      %v300 = vld [vmem:[%s2 + $0x38] sm:$0xff]
      %v301 = vld [vmem:[%s2 + $0x40] sm:$0xff]
      %v302 = vld [vmem:[%s2 + $0x48] sm:$0xff]
      %v303 = vld [vmem:[%s2 + $0x50] sm:$0xff]
      %v304 = vld [vmem:[%s2 + $0x58] sm:$0xff]
      %v305 = vld [vmem:[%s2 + $0x60] sm:$0xff]
      %v306 = vld [vmem:[%s2 + $0x68] sm:$0xff]
      %v307 = vld [vmem:[%s2 + $0x70] sm:$0xff]
      %v308 = vld [vmem:[%s2 + $0x78] sm:$0xff]
      %v309 = vld [vmem:[%s4] sm:$0x1]
      %v310 = vld [vmem:[%s6] sm:$0xff]
      %v311 = vld [vmem:[%s6 + $0x8] sm:$0xff]
      %v312 = vld [vmem:[%s6 + $0x10] sm:$0xff]
      %v313 = vld [vmem:[%s6 + $0x18] sm:$0xff]
      %v314 = vld [vmem:[%s6 + $0x20] sm:$0xff]
      %v315 = vld [vmem:[%s6 + $0x28] sm:$0xff]
      %v316 = vld [vmem:[%s6 + $0x30] sm:$0xff]
      %v317 = vld [vmem:[%s6 + $0x38] sm:$0xff]
      %v318 = vld [vmem:[%s6 + $0x40] sm:$0xff]
      %v319 = vld [vmem:[%s6 + $0x48] sm:$0xff]
      %v320 = vld [vmem:[%s6 + $0x50] sm:$0xff]
      %v321 = vld [vmem:[%s6 + $0x58] sm:$0xff]
      %v322 = vld [vmem:[%s6 + $0x60] sm:$0xff]
      %v323 = vld [vmem:[%s6 + $0x68] sm:$0xff]
      %v324 = vld [vmem:[%s6 + $0x70] sm:$0xff]
      %v325 = vld [vmem:[%s6 + $0x78] sm:$0xff]
      %v326 = vld [vmem:[%s6 + $0x80] sm:$0xff]
      %v327 = vld [vmem:[%s6 + $0x88] sm:$0xff]
      %v328 = vld [vmem:[%s6 + $0x90] sm:$0xff]
      %v329 = vld [vmem:[%s6 + $0x98] sm:$0xff]
      %v330 = vld [vmem:[%s6 + $0xa0] sm:$0xff]
      %v331 = vld [vmem:[%s6 + $0xa8] sm:$0xff]
      %v332 = vld [vmem:[%s6 + $0xb0] sm:$0xff]
      %v333 = vld [vmem:[%s6 + $0xb8] sm:$0xff]
      %v334 = vld [vmem:[%s6 + $0xc0] sm:$0xff]
      %v335 = vld [vmem:[%s6 + $0xc8] sm:$0xff]
      %v336 = vld [vmem:[%s6 + $0xd0] sm:$0xff]
      %v337 = vld [vmem:[%s6 + $0xd8] sm:$0xff]
      %v338 = vld [vmem:[%s6 + $0xe0] sm:$0xff]
      %v339 = vld [vmem:[%s6 + $0xe8] sm:$0xff]
      %v340 = vld [vmem:[%s6 + $0xf0] sm:$0xff]
      %v341 = vld [vmem:[%s6 + $0xf8] sm:$0xff]
      %v342 = vld [vmem:[%s1] sm:$0xff]
      %v343 = vld [vmem:[%s1 + $0x8] sm:$0xff]
      %v344 = vld [vmem:[%s1 + $0x10] sm:$0xff]
      %v345 = vld [vmem:[%s1 + $0x18] sm:$0xff]
      %v346 = vld [vmem:[%s1 + $0x20] sm:$0xff]
      %v347 = vld [vmem:[%s1 + $0x28] sm:$0xff]
      %v348 = vld [vmem:[%s1 + $0x30] sm:$0xff]
      %v349 = vld [vmem:[%s1 + $0x38] sm:$0xff]
      %v350 = vld [vmem:[%s1 + $0x40] sm:$0xff]
      %v351 = vld [vmem:[%s1 + $0x48] sm:$0xff]
      %v352 = vld [vmem:[%s1 + $0x50] sm:$0xff]
      %v353 = vld [vmem:[%s1 + $0x58] sm:$0xff]
      %v354 = vld [vmem:[%s1 + $0x60] sm:$0xff]
      %v355 = vld [vmem:[%s1 + $0x68] sm:$0xff]
      %v356 = vld [vmem:[%s1 + $0x70] sm:$0xff]
      %v357 = vld [vmem:[%s1 + $0x78] sm:$0xff]
      %v358 = vld [vmem:[%s273] sm:$0xff]
      %v359 = vld [vmem:[%s273 + $0x8] sm:$0xff]
      %v360 = vld [vmem:[%s273 + $0x10] sm:$0xff]
      %v361 = vld [vmem:[%s273 + $0x18] sm:$0xff]
      %v362 = vld [vmem:[%s273 + $0x20] sm:$0xff]
      %v363 = vld [vmem:[%s273 + $0x28] sm:$0xff]
      %v364 = vld [vmem:[%s273 + $0x30] sm:$0xff]
      %v365 = vld [vmem:[%s273 + $0x38] sm:$0xff]
      %v366 = vld [vmem:[%s273 + $0x40] sm:$0xff]
      %v367 = vld [vmem:[%s273 + $0x48] sm:$0xff]
      %v368 = vld [vmem:[%s273 + $0x50] sm:$0xff]
      %v369 = vld [vmem:[%s273 + $0x58] sm:$0xff]
      %v370 = vld [vmem:[%s273 + $0x60] sm:$0xff]
      %v371 = vld [vmem:[%s273 + $0x68] sm:$0xff]
      %v372 = vld [vmem:[%s273 + $0x70] sm:$0xff]
      %v373 = vld [vmem:[%s273 + $0x78] sm:$0xff]
      %v374 = vld [vmem:[%s273 + $0x80] sm:$0xff]
      %v375 = vld [vmem:[%s273 + $0x88] sm:$0xff]
      %v376 = vld [vmem:[%s273 + $0x90] sm:$0xff]
      %v377 = vld [vmem:[%s273 + $0x98] sm:$0xff]
      %v378 = vld [vmem:[%s273 + $0xa0] sm:$0xff]
      %v379 = vld [vmem:[%s273 + $0xa8] sm:$0xff]
      %v380 = vld [vmem:[%s273 + $0xb0] sm:$0xff]
      %v381 = vld [vmem:[%s273 + $0xb8] sm:$0xff]
      %v382 = vld [vmem:[%s273 + $0xc0] sm:$0xff]
      %v383 = vld [vmem:[%s273 + $0xc8] sm:$0xff]
      %v384 = vld [vmem:[%s273 + $0xd0] sm:$0xff]
      %v385 = vld [vmem:[%s273 + $0xd8] sm:$0xff]
      %v386 = vld [vmem:[%s273 + $0xe0] sm:$0xff]
      %v387 = vld [vmem:[%s273 + $0xe8] sm:$0xff]
      %v388 = vld [vmem:[%s273 + $0xf0] sm:$0xff]
      %v389 = vld [vmem:[%s273 + $0xf8] sm:$0xff]
      %v390 = vld [vmem:[%s273 + $0x100] sm:$0xff]
      %v391 = vld [vmem:[%s273 + $0x108] sm:$0xff]
      %v392 = vld [vmem:[%s273 + $0x110] sm:$0xff]
      %v393 = vld [vmem:[%s273 + $0x118] sm:$0xff]
      %v394 = vld [vmem:[%s273 + $0x120] sm:$0xff]
      %v395 = vld [vmem:[%s273 + $0x128] sm:$0xff]
      %v396 = vld [vmem:[%s273 + $0x130] sm:$0xff]
      %v397 = vld [vmem:[%s273 + $0x138] sm:$0xff]
      %v398 = vld [vmem:[%s273 + $0x140] sm:$0xff]
      %v399 = vld [vmem:[%s273 + $0x148] sm:$0xff]
      %v400 = vld [vmem:[%s273 + $0x150] sm:$0xff]
      %v401 = vld [vmem:[%s273 + $0x158] sm:$0xff]
      %v402 = vld [vmem:[%s273 + $0x160] sm:$0xff]
      %v403 = vld [vmem:[%s273 + $0x168] sm:$0xff]
      %v404 = vld [vmem:[%s273 + $0x170] sm:$0xff]
      %v405 = vld [vmem:[%s273 + $0x178] sm:$0xff]
      %v406 = vld [vmem:[%s273 + $0x180] sm:$0xff]
      %v407 = vld [vmem:[%s273 + $0x188] sm:$0xff]
      %v408 = vld [vmem:[%s273 + $0x190] sm:$0xff]
      %v409 = vld [vmem:[%s273 + $0x198] sm:$0xff]
      %v410 = vld [vmem:[%s273 + $0x1a0] sm:$0xff]
      %v411 = vld [vmem:[%s273 + $0x1a8] sm:$0xff]
      %v412 = vld [vmem:[%s273 + $0x1b0] sm:$0xff]
      %v413 = vld [vmem:[%s273 + $0x1b8] sm:$0xff]
      %v414 = vld [vmem:[%s273 + $0x1c0] sm:$0xff]
      %v415 = vld [vmem:[%s273 + $0x1c8] sm:$0xff]
      %v416 = vld [vmem:[%s273 + $0x1d0] sm:$0xff]
      %v417 = vld [vmem:[%s273 + $0x1d8] sm:$0xff]
      %v418 = vld [vmem:[%s273 + $0x1e0] sm:$0xff]
      %v419 = vld [vmem:[%s273 + $0x1e8] sm:$0xff]
      %v420 = vld [vmem:[%s273 + $0x1f0] sm:$0xff]
      %v421 = vld [vmem:[%s273 + $0x1f8] sm:$0xff]
      %v422 = vpack.c.bf16 %v360, %v358
      %v423 = vpack.c.bf16 %v361, %v359
      %v424 = vpack.c.bf16 %v364, %v362
      %v425 = vpack.c.bf16 %v365, %v363
      %v426 = vpack.c.bf16 %v368, %v366
      %v427 = vpack.c.bf16 %v369, %v367
      %v428 = vpack.c.bf16 %v372, %v370
      %v429 = vpack.c.bf16 %v373, %v371
      %v430 = vpack.c.bf16 %v376, %v374
      %v431 = vpack.c.bf16 %v377, %v375
      %v432 = vpack.c.bf16 %v380, %v378
      %v433 = vpack.c.bf16 %v381, %v379
      %v434 = vpack.c.bf16 %v384, %v382
      %v435 = vpack.c.bf16 %v385, %v383
      %v436 = vpack.c.bf16 %v388, %v386
      %v437 = vpack.c.bf16 %v389, %v387
      %v438 = vpack.c.bf16 %v392, %v390
      %v439 = vpack.c.bf16 %v393, %v391
      %v440 = vpack.c.bf16 %v396, %v394
      %v441 = vpack.c.bf16 %v397, %v395
      %v442 = vpack.c.bf16 %v400, %v398
      %v443 = vpack.c.bf16 %v401, %v399
      %v444 = vpack.c.bf16 %v404, %v402
      %v445 = vpack.c.bf16 %v405, %v403
      %v446 = vpack.c.bf16 %v408, %v406
      %v447 = vpack.c.bf16 %v409, %v407
      %v448 = vpack.c.bf16 %v412, %v410
      %v449 = vpack.c.bf16 %v413, %v411
      %v450 = vpack.c.bf16 %v416, %v414
      %v451 = vpack.c.bf16 %v417, %v415
      %v452 = vpack.c.bf16 %v420, %v418
      %v453 = vpack.c.bf16 %v421, %v419
      %455 = vset.pattern.permute.xlu0 0
      %456 = vperm.xlu0 %455, %v293
      %v457 = vpop.permute.xlu0 %456
      %460 = vset.pattern.permute.xlu0 0
      %461 = vperm.xlu0 %460, %v294
      %v462 = vpop.permute.xlu0 %461
      %465 = vset.pattern.permute.xlu0 0
      %466 = vperm.xlu0 %465, %v295
      %v467 = vpop.permute.xlu0 %466
      %470 = vset.pattern.permute.xlu0 0
      %471 = vperm.xlu0 %470, %v296
      %v472 = vpop.permute.xlu0 %471
      %475 = vset.pattern.permute.xlu0 0
      %476 = vperm.xlu0 %475, %v297
      %v477 = vpop.permute.xlu0 %476
      %480 = vset.pattern.permute.xlu0 0
      %481 = vperm.xlu0 %480, %v298
      %v482 = vpop.permute.xlu0 %481
      %485 = vset.pattern.permute.xlu0 0
      %486 = vperm.xlu0 %485, %v299
      %v487 = vpop.permute.xlu0 %486
      %490 = vset.pattern.permute.xlu0 0
      %491 = vperm.xlu0 %490, %v300
      %v492 = vpop.permute.xlu0 %491
      %495 = vset.pattern.permute.xlu0 0
      %496 = vperm.xlu0 %495, %v301
      %v497 = vpop.permute.xlu0 %496
      %500 = vset.pattern.permute.xlu0 0
      %501 = vperm.xlu0 %500, %v302
      %v502 = vpop.permute.xlu0 %501
      %505 = vset.pattern.permute.xlu0 0
      %506 = vperm.xlu0 %505, %v303
      %v507 = vpop.permute.xlu0 %506
      %510 = vset.pattern.permute.xlu0 0
      %511 = vperm.xlu0 %510, %v304
      %v512 = vpop.permute.xlu0 %511
      %515 = vset.pattern.permute.xlu0 0
      %516 = vperm.xlu0 %515, %v305
      %v517 = vpop.permute.xlu0 %516
      %520 = vset.pattern.permute.xlu0 0
      %521 = vperm.xlu0 %520, %v306
      %v522 = vpop.permute.xlu0 %521
      %525 = vset.pattern.permute.xlu0 0
      %526 = vperm.xlu0 %525, %v307
      %v527 = vpop.permute.xlu0 %526
      %530 = vset.pattern.permute.xlu0 0
      %531 = vperm.xlu0 %530, %v308
      %v532 = vpop.permute.xlu0 %531
      %v550 = vunpack.c.l.b16 %v342
      %v551 = vunpack.c.h.b16 %v342
      %v552 = vunpack.c.l.b16 %v343
      %v553 = vunpack.c.h.b16 %v343
      %v554 = vunpack.c.l.b16 %v344
      %v555 = vunpack.c.h.b16 %v344
      %v556 = vunpack.c.l.b16 %v345
      %v557 = vunpack.c.h.b16 %v345
      %v558 = vunpack.c.l.b16 %v346
      %v559 = vunpack.c.h.b16 %v346
      %v560 = vunpack.c.l.b16 %v347
      %v561 = vunpack.c.h.b16 %v347
      %v562 = vunpack.c.l.b16 %v348
      %v563 = vunpack.c.h.b16 %v348
      %v564 = vunpack.c.l.b16 %v349
      %v565 = vunpack.c.h.b16 %v349
      %v566 = vunpack.c.l.b16 %v350
      %v567 = vunpack.c.h.b16 %v350
      %v568 = vunpack.c.l.b16 %v351
      %v569 = vunpack.c.h.b16 %v351
      %v570 = vunpack.c.l.b16 %v352
      %v571 = vunpack.c.h.b16 %v352
      %v572 = vunpack.c.l.b16 %v353
      %v573 = vunpack.c.h.b16 %v353
      %v574 = vunpack.c.l.b16 %v354
      %v575 = vunpack.c.h.b16 %v354
      %v576 = vunpack.c.l.b16 %v355
      %v577 = vunpack.c.h.b16 %v355
      %v578 = vunpack.c.l.b16 %v356
      %v579 = vunpack.c.h.b16 %v356
      %v580 = vunpack.c.l.b16 %v357
      %v581 = vunpack.c.h.b16 %v357
      %v582 = vpack.c.b16 %v552, %v550
      %v583 = vpack.c.b16 %v553, %v551
      %v584 = vpack.c.b16 %v556, %v554
      %v585 = vpack.c.b16 %v557, %v555
      %v586 = vpack.c.b16 %v560, %v558
      %v587 = vpack.c.b16 %v561, %v559
      %v588 = vpack.c.b16 %v564, %v562
      %v589 = vpack.c.b16 %v565, %v563
      %v590 = vpack.c.b16 %v568, %v566
      %v591 = vpack.c.b16 %v569, %v567
      %v592 = vpack.c.b16 %v572, %v570
      %v593 = vpack.c.b16 %v573, %v571
      %v594 = vpack.c.b16 %v576, %v574
      %v595 = vpack.c.b16 %v577, %v575
      %v596 = vpack.c.b16 %v580, %v578
      %v597 = vpack.c.b16 %v581, %v579
      %614 = vmatprep.subr.bf16.mxu0 %v437
      %615 = vmatpush1.bf16.msra.mxu0 %v436
      %616 = vmatprep.subr.bf16.mxu0 %v435
      %617 = vmatpush1.bf16.msra.mxu0 %v434
      %618 = vmatprep.subr.bf16.mxu0 %v433
      %619 = vmatpush1.bf16.msra.mxu0 %v432
      %620 = vmatprep.subr.bf16.mxu0 %v431
      %621 = vmatpush1.bf16.msra.mxu0 %v430
      %622 = vmatprep.subr.bf16.mxu0 %v429
      %623 = vmatpush1.bf16.msra.mxu0 %v428
      %624 = vmatprep.subr.bf16.mxu0 %v427
      %625 = vmatpush1.bf16.msra.mxu0 %v426
      %626 = vmatprep.subr.bf16.mxu0 %v425
      %627 = vmatpush1.bf16.msra.mxu0 %v424
      %628 = vmatprep.subr.bf16.mxu0 %v423
      %629 = vmatpush1.bf16.msra.mxu0 %v422
      %630 = vmatprep.subr.bf16.mxu0 %v453
      %631 = vmatpush2.bf16.msra.mxu0 %v452
      %632 = vmatprep.subr.bf16.mxu0 %v451
      %633 = vmatpush2.bf16.msra.mxu0 %v450
      %634 = vmatprep.subr.bf16.mxu0 %v449
      %635 = vmatpush2.bf16.msra.mxu0 %v448
      %636 = vmatprep.subr.bf16.mxu0 %v447
      %637 = vmatpush2.bf16.msra.mxu0 %v446
      %638 = vmatprep.subr.bf16.mxu0 %v445
      %639 = vmatpush2.bf16.msra.mxu0 %v444
      %640 = vmatprep.subr.bf16.mxu0 %v443
      %641 = vmatpush2.bf16.msra.mxu0 %v442
      %642 = vmatprep.subr.bf16.mxu0 %v441
      %643 = vmatpush2.bf16.msra.mxu0 %v440
      %644 = vmatprep.subr.bf16.mxu0 %v439
      %645 = vmatpush2.bf16.msra.mxu0 %v438
      %646 = vmatprep.mubr.bf16.mxu0 %v583
      %647 = vmatmul.mubr.bf16.gmra.mxu0 %v582
      %v648 = vpop.f32.mrf.mxu0
      %v649 = vadd.f32 %v457, %v648
      %v650 = vpop.f32.mrf.mxu0
      %v651 = vadd.f32 %v457, %v650
      %v652 = vpop.f32.mrf.mxu0
      %v653 = vadd.f32 %v462, %v652
      %v654 = vpop.f32.mrf.mxu0
      %v655 = vadd.f32 %v462, %v654
      %656 = vmatprep.mubr.bf16.mxu0 %v585
      %657 = vmatmul.mubr.bf16.gmra.mxu0 %v584
      %v658 = vpop.f32.mrf.mxu0
      %v659 = vadd.f32 %v467, %v658
      %v660 = vpop.f32.mrf.mxu0
      %v661 = vadd.f32 %v467, %v660
      %v662 = vpop.f32.mrf.mxu0
      %v663 = vadd.f32 %v472, %v662
      %v664 = vpop.f32.mrf.mxu0
      %v665 = vadd.f32 %v472, %v664
      %666 = vmatprep.mubr.bf16.mxu0 %v587
      %667 = vmatmul.mubr.bf16.gmra.mxu0 %v586
      %v668 = vpop.f32.mrf.mxu0
      %v669 = vadd.f32 %v477, %v668
      %v670 = vpop.f32.mrf.mxu0
      %v671 = vadd.f32 %v477, %v670
      %v672 = vpop.f32.mrf.mxu0
      %v673 = vadd.f32 %v482, %v672
      %v674 = vpop.f32.mrf.mxu0
      %v675 = vadd.f32 %v482, %v674
      %676 = vmatprep.mubr.bf16.mxu0 %v589
      %677 = vmatmul.mubr.bf16.gmra.mxu0 %v588
      %v678 = vpop.f32.mrf.mxu0
      %v679 = vadd.f32 %v487, %v678
      %v680 = vpop.f32.mrf.mxu0
      %v681 = vadd.f32 %v487, %v680
      %v682 = vpop.f32.mrf.mxu0
      %v683 = vadd.f32 %v492, %v682
      %v684 = vpop.f32.mrf.mxu0
      %v685 = vadd.f32 %v492, %v684
      %686 = vmatprep.mubr.bf16.mxu0 %v591
      %687 = vmatmul.mubr.bf16.gmra.mxu0 %v590
      %v688 = vpop.f32.mrf.mxu0
      %v689 = vadd.f32 %v497, %v688
      %v690 = vpop.f32.mrf.mxu0
      %v691 = vadd.f32 %v497, %v690
      %v692 = vpop.f32.mrf.mxu0
      %v693 = vadd.f32 %v502, %v692
      %v694 = vpop.f32.mrf.mxu0
      %v695 = vadd.f32 %v502, %v694
      %696 = vmatprep.mubr.bf16.mxu0 %v593
      %697 = vmatmul.mubr.bf16.gmra.mxu0 %v592
      %v698 = vpop.f32.mrf.mxu0
      %v699 = vadd.f32 %v507, %v698
      %v700 = vpop.f32.mrf.mxu0
      %v701 = vadd.f32 %v507, %v700
      %v702 = vpop.f32.mrf.mxu0
      %v703 = vadd.f32 %v512, %v702
      %v704 = vpop.f32.mrf.mxu0
      %v705 = vadd.f32 %v512, %v704
      %706 = vmatprep.mubr.bf16.mxu0 %v595
      %707 = vmatmul.mubr.bf16.gmra.mxu0 %v594
      %v708 = vpop.f32.mrf.mxu0
      %v709 = vadd.f32 %v517, %v708
      %v710 = vpop.f32.mrf.mxu0
      %v711 = vadd.f32 %v517, %v710
      %v712 = vpop.f32.mrf.mxu0
      %v713 = vadd.f32 %v522, %v712
      %v714 = vpop.f32.mrf.mxu0
      %v715 = vadd.f32 %v522, %v714
      %716 = vmatprep.mubr.bf16.mxu0 %v597
      %717 = vmatmul.mubr.bf16.gmra.mxu0 %v596
      %v718 = vpop.f32.mrf.mxu0
      %v719 = vadd.f32 %v527, %v718
      %v720 = vpop.f32.mrf.mxu0
      %v721 = vadd.f32 %v527, %v720
      %v722 = vpop.f32.mrf.mxu0
      %v723 = vadd.f32 %v532, %v722
      %v724 = vpop.f32.mrf.mxu0
      %v725 = vadd.f32 %v532, %v724
      %726 = vdwg.mxu0
      %vm727 = vcmp.gt.f32.partialorder %v649, 0.0
      %vm728 = vcmp.gt.f32.partialorder %v651, 0.0
      %vm729 = vcmp.gt.f32.partialorder %v653, 0.0
      %vm730 = vcmp.gt.f32.partialorder %v655, 0.0
      %vm731 = vcmp.gt.f32.partialorder %v659, 0.0
      %vm732 = vcmp.gt.f32.partialorder %v661, 0.0
      %vm733 = vcmp.gt.f32.partialorder %v663, 0.0
      %vm734 = vcmp.gt.f32.partialorder %v665, 0.0
      %vm735 = vcmp.gt.f32.partialorder %v669, 0.0
      %vm736 = vcmp.gt.f32.partialorder %v671, 0.0
      %vm737 = vcmp.gt.f32.partialorder %v673, 0.0
      %vm738 = vcmp.gt.f32.partialorder %v675, 0.0
      %vm739 = vcmp.gt.f32.partialorder %v679, 0.0
      %vm740 = vcmp.gt.f32.partialorder %v681, 0.0
      %vm741 = vcmp.gt.f32.partialorder %v683, 0.0
      %vm742 = vcmp.gt.f32.partialorder %v685, 0.0
      %vm743 = vcmp.gt.f32.partialorder %v689, 0.0
      %vm744 = vcmp.gt.f32.partialorder %v691, 0.0
      %vm745 = vcmp.gt.f32.partialorder %v693, 0.0
      %vm746 = vcmp.gt.f32.partialorder %v695, 0.0
      %vm747 = vcmp.gt.f32.partialorder %v699, 0.0
      %vm748 = vcmp.gt.f32.partialorder %v701, 0.0
      %vm749 = vcmp.gt.f32.partialorder %v703, 0.0
      %vm750 = vcmp.gt.f32.partialorder %v705, 0.0
      %vm751 = vcmp.gt.f32.partialorder %v709, 0.0
      %vm752 = vcmp.gt.f32.partialorder %v711, 0.0
      %vm753 = vcmp.gt.f32.partialorder %v713, 0.0
      %vm754 = vcmp.gt.f32.partialorder %v715, 0.0
      %vm755 = vcmp.gt.f32.partialorder %v719, 0.0
      %vm756 = vcmp.gt.f32.partialorder %v721, 0.0
      %vm757 = vcmp.gt.f32.partialorder %v723, 0.0
      %vm758 = vcmp.gt.f32.partialorder %v725, 0.0
      %v759 = vmul.f32 %v649, 0.01
      %v760 = vmul.f32 %v651, 0.01
      %v761 = vmul.f32 %v653, 0.01
      %v762 = vmul.f32 %v655, 0.01
      %v763 = vmul.f32 %v659, 0.01
      %v764 = vmul.f32 %v661, 0.01
      %v765 = vmul.f32 %v663, 0.01
      %v766 = vmul.f32 %v665, 0.01
      %v767 = vmul.f32 %v669, 0.01
      %v768 = vmul.f32 %v671, 0.01
      %v769 = vmul.f32 %v673, 0.01
      %v770 = vmul.f32 %v675, 0.01
      %v771 = vmul.f32 %v679, 0.01
      %v772 = vmul.f32 %v681, 0.01
      %v773 = vmul.f32 %v683, 0.01
      %v774 = vmul.f32 %v685, 0.01
      %v775 = vmul.f32 %v689, 0.01
      %v776 = vmul.f32 %v691, 0.01
      %v777 = vmul.f32 %v693, 0.01
      %v778 = vmul.f32 %v695, 0.01
      %v779 = vmul.f32 %v699, 0.01
      %v780 = vmul.f32 %v701, 0.01
      %v781 = vmul.f32 %v703, 0.01
      %v782 = vmul.f32 %v705, 0.01
      %v783 = vmul.f32 %v709, 0.01
      %v784 = vmul.f32 %v711, 0.01
      %v785 = vmul.f32 %v713, 0.01
      %v786 = vmul.f32 %v715, 0.01
      %v787 = vmul.f32 %v719, 0.01
      %v788 = vmul.f32 %v721, 0.01
      %v789 = vmul.f32 %v723, 0.01
      %v790 = vmul.f32 %v725, 0.01
      %v791 = vsel %vm727, %v649, %v759
      %v792 = vsel %vm728, %v651, %v760
      %v793 = vsel %vm729, %v653, %v761
      %v794 = vsel %vm730, %v655, %v762
      %v795 = vsel %vm731, %v659, %v763
      %v796 = vsel %vm732, %v661, %v764
      %v797 = vsel %vm733, %v663, %v765
      %v798 = vsel %vm734, %v665, %v766
      %v799 = vsel %vm735, %v669, %v767
      %v800 = vsel %vm736, %v671, %v768
      %v801 = vsel %vm737, %v673, %v769
      %v802 = vsel %vm738, %v675, %v770
      %v803 = vsel %vm739, %v679, %v771
      %v804 = vsel %vm740, %v681, %v772
      %v805 = vsel %vm741, %v683, %v773
      %v806 = vsel %vm742, %v685, %v774
      %v807 = vsel %vm743, %v689, %v775
      %v808 = vsel %vm744, %v691, %v776
      %v809 = vsel %vm745, %v693, %v777
      %v810 = vsel %vm746, %v695, %v778
      %v811 = vsel %vm747, %v699, %v779
      %v812 = vsel %vm748, %v701, %v780
      %v813 = vsel %vm749, %v703, %v781
      %v814 = vsel %vm750, %v705, %v782
      %v815 = vsel %vm751, %v709, %v783
      %v816 = vsel %vm752, %v711, %v784
      %v817 = vsel %vm753, %v713, %v785
      %v818 = vsel %vm754, %v715, %v786
      %v819 = vsel %vm755, %v719, %v787
      %v820 = vsel %vm756, %v721, %v788
      %v821 = vsel %vm757, %v723, %v789
      %v822 = vsel %vm758, %v725, %v790
      %823 = vxpose.xlu0.b32.start [1/16] %v791, 128
      %824 = vxpose.xlu0.b32.cont [2/16] %v793, 128
      %825 = vxpose.xlu0.b32.cont [3/16] %v795, 128
      %826 = vxpose.xlu0.b32.cont [4/16] %v797, 128
      %827 = vxpose.xlu0.b32.cont [5/16] %v799, 128
      %828 = vxpose.xlu0.b32.cont [6/16] %v801, 128
      %829 = vxpose.xlu0.b32.cont [7/16] %v803, 128
      %830 = vxpose.xlu0.b32.cont [8/16] %v805, 128
      %831 = vxpose.xlu0.b32.cont [9/16] %v807, 128
      %832 = vxpose.xlu0.b32.cont [10/16] %v809, 128
      %833 = vxpose.xlu0.b32.cont [11/16] %v811, 128
      %834 = vxpose.xlu0.b32.cont [12/16] %v813, 128
      %835 = vxpose.xlu0.b32.cont [13/16] %v815, 128
      %836 = vxpose.xlu0.b32.cont [14/16] %v817, 128
      %837 = vxpose.xlu0.b32.cont [15/16] %v819, 128
      %838 = vxpose.xlu0.b32.end [16/16] %v821, 128
      %v839 = vpop.trf.xlu0
      %v840 = vpop.trf.xlu0
      %v841 = vpop.trf.xlu0
      %v842 = vpop.trf.xlu0
      %v843 = vpop.trf.xlu0
      %v844 = vpop.trf.xlu0
      %v845 = vpop.trf.xlu0
      %v846 = vpop.trf.xlu0
      %v847 = vpop.trf.xlu0
      %v848 = vpop.trf.xlu0
      %v849 = vpop.trf.xlu0
      %v850 = vpop.trf.xlu0
      %v851 = vpop.trf.xlu0
      %v852 = vpop.trf.xlu0
      %v853 = vpop.trf.xlu0
      %v854 = vpop.trf.xlu0
      %855 = vxpose.xlu0.b32.start [1/16] %v792, 128
      %856 = vxpose.xlu0.b32.cont [2/16] %v794, 128
      %857 = vxpose.xlu0.b32.cont [3/16] %v796, 128
      %858 = vxpose.xlu0.b32.cont [4/16] %v798, 128
      %859 = vxpose.xlu0.b32.cont [5/16] %v800, 128
      %860 = vxpose.xlu0.b32.cont [6/16] %v802, 128
      %861 = vxpose.xlu0.b32.cont [7/16] %v804, 128
      %862 = vxpose.xlu0.b32.cont [8/16] %v806, 128
      %863 = vxpose.xlu0.b32.cont [9/16] %v808, 128
      %864 = vxpose.xlu0.b32.cont [10/16] %v810, 128
      %865 = vxpose.xlu0.b32.cont [11/16] %v812, 128
      %866 = vxpose.xlu0.b32.cont [12/16] %v814, 128
      %867 = vxpose.xlu0.b32.cont [13/16] %v816, 128
      %868 = vxpose.xlu0.b32.cont [14/16] %v818, 128
      %869 = vxpose.xlu0.b32.cont [15/16] %v820, 128
      %870 = vxpose.xlu0.b32.end [16/16] %v822, 128
      %v871 = vpop.trf.xlu0
      %v872 = vpop.trf.xlu0
      %v873 = vpop.trf.xlu0
      %v874 = vpop.trf.xlu0
      %v875 = vpop.trf.xlu0
      %v876 = vpop.trf.xlu0
      %v877 = vpop.trf.xlu0
      %v878 = vpop.trf.xlu0
      %v879 = vpop.trf.xlu0
      %v880 = vpop.trf.xlu0
      %v881 = vpop.trf.xlu0
      %v882 = vpop.trf.xlu0
      %v883 = vpop.trf.xlu0
      %v884 = vpop.trf.xlu0
      %v885 = vpop.trf.xlu0
      %v886 = vpop.trf.xlu0
      %s887 = scalar_lea.vmem [#allocation2], 48
      %888 = vst [vmem:[%s887 + $0x8] sm:$0xff] %v839
      %889 = vst [vmem:[%s887 + $0x20] sm:$0xff] %v840
      %890 = vst [vmem:[%s887 + $0x38] sm:$0xff] %v841
      %891 = vst [vmem:[%s887 + $0x50] sm:$0xff] %v842
      %892 = vst [vmem:[%s887 + $0x68] sm:$0xff] %v843
      %893 = vst [vmem:[%s887 + $0x80] sm:$0xff] %v844
      %894 = vst [vmem:[%s887 + $0x98] sm:$0xff] %v845
      %895 = vst [vmem:[%s887 + $0xb0] sm:$0xff] %v846
      %896 = vst [vmem:[%s887 + $0xc8] sm:$0xff] %v847
      %897 = vst [vmem:[%s887 + $0xe0] sm:$0xff] %v848
      %898 = vst [vmem:[%s887 + $0xf8] sm:$0xff] %v849
      %899 = vst [vmem:[%s887 + $0x110] sm:$0xff] %v850
      %900 = vst [vmem:[%s887 + $0x128] sm:$0xff] %v851
      %901 = vst [vmem:[%s887 + $0x140] sm:$0xff] %v852
      %902 = vst [vmem:[%s887 + $0x158] sm:$0xff] %v853
      %903 = vst [vmem:[%s887 + $0x170] sm:$0xff] %v854
      %904 = vst [vmem:[%s887 + $0x188] sm:$0xff] %v871
      %905 = vst [vmem:[%s887 + $0x1a0] sm:$0xff] %v872
      %906 = vst [vmem:[%s887 + $0x1b8] sm:$0xff] %v873
      %907 = vst [vmem:[%s887 + $0x1d0] sm:$0xff] %v874
      %908 = vst [vmem:[%s887 + $0x1e8] sm:$0xff] %v875
      %909 = vst [vmem:[%s887 + $0x200] sm:$0xff] %v876
      %910 = vst [vmem:[%s887 + $0x218] sm:$0xff] %v877
      %911 = vst [vmem:[%s887 + $0x230] sm:$0xff] %v878
      %912 = vst [vmem:[%s887 + $0x248] sm:$0xff] %v879
      %913 = vst [vmem:[%s887 + $0x260] sm:$0xff] %v880
      %914 = vst [vmem:[%s887 + $0x278] sm:$0xff] %v881
      %915 = vst [vmem:[%s887 + $0x290] sm:$0xff] %v882
      %916 = vst [vmem:[%s887 + $0x2a8] sm:$0xff] %v883
      %917 = vst [vmem:[%s887 + $0x2c0] sm:$0xff] %v884
      %918 = vst [vmem:[%s887 + $0x2d8] sm:$0xff] %v885
      %919 = vst [vmem:[%s887 + $0x2f0] sm:$0xff] %v886
      %920 = vst [vmem:[%s887] sm:$0x1] 0.0
      %921 = vst [vmem:[%s887 + $0x30] sm:$0x1] 0.0
      %922 = vst [vmem:[%s887 + $0x60] sm:$0x1] 0.0
      %923 = vst [vmem:[%s887 + $0x90] sm:$0x1] 0.0
      %924 = vst [vmem:[%s887 + $0xc0] sm:$0x1] 0.0
      %925 = vst [vmem:[%s887 + $0xf0] sm:$0x1] 0.0
      %926 = vst [vmem:[%s887 + $0x120] sm:$0x1] 0.0
      %927 = vst [vmem:[%s887 + $0x150] sm:$0x1] 0.0
      %928 = vst [vmem:[%s887 + $0x180] sm:$0x1] 0.0
      %929 = vst [vmem:[%s887 + $0x1b0] sm:$0x1] 0.0
      %930 = vst [vmem:[%s887 + $0x1e0] sm:$0x1] 0.0
      %931 = vst [vmem:[%s887 + $0x210] sm:$0x1] 0.0
      %932 = vst [vmem:[%s887 + $0x240] sm:$0x1] 0.0
      %933 = vst [vmem:[%s887 + $0x270] sm:$0x1] 0.0
      %934 = vst [vmem:[%s887 + $0x2a0] sm:$0x1] 0.0
      %935 = vst [vmem:[%s887 + $0x2d0] sm:$0x1] 0.0
      %vm968 = vcmask 1040384
      %v969 = vrot.slane %v839, 7
      %v970 = vrot.slane %v840, 7
      %v971 = vsel %vm968, %v969, %v970
      %v972 = vrot.slane %v841, 7
      %v973 = vrot.slane %v842, 7
      %v974 = vsel %vm968, %v972, %v973
      %v975 = vrot.slane %v843, 7
      %v976 = vrot.slane %v844, 7
      %v977 = vsel %vm968, %v975, %v976
      %v978 = vrot.slane %v845, 7
      %v979 = vrot.slane %v846, 7
      %v980 = vsel %vm968, %v978, %v979
      %v981 = vrot.slane %v847, 7
      %v982 = vrot.slane %v848, 7
      %v983 = vsel %vm968, %v981, %v982
      %v984 = vrot.slane %v849, 7
      %v985 = vrot.slane %v850, 7
      %v986 = vsel %vm968, %v984, %v985
      %v987 = vrot.slane %v851, 7
      %v988 = vrot.slane %v852, 7
      %v989 = vsel %vm968, %v987, %v988
      %v990 = vrot.slane %v853, 7
      %v991 = vrot.slane %v854, 7
      %v992 = vsel %vm968, %v990, %v991
      %v993 = vrot.slane %v871, 7
      %v994 = vrot.slane %v872, 7
      %v995 = vsel %vm968, %v993, %v994
      %v996 = vrot.slane %v873, 7
      %v997 = vrot.slane %v874, 7
      %v998 = vsel %vm968, %v996, %v997
      %v999 = vrot.slane %v875, 7
      %v1000 = vrot.slane %v876, 7
      %v1001 = vsel %vm968, %v999, %v1000
      %v1002 = vrot.slane %v877, 7
      %v1003 = vrot.slane %v878, 7
      %v1004 = vsel %vm968, %v1002, %v1003
      %v1005 = vrot.slane %v879, 7
      %v1006 = vrot.slane %v880, 7
      %v1007 = vsel %vm968, %v1005, %v1006
      %v1008 = vrot.slane %v881, 7
      %v1009 = vrot.slane %v882, 7
      %v1010 = vsel %vm968, %v1008, %v1009
      %v1011 = vrot.slane %v883, 7
      %v1012 = vrot.slane %v884, 7
      %v1013 = vsel %vm968, %v1011, %v1012
      %v1014 = vrot.slane %v885, 7
      %v1015 = vrot.slane %v886, 7
      %v1016 = vsel %vm968, %v1014, %v1015
      %1049 = vst [vmem:[%s887] sm:$0xfe] %v969
      %1050 = vst [vmem:[%s887 + $0x18] sm:$0xff] %v971
      %1051 = vst [vmem:[%s887 + $0x30] sm:$0xfe] %v972
      %1052 = vst [vmem:[%s887 + $0x48] sm:$0xff] %v974
      %1053 = vst [vmem:[%s887 + $0x60] sm:$0xfe] %v975
      %1054 = vst [vmem:[%s887 + $0x78] sm:$0xff] %v977
      %1055 = vst [vmem:[%s887 + $0x90] sm:$0xfe] %v978
      %1056 = vst [vmem:[%s887 + $0xa8] sm:$0xff] %v980
      %1057 = vst [vmem:[%s887 + $0xc0] sm:$0xfe] %v981
      %1058 = vst [vmem:[%s887 + $0xd8] sm:$0xff] %v983
      %1059 = vst [vmem:[%s887 + $0xf0] sm:$0xfe] %v984
      %1060 = vst [vmem:[%s887 + $0x108] sm:$0xff] %v986
      %1061 = vst [vmem:[%s887 + $0x120] sm:$0xfe] %v987
      %1062 = vst [vmem:[%s887 + $0x138] sm:$0xff] %v989
      %1063 = vst [vmem:[%s887 + $0x150] sm:$0xfe] %v990
      %1064 = vst [vmem:[%s887 + $0x168] sm:$0xff] %v992
      %1065 = vst [vmem:[%s887 + $0x180] sm:$0xfe] %v993
      %1066 = vst [vmem:[%s887 + $0x198] sm:$0xff] %v995
      %1067 = vst [vmem:[%s887 + $0x1b0] sm:$0xfe] %v996
      %1068 = vst [vmem:[%s887 + $0x1c8] sm:$0xff] %v998
      %1069 = vst [vmem:[%s887 + $0x1e0] sm:$0xfe] %v999
      %1070 = vst [vmem:[%s887 + $0x1f8] sm:$0xff] %v1001
      %1071 = vst [vmem:[%s887 + $0x210] sm:$0xfe] %v1002
      %1072 = vst [vmem:[%s887 + $0x228] sm:$0xff] %v1004
      %1073 = vst [vmem:[%s887 + $0x240] sm:$0xfe] %v1005
      %1074 = vst [vmem:[%s887 + $0x258] sm:$0xff] %v1007
      %1075 = vst [vmem:[%s887 + $0x270] sm:$0xfe] %v1008
      %1076 = vst [vmem:[%s887 + $0x288] sm:$0xff] %v1010
      %1077 = vst [vmem:[%s887 + $0x2a0] sm:$0xfe] %v1011
      %1078 = vst [vmem:[%s887 + $0x2b8] sm:$0xff] %v1013
      %1079 = vst [vmem:[%s887 + $0x2d0] sm:$0xfe] %v1014
      %1080 = vst [vmem:[%s887 + $0x2e8] sm:$0xff] %v1016
      %vm1081 = vcmask 1046528
      %v1082 = vrot.slane %v839, 1
      %v1083 = vrot.slane %v840, 1
      %v1084 = vsel %vm1081, %v1082, %v1083
      %v1085 = vrot.slane %v841, 1
      %v1086 = vrot.slane %v842, 1
      %v1087 = vsel %vm1081, %v1085, %v1086
      %v1088 = vrot.slane %v843, 1
      %v1089 = vrot.slane %v844, 1
      %v1090 = vsel %vm1081, %v1088, %v1089
      %v1091 = vrot.slane %v845, 1
      %v1092 = vrot.slane %v846, 1
      %v1093 = vsel %vm1081, %v1091, %v1092
      %v1094 = vrot.slane %v847, 1
      %v1095 = vrot.slane %v848, 1
      %v1096 = vsel %vm1081, %v1094, %v1095
      %v1097 = vrot.slane %v849, 1
      %v1098 = vrot.slane %v850, 1
      %v1099 = vsel %vm1081, %v1097, %v1098
      %v1100 = vrot.slane %v851, 1
      %v1101 = vrot.slane %v852, 1
      %v1102 = vsel %vm1081, %v1100, %v1101
      %v1103 = vrot.slane %v853, 1
      %v1104 = vrot.slane %v854, 1
      %v1105 = vsel %vm1081, %v1103, %v1104
      %v1106 = vrot.slane %v871, 1
      %v1107 = vrot.slane %v872, 1
      %v1108 = vsel %vm1081, %v1106, %v1107
      %v1109 = vrot.slane %v873, 1
      %v1110 = vrot.slane %v874, 1
      %v1111 = vsel %vm1081, %v1109, %v1110
      %v1112 = vrot.slane %v875, 1
      %v1113 = vrot.slane %v876, 1
      %v1114 = vsel %vm1081, %v1112, %v1113
      %v1115 = vrot.slane %v877, 1
      %v1116 = vrot.slane %v878, 1
      %v1117 = vsel %vm1081, %v1115, %v1116
      %v1118 = vrot.slane %v879, 1
      %v1119 = vrot.slane %v880, 1
      %v1120 = vsel %vm1081, %v1118, %v1119
      %v1121 = vrot.slane %v881, 1
      %v1122 = vrot.slane %v882, 1
      %v1123 = vsel %vm1081, %v1121, %v1122
      %v1124 = vrot.slane %v883, 1
      %v1125 = vrot.slane %v884, 1
      %v1126 = vsel %vm1081, %v1124, %v1125
      %v1127 = vrot.slane %v885, 1
      %v1128 = vrot.slane %v886, 1
      %v1129 = vsel %vm1081, %v1127, %v1128
      %1162 = vst [vmem:[%s887 + $0x10] sm:$0xff] %v1084
      %1163 = vst [vmem:[%s887 + $0x28] sm:$0x7f] %v1083
      %1164 = vst [vmem:[%s887 + $0x40] sm:$0xff] %v1087
      %1165 = vst [vmem:[%s887 + $0x58] sm:$0x7f] %v1086
      %1166 = vst [vmem:[%s887 + $0x70] sm:$0xff] %v1090
      %1167 = vst [vmem:[%s887 + $0x88] sm:$0x7f] %v1089
      %1168 = vst [vmem:[%s887 + $0xa0] sm:$0xff] %v1093
      %1169 = vst [vmem:[%s887 + $0xb8] sm:$0x7f] %v1092
      %1170 = vst [vmem:[%s887 + $0xd0] sm:$0xff] %v1096
      %1171 = vst [vmem:[%s887 + $0xe8] sm:$0x7f] %v1095
      %1172 = vst [vmem:[%s887 + $0x100] sm:$0xff] %v1099
      %1173 = vst [vmem:[%s887 + $0x118] sm:$0x7f] %v1098
      %1174 = vst [vmem:[%s887 + $0x130] sm:$0xff] %v1102
      %1175 = vst [vmem:[%s887 + $0x148] sm:$0x7f] %v1101
      %1176 = vst [vmem:[%s887 + $0x160] sm:$0xff] %v1105
      %1177 = vst [vmem:[%s887 + $0x178] sm:$0x7f] %v1104
      %1178 = vst [vmem:[%s887 + $0x190] sm:$0xff] %v1108
      %1179 = vst [vmem:[%s887 + $0x1a8] sm:$0x7f] %v1107
      %1180 = vst [vmem:[%s887 + $0x1c0] sm:$0xff] %v1111
      %1181 = vst [vmem:[%s887 + $0x1d8] sm:$0x7f] %v1110
      %1182 = vst [vmem:[%s887 + $0x1f0] sm:$0xff] %v1114
      %1183 = vst [vmem:[%s887 + $0x208] sm:$0x7f] %v1113
      %1184 = vst [vmem:[%s887 + $0x220] sm:$0xff] %v1117
      %1185 = vst [vmem:[%s887 + $0x238] sm:$0x7f] %v1116
      %1186 = vst [vmem:[%s887 + $0x250] sm:$0xff] %v1120
      %1187 = vst [vmem:[%s887 + $0x268] sm:$0x7f] %v1119
      %1188 = vst [vmem:[%s887 + $0x280] sm:$0xff] %v1123
      %1189 = vst [vmem:[%s887 + $0x298] sm:$0x7f] %v1122
      %1190 = vst [vmem:[%s887 + $0x2b0] sm:$0xff] %v1126
      %1191 = vst [vmem:[%s887 + $0x2c8] sm:$0x7f] %v1125
      %1192 = vst [vmem:[%s887 + $0x2e0] sm:$0xff] %v1129
      %1193 = vst [vmem:[%s887 + $0x2f8] sm:$0x7f] %v1128
      %1194 = vst [vmem:[%s887 + $0x2f] sm:$0x1] 0.0
      %1195 = vst [vmem:[%s887 + $0x5f] sm:$0x1] 0.0
      %1196 = vst [vmem:[%s887 + $0x8f] sm:$0x1] 0.0
      %1197 = vst [vmem:[%s887 + $0xbf] sm:$0x1] 0.0
      %1198 = vst [vmem:[%s887 + $0xef] sm:$0x1] 0.0
      %1199 = vst [vmem:[%s887 + $0x11f] sm:$0x1] 0.0
      %1200 = vst [vmem:[%s887 + $0x14f] sm:$0x1] 0.0
      %1201 = vst [vmem:[%s887 + $0x17f] sm:$0x1] 0.0
      %1202 = vst [vmem:[%s887 + $0x1af] sm:$0x1] 0.0
      %1203 = vst [vmem:[%s887 + $0x1df] sm:$0x1] 0.0
      %1204 = vst [vmem:[%s887 + $0x20f] sm:$0x1] 0.0
      %1205 = vst [vmem:[%s887 + $0x23f] sm:$0x1] 0.0
      %1206 = vst [vmem:[%s887 + $0x26f] sm:$0x1] 0.0
      %1207 = vst [vmem:[%s887 + $0x29f] sm:$0x1] 0.0
      %1208 = vst [vmem:[%s887 + $0x2cf] sm:$0x1] 0.0
      %1209 = vst [vmem:[%s887 + $0x2ff] sm:$0x1] 0.0
      %v1210 = vld [vmem:[#allocation2] sm:$0xff]
      %v1211 = vld [vmem:[#allocation2 + $0x8] sm:$0xff]
      %v1212 = vld [vmem:[#allocation2 + $0x10] sm:$0xff]
      %v1213 = vld [vmem:[#allocation2 + $0x18] sm:$0xff]
      %v1214 = vld [vmem:[#allocation2 + $0x20] sm:$0xff]
      %v1215 = vld [vmem:[#allocation2 + $0x28] sm:$0xff]
      %v1216 = vld [vmem:[#allocation2 + $0x30] sm:$0xff]
      %v1217 = vld [vmem:[#allocation2 + $0x38] sm:$0xff]
      %v1218 = vld [vmem:[#allocation2 + $0x40] sm:$0xff]
      %v1219 = vld [vmem:[#allocation2 + $0x48] sm:$0xff]
      %v1220 = vld [vmem:[#allocation2 + $0x50] sm:$0xff]
      %v1221 = vld [vmem:[#allocation2 + $0x58] sm:$0xff]
      %v1222 = vld [vmem:[#allocation2 + $0x60] sm:$0xff]
      %v1223 = vld [vmem:[#allocation2 + $0x68] sm:$0xff]
      %v1224 = vld [vmem:[#allocation2 + $0x70] sm:$0xff]
      %v1225 = vld [vmem:[#allocation2 + $0x78] sm:$0xff]
      %v1226 = vld [vmem:[#allocation2 + $0x80] sm:$0xff]
      %v1227 = vld [vmem:[#allocation2 + $0x88] sm:$0xff]
      %v1228 = vld [vmem:[#allocation2 + $0x90] sm:$0xff]
      %v1229 = vld [vmem:[#allocation2 + $0x98] sm:$0xff]
      %v1230 = vld [vmem:[#allocation2 + $0xa0] sm:$0xff]
      %v1231 = vld [vmem:[#allocation2 + $0xa8] sm:$0xff]
      %v1232 = vld [vmem:[#allocation2 + $0xb0] sm:$0xff]
      %v1233 = vld [vmem:[#allocation2 + $0xb8] sm:$0xff]
      %v1234 = vld [vmem:[#allocation2 + $0xc0] sm:$0xff]
      %v1235 = vld [vmem:[#allocation2 + $0xc8] sm:$0xff]
      %v1236 = vld [vmem:[#allocation2 + $0xd0] sm:$0xff]
      %v1237 = vld [vmem:[#allocation2 + $0xd8] sm:$0xff]
      %v1238 = vld [vmem:[#allocation2 + $0xe0] sm:$0xff]
      %v1239 = vld [vmem:[#allocation2 + $0xe8] sm:$0xff]
      %v1240 = vld [vmem:[#allocation2 + $0xf0] sm:$0xff]
      %v1241 = vld [vmem:[#allocation2 + $0xf8] sm:$0xff]
      %v1242 = vld [vmem:[#allocation2 + $0x100] sm:$0xff]
      %v1243 = vld [vmem:[#allocation2 + $0x108] sm:$0xff]
      %v1244 = vld [vmem:[#allocation2 + $0x110] sm:$0xff]
      %v1245 = vld [vmem:[#allocation2 + $0x118] sm:$0xff]
      %v1246 = vld [vmem:[#allocation2 + $0x120] sm:$0xff]
      %v1247 = vld [vmem:[#allocation2 + $0x128] sm:$0xff]
      %v1248 = vld [vmem:[#allocation2 + $0x130] sm:$0xff]
      %v1249 = vld [vmem:[#allocation2 + $0x138] sm:$0xff]
      %v1250 = vld [vmem:[#allocation2 + $0x140] sm:$0xff]
      %v1251 = vld [vmem:[#allocation2 + $0x148] sm:$0xff]
      %v1252 = vld [vmem:[#allocation2 + $0x150] sm:$0xff]
      %v1253 = vld [vmem:[#allocation2 + $0x158] sm:$0xff]
      %v1254 = vld [vmem:[#allocation2 + $0x160] sm:$0xff]
      %v1255 = vld [vmem:[#allocation2 + $0x168] sm:$0xff]
      %v1256 = vld [vmem:[#allocation2 + $0x170] sm:$0xff]
      %v1257 = vld [vmem:[#allocation2 + $0x178] sm:$0xff]
      %v1258 = vld [vmem:[#allocation2 + $0x180] sm:$0xff]
      %v1259 = vld [vmem:[#allocation2 + $0x188] sm:$0xff]
      %v1260 = vld [vmem:[#allocation2 + $0x190] sm:$0xff]
      %v1261 = vld [vmem:[#allocation2 + $0x198] sm:$0xff]
      %v1262 = vld [vmem:[#allocation2 + $0x1a0] sm:$0xff]
      %v1263 = vld [vmem:[#allocation2 + $0x1a8] sm:$0xff]
      %v1264 = vld [vmem:[#allocation2 + $0x1b0] sm:$0xff]
      %v1265 = vld [vmem:[#allocation2 + $0x1b8] sm:$0xff]
      %v1266 = vld [vmem:[#allocation2 + $0x1c0] sm:$0xff]
      %v1267 = vld [vmem:[#allocation2 + $0x1c8] sm:$0xff]
      %v1268 = vld [vmem:[#allocation2 + $0x1d0] sm:$0xff]
      %v1269 = vld [vmem:[#allocation2 + $0x1d8] sm:$0xff]
      %v1270 = vld [vmem:[#allocation2 + $0x1e0] sm:$0xff]
      %v1271 = vld [vmem:[#allocation2 + $0x1e8] sm:$0xff]
      %v1272 = vld [vmem:[#allocation2 + $0x1f0] sm:$0xff]
      %v1273 = vld [vmem:[#allocation2 + $0x1f8] sm:$0xff]
      %v1274 = vld [vmem:[#allocation2 + $0x200] sm:$0xff]
      %v1275 = vld [vmem:[#allocation2 + $0x208] sm:$0xff]
      %v1276 = vld [vmem:[#allocation2 + $0x210] sm:$0xff]
      %v1277 = vld [vmem:[#allocation2 + $0x218] sm:$0xff]
      %v1278 = vld [vmem:[#allocation2 + $0x220] sm:$0xff]
      %v1279 = vld [vmem:[#allocation2 + $0x228] sm:$0xff]
      %v1280 = vld [vmem:[#allocation2 + $0x230] sm:$0xff]
      %v1281 = vld [vmem:[#allocation2 + $0x238] sm:$0xff]
      %v1282 = vld [vmem:[#allocation2 + $0x240] sm:$0xff]
      %v1283 = vld [vmem:[#allocation2 + $0x248] sm:$0xff]
      %v1284 = vld [vmem:[#allocation2 + $0x250] sm:$0xff]
      %v1285 = vld [vmem:[#allocation2 + $0x258] sm:$0xff]
      %v1286 = vld [vmem:[#allocation2 + $0x260] sm:$0xff]
      %v1287 = vld [vmem:[#allocation2 + $0x268] sm:$0xff]
      %v1288 = vld [vmem:[#allocation2 + $0x270] sm:$0xff]
      %v1289 = vld [vmem:[#allocation2 + $0x278] sm:$0xff]
      %v1290 = vld [vmem:[#allocation2 + $0x280] sm:$0xff]
      %v1291 = vld [vmem:[#allocation2 + $0x288] sm:$0xff]
      %v1292 = vld [vmem:[#allocation2 + $0x290] sm:$0xff]
      %v1293 = vld [vmem:[#allocation2 + $0x298] sm:$0xff]
      %v1294 = vld [vmem:[#allocation2 + $0x2a0] sm:$0xff]
      %v1295 = vld [vmem:[#allocation2 + $0x2a8] sm:$0xff]
      %v1296 = vld [vmem:[#allocation2 + $0x2b0] sm:$0xff]
      %v1297 = vld [vmem:[#allocation2 + $0x2b8] sm:$0xff]
      %v1298 = vld [vmem:[#allocation2 + $0x2c0] sm:$0xff]
      %v1299 = vld [vmem:[#allocation2 + $0x2c8] sm:$0xff]
      %v1300 = vld [vmem:[#allocation2 + $0x2d0] sm:$0xff]
      %v1301 = vld [vmem:[#allocation2 + $0x2d8] sm:$0xff]
      %v1302 = vld [vmem:[#allocation2 + $0x2e0] sm:$0xff]
      %v1303 = vld [vmem:[#allocation2 + $0x2e8] sm:$0xff]
      %v1304 = vld [vmem:[#allocation2 + $0x2f0] sm:$0xff]
      %v1305 = vld [vmem:[#allocation2 + $0x2f8] sm:$0xff]
      %v1306 = vpack.c.bf16 %v1213, %v1210
      %v1307 = vpack.c.bf16 %v1214, %v1211
      %v1308 = vpack.c.bf16 %v1215, %v1212
      %v1309 = vpack.c.bf16 %v1219, %v1216
      %v1310 = vpack.c.bf16 %v1220, %v1217
      %v1311 = vpack.c.bf16 %v1221, %v1218
      %v1312 = vpack.c.bf16 %v1225, %v1222
      %v1313 = vpack.c.bf16 %v1226, %v1223
      %v1314 = vpack.c.bf16 %v1227, %v1224
      %v1315 = vpack.c.bf16 %v1231, %v1228
      %v1316 = vpack.c.bf16 %v1232, %v1229
      %v1317 = vpack.c.bf16 %v1233, %v1230
      %v1318 = vpack.c.bf16 %v1237, %v1234
      %v1319 = vpack.c.bf16 %v1238, %v1235
      %v1320 = vpack.c.bf16 %v1239, %v1236
      %v1321 = vpack.c.bf16 %v1243, %v1240
      %v1322 = vpack.c.bf16 %v1244, %v1241
      %v1323 = vpack.c.bf16 %v1245, %v1242
      %v1324 = vpack.c.bf16 %v1249, %v1246
      %v1325 = vpack.c.bf16 %v1250, %v1247
      %v1326 = vpack.c.bf16 %v1251, %v1248
      %v1327 = vpack.c.bf16 %v1255, %v1252
      %v1328 = vpack.c.bf16 %v1256, %v1253
      %v1329 = vpack.c.bf16 %v1257, %v1254
      %v1330 = vpack.c.bf16 %v1261, %v1258
      %v1331 = vpack.c.bf16 %v1262, %v1259
      %v1332 = vpack.c.bf16 %v1263, %v1260
      %v1333 = vpack.c.bf16 %v1267, %v1264
      %v1334 = vpack.c.bf16 %v1268, %v1265
      %v1335 = vpack.c.bf16 %v1269, %v1266
      %v1336 = vpack.c.bf16 %v1273, %v1270
      %v1337 = vpack.c.bf16 %v1274, %v1271
      %v1338 = vpack.c.bf16 %v1275, %v1272
      %v1339 = vpack.c.bf16 %v1279, %v1276
      %v1340 = vpack.c.bf16 %v1280, %v1277
      %v1341 = vpack.c.bf16 %v1281, %v1278
      %v1342 = vpack.c.bf16 %v1285, %v1282
      %v1343 = vpack.c.bf16 %v1286, %v1283
      %v1344 = vpack.c.bf16 %v1287, %v1284
      %v1345 = vpack.c.bf16 %v1291, %v1288
      %v1346 = vpack.c.bf16 %v1292, %v1289
      %v1347 = vpack.c.bf16 %v1293, %v1290
      %v1348 = vpack.c.bf16 %v1297, %v1294
      %v1349 = vpack.c.bf16 %v1298, %v1295
      %v1350 = vpack.c.bf16 %v1299, %v1296
      %v1351 = vpack.c.bf16 %v1303, %v1300
      %v1352 = vpack.c.bf16 %v1304, %v1301
      %v1353 = vpack.c.bf16 %v1305, %v1302
      %v1354 = vld [vmem:[%s3] sm:$0xf]
      %v1355 = vld [vmem:[%s3 + $0x4] sm:$0xf]
      %v1356 = vld [vmem:[%s3 + $0x8] sm:$0xf]
      %v1357 = vld [vmem:[%s3 + $0xc] sm:$0xf]
      %v1358 = vld [vmem:[%s3 + $0x10] sm:$0xf]
      %v1359 = vld [vmem:[%s3 + $0x14] sm:$0xf]
      %v1360 = vld [vmem:[%s3 + $0x18] sm:$0xf]
      %v1361 = vld [vmem:[%s3 + $0x1c] sm:$0xf]
      %v1362 = vld [vmem:[%s3 + $0x20] sm:$0xf]
      %v1363 = vld [vmem:[%s3 + $0x24] sm:$0xf]
      %v1364 = vld [vmem:[%s3 + $0x28] sm:$0xf]
      %v1365 = vld [vmem:[%s3 + $0x2c] sm:$0xf]
      %v1366 = vld [vmem:[%s3 + $0x30] sm:$0xf]
      %v1367 = vld [vmem:[%s3 + $0x34] sm:$0xf]
      %v1368 = vld [vmem:[%s3 + $0x38] sm:$0xf]
      %v1369 = vld [vmem:[%s3 + $0x3c] sm:$0xf]
      %v1370 = vld [vmem:[%s3 + $0x40] sm:$0xf]
      %v1371 = vld [vmem:[%s3 + $0x44] sm:$0xf]
      %v1372 = vld [vmem:[%s3 + $0x48] sm:$0xf]
      %v1373 = vld [vmem:[%s3 + $0x4c] sm:$0xf]
      %v1374 = vld [vmem:[%s3 + $0x50] sm:$0xf]
      %v1375 = vld [vmem:[%s3 + $0x54] sm:$0xf]
      %v1376 = vld [vmem:[%s3 + $0x58] sm:$0xf]
      %v1377 = vld [vmem:[%s3 + $0x5c] sm:$0xf]
      %v1378 = vld [vmem:[%s3 + $0x60] sm:$0xf]
      %v1379 = vld [vmem:[%s3 + $0x64] sm:$0xf]
      %v1380 = vld [vmem:[%s3 + $0x68] sm:$0xf]
      %v1381 = vld [vmem:[%s3 + $0x6c] sm:$0xf]
      %v1382 = vld [vmem:[%s3 + $0x70] sm:$0xf]
      %v1383 = vld [vmem:[%s3 + $0x74] sm:$0xf]
      %v1384 = vld [vmem:[%s3 + $0x78] sm:$0xf]
      %v1385 = vld [vmem:[%s3 + $0x7c] sm:$0xf]
      %v1386 = vld [vmem:[%s3 + $0x80] sm:$0xf]
      %v1387 = vld [vmem:[%s3 + $0x84] sm:$0xf]
      %v1388 = vld [vmem:[%s3 + $0x88] sm:$0xf]
      %v1389 = vld [vmem:[%s3 + $0x8c] sm:$0xf]
      %v1390 = vld [vmem:[%s3 + $0x90] sm:$0xf]
      %v1391 = vld [vmem:[%s3 + $0x94] sm:$0xf]
      %v1392 = vld [vmem:[%s3 + $0x98] sm:$0xf]
      %v1393 = vld [vmem:[%s3 + $0x9c] sm:$0xf]
      %v1394 = vld [vmem:[%s3 + $0xa0] sm:$0xf]
      %v1395 = vld [vmem:[%s3 + $0xa4] sm:$0xf]
      %v1396 = vld [vmem:[%s3 + $0xa8] sm:$0xf]
      %v1397 = vld [vmem:[%s3 + $0xac] sm:$0xf]
      %v1398 = vld [vmem:[%s3 + $0xb0] sm:$0xf]
      %v1399 = vld [vmem:[%s3 + $0xb4] sm:$0xf]
      %v1400 = vld [vmem:[%s3 + $0xb8] sm:$0xf]
      %v1401 = vld [vmem:[%s3 + $0xbc] sm:$0xf]
      %v1402 = vld [vmem:[%s887] sm:$0xff]
      %v1403 = vld [vmem:[%s887 + $0x8] sm:$0xff]
      %v1404 = vld [vmem:[%s887 + $0x10] sm:$0xff]
      %v1405 = vld [vmem:[%s887 + $0x18] sm:$0xff]
      %v1406 = vld [vmem:[%s887 + $0x20] sm:$0xff]
      %v1407 = vld [vmem:[%s887 + $0x28] sm:$0xff]
      %v1408 = vld [vmem:[%s887 + $0x30] sm:$0xff]
      %v1409 = vld [vmem:[%s887 + $0x38] sm:$0xff]
      %v1410 = vld [vmem:[%s887 + $0x40] sm:$0xff]
      %v1411 = vld [vmem:[%s887 + $0x48] sm:$0xff]
      %v1412 = vld [vmem:[%s887 + $0x50] sm:$0xff]
      %v1413 = vld [vmem:[%s887 + $0x58] sm:$0xff]
      %v1414 = vld [vmem:[%s887 + $0x60] sm:$0xff]
      %v1415 = vld [vmem:[%s887 + $0x68] sm:$0xff]
      %v1416 = vld [vmem:[%s887 + $0x70] sm:$0xff]
      %v1417 = vld [vmem:[%s887 + $0x78] sm:$0xff]
      %v1418 = vld [vmem:[%s887 + $0x80] sm:$0xff]
      %v1419 = vld [vmem:[%s887 + $0x88] sm:$0xff]
      %v1420 = vld [vmem:[%s887 + $0x90] sm:$0xff]
      %v1421 = vld [vmem:[%s887 + $0x98] sm:$0xff]
      %v1422 = vld [vmem:[%s887 + $0xa0] sm:$0xff]
      %v1423 = vld [vmem:[%s887 + $0xa8] sm:$0xff]
      %v1424 = vld [vmem:[%s887 + $0xb0] sm:$0xff]
      %v1425 = vld [vmem:[%s887 + $0xb8] sm:$0xff]
      %v1426 = vld [vmem:[%s887 + $0xc0] sm:$0xff]
      %v1427 = vld [vmem:[%s887 + $0xc8] sm:$0xff]
      %v1428 = vld [vmem:[%s887 + $0xd0] sm:$0xff]
      %v1429 = vld [vmem:[%s887 + $0xd8] sm:$0xff]
      %v1430 = vld [vmem:[%s887 + $0xe0] sm:$0xff]
      %v1431 = vld [vmem:[%s887 + $0xe8] sm:$0xff]
      %v1432 = vld [vmem:[%s887 + $0xf0] sm:$0xff]
      %v1433 = vld [vmem:[%s887 + $0xf8] sm:$0xff]
      %v1434 = vld [vmem:[%s887 + $0x100] sm:$0xff]
      %v1435 = vld [vmem:[%s887 + $0x108] sm:$0xff]
      %v1436 = vld [vmem:[%s887 + $0x110] sm:$0xff]
      %v1437 = vld [vmem:[%s887 + $0x118] sm:$0xff]
      %v1438 = vld [vmem:[%s887 + $0x120] sm:$0xff]
      %v1439 = vld [vmem:[%s887 + $0x128] sm:$0xff]
      %v1440 = vld [vmem:[%s887 + $0x130] sm:$0xff]
      %v1441 = vld [vmem:[%s887 + $0x138] sm:$0xff]
      %v1442 = vld [vmem:[%s887 + $0x140] sm:$0xff]
      %v1443 = vld [vmem:[%s887 + $0x148] sm:$0xff]
      %v1444 = vld [vmem:[%s887 + $0x150] sm:$0xff]
      %v1445 = vld [vmem:[%s887 + $0x158] sm:$0xff]
      %v1446 = vld [vmem:[%s887 + $0x160] sm:$0xff]
      %v1447 = vld [vmem:[%s887 + $0x168] sm:$0xff]
      %v1448 = vld [vmem:[%s887 + $0x170] sm:$0xff]
      %v1449 = vld [vmem:[%s887 + $0x178] sm:$0xff]
      %v1450 = vld [vmem:[%s887 + $0x180] sm:$0xff]
      %v1451 = vld [vmem:[%s887 + $0x188] sm:$0xff]
      %v1452 = vld [vmem:[%s887 + $0x190] sm:$0xff]
      %v1453 = vld [vmem:[%s887 + $0x198] sm:$0xff]
      %v1454 = vld [vmem:[%s887 + $0x1a0] sm:$0xff]
      %v1455 = vld [vmem:[%s887 + $0x1a8] sm:$0xff]
      %v1456 = vld [vmem:[%s887 + $0x1b0] sm:$0xff]
      %v1457 = vld [vmem:[%s887 + $0x1b8] sm:$0xff]
      %v1458 = vld [vmem:[%s887 + $0x1c0] sm:$0xff]
      %v1459 = vld [vmem:[%s887 + $0x1c8] sm:$0xff]
      %v1460 = vld [vmem:[%s887 + $0x1d0] sm:$0xff]
      %v1461 = vld [vmem:[%s887 + $0x1d8] sm:$0xff]
      %v1462 = vld [vmem:[%s887 + $0x1e0] sm:$0xff]
      %v1463 = vld [vmem:[%s887 + $0x1e8] sm:$0xff]
      %v1464 = vld [vmem:[%s887 + $0x1f0] sm:$0xff]
      %v1465 = vld [vmem:[%s887 + $0x1f8] sm:$0xff]
      %v1466 = vld [vmem:[%s887 + $0x200] sm:$0xff]
      %v1467 = vld [vmem:[%s887 + $0x208] sm:$0xff]
      %v1468 = vld [vmem:[%s887 + $0x210] sm:$0xff]
      %v1469 = vld [vmem:[%s887 + $0x218] sm:$0xff]
      %v1470 = vld [vmem:[%s887 + $0x220] sm:$0xff]
      %v1471 = vld [vmem:[%s887 + $0x228] sm:$0xff]
      %v1472 = vld [vmem:[%s887 + $0x230] sm:$0xff]
      %v1473 = vld [vmem:[%s887 + $0x238] sm:$0xff]
      %v1474 = vld [vmem:[%s887 + $0x240] sm:$0xff]
      %v1475 = vld [vmem:[%s887 + $0x248] sm:$0xff]
      %v1476 = vld [vmem:[%s887 + $0x250] sm:$0xff]
      %v1477 = vld [vmem:[%s887 + $0x258] sm:$0xff]
      %v1478 = vld [vmem:[%s887 + $0x260] sm:$0xff]
      %v1479 = vld [vmem:[%s887 + $0x268] sm:$0xff]
      %v1480 = vld [vmem:[%s887 + $0x270] sm:$0xff]
      %v1481 = vld [vmem:[%s887 + $0x278] sm:$0xff]
      %v1482 = vld [vmem:[%s887 + $0x280] sm:$0xff]
      %v1483 = vld [vmem:[%s887 + $0x288] sm:$0xff]
      %v1484 = vld [vmem:[%s887 + $0x290] sm:$0xff]
      %v1485 = vld [vmem:[%s887 + $0x298] sm:$0xff]
      %v1486 = vld [vmem:[%s887 + $0x2a0] sm:$0xff]
      %v1487 = vld [vmem:[%s887 + $0x2a8] sm:$0xff]
      %v1488 = vld [vmem:[%s887 + $0x2b0] sm:$0xff]
      %v1489 = vld [vmem:[%s887 + $0x2b8] sm:$0xff]
      %v1490 = vld [vmem:[%s887 + $0x2c0] sm:$0xff]
      %v1491 = vld [vmem:[%s887 + $0x2c8] sm:$0xff]
      %v1492 = vld [vmem:[%s887 + $0x2d0] sm:$0xff]
      %v1493 = vld [vmem:[%s887 + $0x2d8] sm:$0xff]
      %v1494 = vld [vmem:[%s887 + $0x2e0] sm:$0xff]
      %v1495 = vld [vmem:[%s887 + $0x2e8] sm:$0xff]
      %v1496 = vld [vmem:[%s887 + $0x2f0] sm:$0xff]
      %v1497 = vld [vmem:[%s887 + $0x2f8] sm:$0xff]
      %v1498 = vpack.c.bf16 %v1405, %v1402
      %v1499 = vpack.c.bf16 %v1406, %v1403
      %v1500 = vpack.c.bf16 %v1407, %v1404
      %v1501 = vpack.c.bf16 %v1411, %v1408
      %v1502 = vpack.c.bf16 %v1412, %v1409
      %v1503 = vpack.c.bf16 %v1413, %v1410
      %v1504 = vpack.c.bf16 %v1417, %v1414
      %v1505 = vpack.c.bf16 %v1418, %v1415
      %v1506 = vpack.c.bf16 %v1419, %v1416
      %v1507 = vpack.c.bf16 %v1423, %v1420
      %v1508 = vpack.c.bf16 %v1424, %v1421
      %v1509 = vpack.c.bf16 %v1425, %v1422
      %v1510 = vpack.c.bf16 %v1429, %v1426
      %v1511 = vpack.c.bf16 %v1430, %v1427
      %v1512 = vpack.c.bf16 %v1431, %v1428
      %v1513 = vpack.c.bf16 %v1435, %v1432
      %v1514 = vpack.c.bf16 %v1436, %v1433
      %v1515 = vpack.c.bf16 %v1437, %v1434
      %v1516 = vpack.c.bf16 %v1441, %v1438
      %v1517 = vpack.c.bf16 %v1442, %v1439
      %v1518 = vpack.c.bf16 %v1443, %v1440
      %v1519 = vpack.c.bf16 %v1447, %v1444
      %v1520 = vpack.c.bf16 %v1448, %v1445
      %v1521 = vpack.c.bf16 %v1449, %v1446
      %v1522 = vpack.c.bf16 %v1453, %v1450
      %v1523 = vpack.c.bf16 %v1454, %v1451
      %v1524 = vpack.c.bf16 %v1455, %v1452
      %v1525 = vpack.c.bf16 %v1459, %v1456
      %v1526 = vpack.c.bf16 %v1460, %v1457
      %v1527 = vpack.c.bf16 %v1461, %v1458
      %v1528 = vpack.c.bf16 %v1465, %v1462
      %v1529 = vpack.c.bf16 %v1466, %v1463
      %v1530 = vpack.c.bf16 %v1467, %v1464
      %v1531 = vpack.c.bf16 %v1471, %v1468
      %v1532 = vpack.c.bf16 %v1472, %v1469
      %v1533 = vpack.c.bf16 %v1473, %v1470
      %v1534 = vpack.c.bf16 %v1477, %v1474
      %v1535 = vpack.c.bf16 %v1478, %v1475
      %v1536 = vpack.c.bf16 %v1479, %v1476
      %v1537 = vpack.c.bf16 %v1483, %v1480
      %v1538 = vpack.c.bf16 %v1484, %v1481
      %v1539 = vpack.c.bf16 %v1485, %v1482
      %v1540 = vpack.c.bf16 %v1489, %v1486
      %v1541 = vpack.c.bf16 %v1490, %v1487
      %v1542 = vpack.c.bf16 %v1491, %v1488
      %v1543 = vpack.c.bf16 %v1495, %v1492
      %v1544 = vpack.c.bf16 %v1496, %v1493
      %v1545 = vpack.c.bf16 %v1497, %v1494
      %s1546 = scalar_lea.vmem %s3, 192
      %v1547 = vld [vmem:[%s1546] sm:$0xf]
      %v1548 = vld [vmem:[%s1546 + $0x4] sm:$0xf]
      %v1549 = vld [vmem:[%s1546 + $0x8] sm:$0xf]
      %v1550 = vld [vmem:[%s1546 + $0xc] sm:$0xf]
      %v1551 = vld [vmem:[%s1546 + $0x10] sm:$0xf]
      %v1552 = vld [vmem:[%s1546 + $0x14] sm:$0xf]
      %v1553 = vld [vmem:[%s1546 + $0x18] sm:$0xf]
      %v1554 = vld [vmem:[%s1546 + $0x1c] sm:$0xf]
      %v1555 = vld [vmem:[%s1546 + $0x20] sm:$0xf]
      %v1556 = vld [vmem:[%s1546 + $0x24] sm:$0xf]
      %v1557 = vld [vmem:[%s1546 + $0x28] sm:$0xf]
      %v1558 = vld [vmem:[%s1546 + $0x2c] sm:$0xf]
      %v1559 = vld [vmem:[%s1546 + $0x30] sm:$0xf]
      %v1560 = vld [vmem:[%s1546 + $0x34] sm:$0xf]
      %v1561 = vld [vmem:[%s1546 + $0x38] sm:$0xf]
      %v1562 = vld [vmem:[%s1546 + $0x3c] sm:$0xf]
      %v1563 = vld [vmem:[%s1546 + $0x40] sm:$0xf]
      %v1564 = vld [vmem:[%s1546 + $0x44] sm:$0xf]
      %v1565 = vld [vmem:[%s1546 + $0x48] sm:$0xf]
      %v1566 = vld [vmem:[%s1546 + $0x4c] sm:$0xf]
      %v1567 = vld [vmem:[%s1546 + $0x50] sm:$0xf]
      %v1568 = vld [vmem:[%s1546 + $0x54] sm:$0xf]
      %v1569 = vld [vmem:[%s1546 + $0x58] sm:$0xf]
      %v1570 = vld [vmem:[%s1546 + $0x5c] sm:$0xf]
      %v1571 = vld [vmem:[%s1546 + $0x60] sm:$0xf]
      %v1572 = vld [vmem:[%s1546 + $0x64] sm:$0xf]
      %v1573 = vld [vmem:[%s1546 + $0x68] sm:$0xf]
      %v1574 = vld [vmem:[%s1546 + $0x6c] sm:$0xf]
      %v1575 = vld [vmem:[%s1546 + $0x70] sm:$0xf]
      %v1576 = vld [vmem:[%s1546 + $0x74] sm:$0xf]
      %v1577 = vld [vmem:[%s1546 + $0x78] sm:$0xf]
      %v1578 = vld [vmem:[%s1546 + $0x7c] sm:$0xf]
      %v1579 = vld [vmem:[%s1546 + $0x80] sm:$0xf]
      %v1580 = vld [vmem:[%s1546 + $0x84] sm:$0xf]
      %v1581 = vld [vmem:[%s1546 + $0x88] sm:$0xf]
      %v1582 = vld [vmem:[%s1546 + $0x8c] sm:$0xf]
      %v1583 = vld [vmem:[%s1546 + $0x90] sm:$0xf]
      %v1584 = vld [vmem:[%s1546 + $0x94] sm:$0xf]
      %v1585 = vld [vmem:[%s1546 + $0x98] sm:$0xf]
      %v1586 = vld [vmem:[%s1546 + $0x9c] sm:$0xf]
      %v1587 = vld [vmem:[%s1546 + $0xa0] sm:$0xf]
      %v1588 = vld [vmem:[%s1546 + $0xa4] sm:$0xf]
      %v1589 = vld [vmem:[%s1546 + $0xa8] sm:$0xf]
      %v1590 = vld [vmem:[%s1546 + $0xac] sm:$0xf]
      %v1591 = vld [vmem:[%s1546 + $0xb0] sm:$0xf]
      %v1592 = vld [vmem:[%s1546 + $0xb4] sm:$0xf]
      %v1593 = vld [vmem:[%s1546 + $0xb8] sm:$0xf]
      %v1594 = vld [vmem:[%s1546 + $0xbc] sm:$0xf]
      %v1643 = vunpack.c.l.b16 %v1547
      %v1644 = vunpack.c.l.b16 %v1548
      %v1645 = vunpack.c.l.b16 %v1549
      %v1646 = vunpack.c.l.b16 %v1550
      %v1647 = vunpack.c.l.b16 %v1551
      %v1648 = vunpack.c.l.b16 %v1552
      %v1649 = vunpack.c.l.b16 %v1553
      %v1650 = vunpack.c.l.b16 %v1554
      %v1651 = vunpack.c.l.b16 %v1555
      %v1652 = vunpack.c.l.b16 %v1556
      %v1653 = vunpack.c.l.b16 %v1557
      %v1654 = vunpack.c.l.b16 %v1558
      %v1655 = vunpack.c.l.b16 %v1559
      %v1656 = vunpack.c.l.b16 %v1560
      %v1657 = vunpack.c.l.b16 %v1561
      %v1658 = vunpack.c.l.b16 %v1562
      %v1659 = vunpack.c.l.b16 %v1563
      %v1660 = vunpack.c.l.b16 %v1564
      %v1661 = vunpack.c.l.b16 %v1565
      %v1662 = vunpack.c.l.b16 %v1566
      %v1663 = vunpack.c.l.b16 %v1567
      %v1664 = vunpack.c.l.b16 %v1568
      %v1665 = vunpack.c.l.b16 %v1569
      %v1666 = vunpack.c.l.b16 %v1570
      %v1667 = vunpack.c.l.b16 %v1571
      %v1668 = vunpack.c.l.b16 %v1572
      %v1669 = vunpack.c.l.b16 %v1573
      %v1670 = vunpack.c.l.b16 %v1574
      %v1671 = vunpack.c.l.b16 %v1575
      %v1672 = vunpack.c.l.b16 %v1576
      %v1673 = vunpack.c.l.b16 %v1577
      %v1674 = vunpack.c.l.b16 %v1578
      %v1675 = vunpack.c.l.b16 %v1579
      %v1676 = vunpack.c.l.b16 %v1580
      %v1677 = vunpack.c.l.b16 %v1581
      %v1678 = vunpack.c.l.b16 %v1582
      %v1679 = vunpack.c.l.b16 %v1583
      %v1680 = vunpack.c.l.b16 %v1584
      %v1681 = vunpack.c.l.b16 %v1585
      %v1682 = vunpack.c.l.b16 %v1586
      %v1683 = vunpack.c.l.b16 %v1587
      %v1684 = vunpack.c.l.b16 %v1588
      %v1685 = vunpack.c.l.b16 %v1589
      %v1686 = vunpack.c.l.b16 %v1590
      %v1687 = vunpack.c.l.b16 %v1591
      %v1688 = vunpack.c.l.b16 %v1592
      %v1689 = vunpack.c.l.b16 %v1593
      %v1690 = vunpack.c.l.b16 %v1594
      %v1691 = vpack.c.b16 %v1644, %v1643
      %v1692 = vpack.c.b16 %v1646, %v1645
      %v1693 = vpack.c.b16 %v1648, %v1647
      %v1694 = vpack.c.b16 %v1650, %v1649
      %v1695 = vpack.c.b16 %v1652, %v1651
      %v1696 = vpack.c.b16 %v1654, %v1653
      %v1697 = vpack.c.b16 %v1656, %v1655
      %v1698 = vpack.c.b16 %v1658, %v1657
      %v1699 = vpack.c.b16 %v1660, %v1659
      %v1700 = vpack.c.b16 %v1662, %v1661
      %v1701 = vpack.c.b16 %v1664, %v1663
      %v1702 = vpack.c.b16 %v1666, %v1665
      %v1703 = vpack.c.b16 %v1668, %v1667
      %v1704 = vpack.c.b16 %v1670, %v1669
      %v1705 = vpack.c.b16 %v1672, %v1671
      %v1706 = vpack.c.b16 %v1674, %v1673
      %v1707 = vpack.c.b16 %v1676, %v1675
      %v1708 = vpack.c.b16 %v1678, %v1677
      %v1709 = vpack.c.b16 %v1680, %v1679
      %v1710 = vpack.c.b16 %v1682, %v1681
      %v1711 = vpack.c.b16 %v1684, %v1683
      %v1712 = vpack.c.b16 %v1686, %v1685
      %v1713 = vpack.c.b16 %v1688, %v1687
      %v1714 = vpack.c.b16 %v1690, %v1689
      %1739 = vmatprep.subr.bf16.mxu0 0
      %1740 = vmatpush1.bf16.msra.mxu0 %v1698
      %1741 = vmatprep.subr.bf16.mxu0 0
      %1742 = vmatpush1.bf16.msra.mxu0 %v1697
      %1743 = vmatprep.subr.bf16.mxu0 0
      %1744 = vmatpush1.bf16.msra.mxu0 %v1696
      %1745 = vmatprep.subr.bf16.mxu0 0
      %1746 = vmatpush1.bf16.msra.mxu0 %v1695
      %1747 = vmatprep.subr.bf16.mxu0 0
      %1748 = vmatpush1.bf16.msra.mxu0 %v1694
      %1749 = vmatprep.subr.bf16.mxu0 0
      %1750 = vmatpush1.bf16.msra.mxu0 %v1693
      %1751 = vmatprep.subr.bf16.mxu0 0
      %1752 = vmatpush1.bf16.msra.mxu0 %v1692
      %1753 = vmatprep.subr.bf16.mxu0 0
      %1754 = vmatpush1.bf16.msra.mxu0 %v1691
      %1755 = vmatprep.subr.bf16.mxu0 0
      %1756 = vmatpush2.bf16.msra.mxu0 %v1706
      %1757 = vmatprep.subr.bf16.mxu0 0
      %1758 = vmatpush2.bf16.msra.mxu0 %v1705
      %1759 = vmatprep.subr.bf16.mxu0 0
      %1760 = vmatpush2.bf16.msra.mxu0 %v1704
      %1761 = vmatprep.subr.bf16.mxu0 0
      %1762 = vmatpush2.bf16.msra.mxu0 %v1703
      %1763 = vmatprep.subr.bf16.mxu0 0
      %1764 = vmatpush2.bf16.msra.mxu0 %v1702
      %1765 = vmatprep.subr.bf16.mxu0 0
      %1766 = vmatpush2.bf16.msra.mxu0 %v1701
      %1767 = vmatprep.subr.bf16.mxu0 0
      %1768 = vmatpush2.bf16.msra.mxu0 %v1700
      %1769 = vmatprep.subr.bf16.mxu0 0
      %1770 = vmatpush2.bf16.msra.mxu0 %v1699
      %1771 = vmatprep.mubr.bf16.mxu0 %v1499
      %1772 = vmatmul.mubr.bf16.gmra.mxu0 %v1498
      %v1773 = vpop.f32.mrf.mxu0
      %v1774 = vadd.f32 0.0, %v1773
      %v1775 = vpop.f32.mrf.mxu0
      %v1776 = vpop.f32.mrf.mxu0
      %v1777 = vadd.f32 0.0, %v1776
      %v1778 = vpop.f32.mrf.mxu0
      %1779 = vmatprep.mubr.bf16.mxu0 %v1502
      %1780 = vmatmul.mubr.bf16.gmra.mxu0 %v1501
      %v1781 = vpop.f32.mrf.mxu0
      %v1782 = vadd.f32 0.0, %v1781
      %v1783 = vpop.f32.mrf.mxu0
      %v1784 = vpop.f32.mrf.mxu0
      %v1785 = vadd.f32 0.0, %v1784
      %v1786 = vpop.f32.mrf.mxu0
      %1787 = vmatprep.mubr.bf16.mxu0 %v1505
      %1788 = vmatmul.mubr.bf16.gmra.mxu0 %v1504
      %v1789 = vpop.f32.mrf.mxu0
      %v1790 = vadd.f32 0.0, %v1789
      %v1791 = vpop.f32.mrf.mxu0
      %v1792 = vpop.f32.mrf.mxu0
      %v1793 = vadd.f32 0.0, %v1792
      %v1794 = vpop.f32.mrf.mxu0
      %1795 = vmatprep.mubr.bf16.mxu0 %v1508
      %1796 = vmatmul.mubr.bf16.gmra.mxu0 %v1507
      %v1797 = vpop.f32.mrf.mxu0
      %v1798 = vadd.f32 0.0, %v1797
      %v1799 = vpop.f32.mrf.mxu0
      %v1800 = vpop.f32.mrf.mxu0
      %v1801 = vadd.f32 0.0, %v1800
      %v1802 = vpop.f32.mrf.mxu0
      %1803 = vmatprep.mubr.bf16.mxu0 %v1511
      %1804 = vmatmul.mubr.bf16.gmra.mxu0 %v1510
      %v1805 = vpop.f32.mrf.mxu0
      %v1806 = vadd.f32 0.0, %v1805
      %v1807 = vpop.f32.mrf.mxu0
      %v1808 = vpop.f32.mrf.mxu0
      %v1809 = vadd.f32 0.0, %v1808
      %v1810 = vpop.f32.mrf.mxu0
      %1811 = vmatprep.mubr.bf16.mxu0 %v1514
      %1812 = vmatmul.mubr.bf16.gmra.mxu0 %v1513
      %v1813 = vpop.f32.mrf.mxu0
      %v1814 = vadd.f32 0.0, %v1813
      %v1815 = vpop.f32.mrf.mxu0
      %v1816 = vpop.f32.mrf.mxu0
      %v1817 = vadd.f32 0.0, %v1816
      %v1818 = vpop.f32.mrf.mxu0
      %1819 = vmatprep.mubr.bf16.mxu0 %v1517
      %1820 = vmatmul.mubr.bf16.gmra.mxu0 %v1516
      %v1821 = vpop.f32.mrf.mxu0
      %v1822 = vadd.f32 0.0, %v1821
      %v1823 = vpop.f32.mrf.mxu0
      %v1824 = vpop.f32.mrf.mxu0
      %v1825 = vadd.f32 0.0, %v1824
      %v1826 = vpop.f32.mrf.mxu0
      %1827 = vmatprep.mubr.bf16.mxu0 %v1520
      %1828 = vmatmul.mubr.bf16.gmra.mxu0 %v1519
      %v1829 = vpop.f32.mrf.mxu0
      %v1830 = vadd.f32 0.0, %v1829
      %v1831 = vpop.f32.mrf.mxu0
      %v1832 = vpop.f32.mrf.mxu0
      %v1833 = vadd.f32 0.0, %v1832
      %v1834 = vpop.f32.mrf.mxu0
      %1835 = vmatprep.mubr.bf16.mxu0 %v1523
      %1836 = vmatmul.mubr.bf16.gmra.mxu0 %v1522
      %v1837 = vpop.f32.mrf.mxu0
      %v1838 = vadd.f32 0.0, %v1837
      %v1839 = vpop.f32.mrf.mxu0
      %v1840 = vpop.f32.mrf.mxu0
      %v1841 = vadd.f32 0.0, %v1840
      %v1842 = vpop.f32.mrf.mxu0
      %1843 = vmatprep.mubr.bf16.mxu0 %v1526
      %1844 = vmatmul.mubr.bf16.gmra.mxu0 %v1525
      %v1845 = vpop.f32.mrf.mxu0
      %v1846 = vadd.f32 0.0, %v1845
      %v1847 = vpop.f32.mrf.mxu0
      %v1848 = vpop.f32.mrf.mxu0
      %v1849 = vadd.f32 0.0, %v1848
      %v1850 = vpop.f32.mrf.mxu0
      %1851 = vmatprep.mubr.bf16.mxu0 %v1529
      %1852 = vmatmul.mubr.bf16.gmra.mxu0 %v1528
      %v1853 = vpop.f32.mrf.mxu0
      %v1854 = vadd.f32 0.0, %v1853
      %v1855 = vpop.f32.mrf.mxu0
      %v1856 = vpop.f32.mrf.mxu0
      %v1857 = vadd.f32 0.0, %v1856
      %v1858 = vpop.f32.mrf.mxu0
      %1859 = vmatprep.mubr.bf16.mxu0 %v1532
      %1860 = vmatmul.mubr.bf16.gmra.mxu0 %v1531
      %v1861 = vpop.f32.mrf.mxu0
      %v1862 = vadd.f32 0.0, %v1861
      %v1863 = vpop.f32.mrf.mxu0
      %v1864 = vpop.f32.mrf.mxu0
      %v1865 = vadd.f32 0.0, %v1864
      %v1866 = vpop.f32.mrf.mxu0
      %1867 = vmatprep.mubr.bf16.mxu0 %v1535
      %1868 = vmatmul.mubr.bf16.gmra.mxu0 %v1534
      %v1869 = vpop.f32.mrf.mxu0
      %v1870 = vadd.f32 0.0, %v1869
      %v1871 = vpop.f32.mrf.mxu0
      %v1872 = vpop.f32.mrf.mxu0
      %v1873 = vadd.f32 0.0, %v1872
      %v1874 = vpop.f32.mrf.mxu0
      %1875 = vmatprep.mubr.bf16.mxu0 %v1538
      %1876 = vmatmul.mubr.bf16.gmra.mxu0 %v1537
      %v1877 = vpop.f32.mrf.mxu0
      %v1878 = vadd.f32 0.0, %v1877
      %v1879 = vpop.f32.mrf.mxu0
      %v1880 = vpop.f32.mrf.mxu0
      %v1881 = vadd.f32 0.0, %v1880
      %v1882 = vpop.f32.mrf.mxu0
      %1883 = vmatprep.mubr.bf16.mxu0 %v1541
      %1884 = vmatmul.mubr.bf16.gmra.mxu0 %v1540
      %v1885 = vpop.f32.mrf.mxu0
      %v1886 = vadd.f32 0.0, %v1885
      %v1887 = vpop.f32.mrf.mxu0
      %v1888 = vpop.f32.mrf.mxu0
      %v1889 = vadd.f32 0.0, %v1888
      %v1890 = vpop.f32.mrf.mxu0
      %1891 = vmatprep.mubr.bf16.mxu0 %v1544
      %1892 = vmatmul.mubr.bf16.gmra.mxu0 %v1543
      %v1893 = vpop.f32.mrf.mxu0
      %v1894 = vadd.f32 0.0, %v1893
      %v1895 = vpop.f32.mrf.mxu0
      %v1896 = vpop.f32.mrf.mxu0
      %v1897 = vadd.f32 0.0, %v1896
      %v1898 = vpop.f32.mrf.mxu0
      %1899 = vdwg.mxu0
      %1900 = vmatprep.subr.bf16.mxu0 0
      %1901 = vmatpush1.bf16.msra.mxu0 %v1714
      %1902 = vmatprep.subr.bf16.mxu0 0
      %1903 = vmatpush1.bf16.msra.mxu0 %v1713
      %1904 = vmatprep.subr.bf16.mxu0 0
      %1905 = vmatpush1.bf16.msra.mxu0 %v1712
      %1906 = vmatprep.subr.bf16.mxu0 0
      %1907 = vmatpush1.bf16.msra.mxu0 %v1711
      %1908 = vmatprep.subr.bf16.mxu0 0
      %1909 = vmatpush1.bf16.msra.mxu0 %v1710
      %1910 = vmatprep.subr.bf16.mxu0 0
      %1911 = vmatpush1.bf16.msra.mxu0 %v1709
      %1912 = vmatprep.subr.bf16.mxu0 0
      %1913 = vmatpush1.bf16.msra.mxu0 %v1708
      %1914 = vmatprep.subr.bf16.mxu0 0
      %1915 = vmatpush1.bf16.msra.mxu0 %v1707
      %1916 = vmatprep.subr.bf16.mxu0 0
      %1917 = vmatpush2.bf16.msra.mxu0 0
      %1918 = vmatprep.subr.bf16.mxu0 0
      %1919 = vmatpush2.bf16.msra.mxu0 0
      %1920 = vmatprep.subr.bf16.mxu0 0
      %1921 = vmatpush2.bf16.msra.mxu0 0
      %1922 = vmatprep.subr.bf16.mxu0 0
      %1923 = vmatpush2.bf16.msra.mxu0 0
      %1924 = vmatprep.subr.bf16.mxu0 0
      %1925 = vmatpush2.bf16.msra.mxu0 0
      %1926 = vmatprep.subr.bf16.mxu0 0
      %1927 = vmatpush2.bf16.msra.mxu0 0
      %1928 = vmatprep.subr.bf16.mxu0 0
      %1929 = vmatpush2.bf16.msra.mxu0 0
      %1930 = vmatprep.subr.bf16.mxu0 0
      %1931 = vmatpush2.bf16.msra.mxu0 0
      %1932 = vmatprep.mubr.bf16.mxu0 0
      %1933 = vmatmul.mubr.bf16.gmra.mxu0 %v1500
      %v1934 = vpop.f32.mrf.mxu0
      %v1935 = vadd.f32 %v1774, %v1934
      %v1936 = vpop.f32.mrf.mxu0
      %v1937 = vpop.f32.mrf.mxu0
      %v1938 = vadd.f32 %v1777, %v1937
      %v1939 = vpop.f32.mrf.mxu0
      %1940 = vmatprep.mubr.bf16.mxu0 0
      %1941 = vmatmul.mubr.bf16.gmra.mxu0 %v1503
      %v1942 = vpop.f32.mrf.mxu0
      %v1943 = vadd.f32 %v1782, %v1942
      %v1944 = vpop.f32.mrf.mxu0
      %v1945 = vpop.f32.mrf.mxu0
      %v1946 = vadd.f32 %v1785, %v1945
      %v1947 = vpop.f32.mrf.mxu0
      %1948 = vmatprep.mubr.bf16.mxu0 0
      %1949 = vmatmul.mubr.bf16.gmra.mxu0 %v1506
      %v1950 = vpop.f32.mrf.mxu0
      %v1951 = vadd.f32 %v1790, %v1950
      %v1952 = vpop.f32.mrf.mxu0
      %v1953 = vpop.f32.mrf.mxu0
      %v1954 = vadd.f32 %v1793, %v1953
      %v1955 = vpop.f32.mrf.mxu0
      %1956 = vmatprep.mubr.bf16.mxu0 0
      %1957 = vmatmul.mubr.bf16.gmra.mxu0 %v1509
      %v1958 = vpop.f32.mrf.mxu0
      %v1959 = vadd.f32 %v1798, %v1958
      %v1960 = vpop.f32.mrf.mxu0
      %v1961 = vpop.f32.mrf.mxu0
      %v1962 = vadd.f32 %v1801, %v1961
      %v1963 = vpop.f32.mrf.mxu0
      %1964 = vmatprep.mubr.bf16.mxu0 0
      %1965 = vmatmul.mubr.bf16.gmra.mxu0 %v1512
      %v1966 = vpop.f32.mrf.mxu0
      %v1967 = vadd.f32 %v1806, %v1966
      %v1968 = vpop.f32.mrf.mxu0
      %v1969 = vpop.f32.mrf.mxu0
      %v1970 = vadd.f32 %v1809, %v1969
      %v1971 = vpop.f32.mrf.mxu0
      %1972 = vmatprep.mubr.bf16.mxu0 0
      %1973 = vmatmul.mubr.bf16.gmra.mxu0 %v1515
      %v1974 = vpop.f32.mrf.mxu0
      %v1975 = vadd.f32 %v1814, %v1974
      %v1976 = vpop.f32.mrf.mxu0
      %v1977 = vpop.f32.mrf.mxu0
      %v1978 = vadd.f32 %v1817, %v1977
      %v1979 = vpop.f32.mrf.mxu0
      %1980 = vmatprep.mubr.bf16.mxu0 0
      %1981 = vmatmul.mubr.bf16.gmra.mxu0 %v1518
      %v1982 = vpop.f32.mrf.mxu0
      %v1983 = vadd.f32 %v1822, %v1982
      %v1984 = vpop.f32.mrf.mxu0
      %v1985 = vpop.f32.mrf.mxu0
      %v1986 = vadd.f32 %v1825, %v1985
      %v1987 = vpop.f32.mrf.mxu0
      %1988 = vmatprep.mubr.bf16.mxu0 0
      %1989 = vmatmul.mubr.bf16.gmra.mxu0 %v1521
      %v1990 = vpop.f32.mrf.mxu0
      %v1991 = vadd.f32 %v1830, %v1990
      %v1992 = vpop.f32.mrf.mxu0
      %v1993 = vpop.f32.mrf.mxu0
      %v1994 = vadd.f32 %v1833, %v1993
      %v1995 = vpop.f32.mrf.mxu0
      %1996 = vmatprep.mubr.bf16.mxu0 0
      %1997 = vmatmul.mubr.bf16.gmra.mxu0 %v1524
      %v1998 = vpop.f32.mrf.mxu0
      %v1999 = vadd.f32 %v1838, %v1998
      %v2000 = vpop.f32.mrf.mxu0
      %v2001 = vpop.f32.mrf.mxu0
      %v2002 = vadd.f32 %v1841, %v2001
      %v2003 = vpop.f32.mrf.mxu0
      %2004 = vmatprep.mubr.bf16.mxu0 0
      %2005 = vmatmul.mubr.bf16.gmra.mxu0 %v1527
      %v2006 = vpop.f32.mrf.mxu0
      %v2007 = vadd.f32 %v1846, %v2006
      %v2008 = vpop.f32.mrf.mxu0
      %v2009 = vpop.f32.mrf.mxu0
      %v2010 = vadd.f32 %v1849, %v2009
      %v2011 = vpop.f32.mrf.mxu0
      %2012 = vmatprep.mubr.bf16.mxu0 0
      %2013 = vmatmul.mubr.bf16.gmra.mxu0 %v1530
      %v2014 = vpop.f32.mrf.mxu0
      %v2015 = vadd.f32 %v1854, %v2014
      %v2016 = vpop.f32.mrf.mxu0
      %v2017 = vpop.f32.mrf.mxu0
      %v2018 = vadd.f32 %v1857, %v2017
      %v2019 = vpop.f32.mrf.mxu0
      %2020 = vmatprep.mubr.bf16.mxu0 0
      %2021 = vmatmul.mubr.bf16.gmra.mxu0 %v1533
      %v2022 = vpop.f32.mrf.mxu0
      %v2023 = vadd.f32 %v1862, %v2022
      %v2024 = vpop.f32.mrf.mxu0
      %v2025 = vpop.f32.mrf.mxu0
      %v2026 = vadd.f32 %v1865, %v2025
      %v2027 = vpop.f32.mrf.mxu0
      %2028 = vmatprep.mubr.bf16.mxu0 0
      %2029 = vmatmul.mubr.bf16.gmra.mxu0 %v1536
      %v2030 = vpop.f32.mrf.mxu0
      %v2031 = vadd.f32 %v1870, %v2030
      %v2032 = vpop.f32.mrf.mxu0
      %v2033 = vpop.f32.mrf.mxu0
      %v2034 = vadd.f32 %v1873, %v2033
      %v2035 = vpop.f32.mrf.mxu0
      %2036 = vmatprep.mubr.bf16.mxu0 0
      %2037 = vmatmul.mubr.bf16.gmra.mxu0 %v1539
      %v2038 = vpop.f32.mrf.mxu0
      %v2039 = vadd.f32 %v1878, %v2038
      %v2040 = vpop.f32.mrf.mxu0
      %v2041 = vpop.f32.mrf.mxu0
      %v2042 = vadd.f32 %v1881, %v2041
      %v2043 = vpop.f32.mrf.mxu0
      %2044 = vmatprep.mubr.bf16.mxu0 0
      %2045 = vmatmul.mubr.bf16.gmra.mxu0 %v1542
      %v2046 = vpop.f32.mrf.mxu0
      %v2047 = vadd.f32 %v1886, %v2046
      %v2048 = vpop.f32.mrf.mxu0
      %v2049 = vpop.f32.mrf.mxu0
      %v2050 = vadd.f32 %v1889, %v2049
      %v2051 = vpop.f32.mrf.mxu0
      %2052 = vmatprep.mubr.bf16.mxu0 0
      %2053 = vmatmul.mubr.bf16.gmra.mxu0 %v1545
      %v2054 = vpop.f32.mrf.mxu0
      %v2055 = vadd.f32 %v1894, %v2054
      %v2056 = vpop.f32.mrf.mxu0
      %v2057 = vpop.f32.mrf.mxu0
      %v2058 = vadd.f32 %v1897, %v2057
      %v2059 = vpop.f32.mrf.mxu0
      %2060 = vdwg.mxu0
      %s2061 = scalar_lea.vmem [#allocation2], 96
      %v2062 = vld [vmem:[%s2061] sm:$0xff]
      %v2063 = vld [vmem:[%s2061 + $0x8] sm:$0xff]
      %v2064 = vld [vmem:[%s2061 + $0x10] sm:$0xff]
      %v2065 = vld [vmem:[%s2061 + $0x18] sm:$0xff]
      %v2066 = vld [vmem:[%s2061 + $0x20] sm:$0xff]
      %v2067 = vld [vmem:[%s2061 + $0x28] sm:$0xff]
      %v2068 = vld [vmem:[%s2061 + $0x30] sm:$0xff]
      %v2069 = vld [vmem:[%s2061 + $0x38] sm:$0xff]
      %v2070 = vld [vmem:[%s2061 + $0x40] sm:$0xff]
      %v2071 = vld [vmem:[%s2061 + $0x48] sm:$0xff]
      %v2072 = vld [vmem:[%s2061 + $0x50] sm:$0xff]
      %v2073 = vld [vmem:[%s2061 + $0x58] sm:$0xff]
      %v2074 = vld [vmem:[%s2061 + $0x60] sm:$0xff]
      %v2075 = vld [vmem:[%s2061 + $0x68] sm:$0xff]
      %v2076 = vld [vmem:[%s2061 + $0x70] sm:$0xff]
      %v2077 = vld [vmem:[%s2061 + $0x78] sm:$0xff]
      %v2078 = vld [vmem:[%s2061 + $0x80] sm:$0xff]
      %v2079 = vld [vmem:[%s2061 + $0x88] sm:$0xff]
      %v2080 = vld [vmem:[%s2061 + $0x90] sm:$0xff]
      %v2081 = vld [vmem:[%s2061 + $0x98] sm:$0xff]
      %v2082 = vld [vmem:[%s2061 + $0xa0] sm:$0xff]
      %v2083 = vld [vmem:[%s2061 + $0xa8] sm:$0xff]
      %v2084 = vld [vmem:[%s2061 + $0xb0] sm:$0xff]
      %v2085 = vld [vmem:[%s2061 + $0xb8] sm:$0xff]
      %v2086 = vld [vmem:[%s2061 + $0xc0] sm:$0xff]
      %v2087 = vld [vmem:[%s2061 + $0xc8] sm:$0xff]
      %v2088 = vld [vmem:[%s2061 + $0xd0] sm:$0xff]
      %v2089 = vld [vmem:[%s2061 + $0xd8] sm:$0xff]
      %v2090 = vld [vmem:[%s2061 + $0xe0] sm:$0xff]
      %v2091 = vld [vmem:[%s2061 + $0xe8] sm:$0xff]
      %v2092 = vld [vmem:[%s2061 + $0xf0] sm:$0xff]
      %v2093 = vld [vmem:[%s2061 + $0xf8] sm:$0xff]
      %v2094 = vld [vmem:[%s2061 + $0x100] sm:$0xff]
      %v2095 = vld [vmem:[%s2061 + $0x108] sm:$0xff]
      %v2096 = vld [vmem:[%s2061 + $0x110] sm:$0xff]
      %v2097 = vld [vmem:[%s2061 + $0x118] sm:$0xff]
      %v2098 = vld [vmem:[%s2061 + $0x120] sm:$0xff]
      %v2099 = vld [vmem:[%s2061 + $0x128] sm:$0xff]
      %v2100 = vld [vmem:[%s2061 + $0x130] sm:$0xff]
      %v2101 = vld [vmem:[%s2061 + $0x138] sm:$0xff]
      %v2102 = vld [vmem:[%s2061 + $0x140] sm:$0xff]
      %v2103 = vld [vmem:[%s2061 + $0x148] sm:$0xff]
      %v2104 = vld [vmem:[%s2061 + $0x150] sm:$0xff]
      %v2105 = vld [vmem:[%s2061 + $0x158] sm:$0xff]
      %v2106 = vld [vmem:[%s2061 + $0x160] sm:$0xff]
      %v2107 = vld [vmem:[%s2061 + $0x168] sm:$0xff]
      %v2108 = vld [vmem:[%s2061 + $0x170] sm:$0xff]
      %v2109 = vld [vmem:[%s2061 + $0x178] sm:$0xff]
      %v2110 = vld [vmem:[%s2061 + $0x180] sm:$0xff]
      %v2111 = vld [vmem:[%s2061 + $0x188] sm:$0xff]
      %v2112 = vld [vmem:[%s2061 + $0x190] sm:$0xff]
      %v2113 = vld [vmem:[%s2061 + $0x198] sm:$0xff]
      %v2114 = vld [vmem:[%s2061 + $0x1a0] sm:$0xff]
      %v2115 = vld [vmem:[%s2061 + $0x1a8] sm:$0xff]
      %v2116 = vld [vmem:[%s2061 + $0x1b0] sm:$0xff]
      %v2117 = vld [vmem:[%s2061 + $0x1b8] sm:$0xff]
      %v2118 = vld [vmem:[%s2061 + $0x1c0] sm:$0xff]
      %v2119 = vld [vmem:[%s2061 + $0x1c8] sm:$0xff]
      %v2120 = vld [vmem:[%s2061 + $0x1d0] sm:$0xff]
      %v2121 = vld [vmem:[%s2061 + $0x1d8] sm:$0xff]
      %v2122 = vld [vmem:[%s2061 + $0x1e0] sm:$0xff]
      %v2123 = vld [vmem:[%s2061 + $0x1e8] sm:$0xff]
      %v2124 = vld [vmem:[%s2061 + $0x1f0] sm:$0xff]
      %v2125 = vld [vmem:[%s2061 + $0x1f8] sm:$0xff]
      %v2126 = vld [vmem:[%s2061 + $0x200] sm:$0xff]
      %v2127 = vld [vmem:[%s2061 + $0x208] sm:$0xff]
      %v2128 = vld [vmem:[%s2061 + $0x210] sm:$0xff]
      %v2129 = vld [vmem:[%s2061 + $0x218] sm:$0xff]
      %v2130 = vld [vmem:[%s2061 + $0x220] sm:$0xff]
      %v2131 = vld [vmem:[%s2061 + $0x228] sm:$0xff]
      %v2132 = vld [vmem:[%s2061 + $0x230] sm:$0xff]
      %v2133 = vld [vmem:[%s2061 + $0x238] sm:$0xff]
      %v2134 = vld [vmem:[%s2061 + $0x240] sm:$0xff]
      %v2135 = vld [vmem:[%s2061 + $0x248] sm:$0xff]
      %v2136 = vld [vmem:[%s2061 + $0x250] sm:$0xff]
      %v2137 = vld [vmem:[%s2061 + $0x258] sm:$0xff]
      %v2138 = vld [vmem:[%s2061 + $0x260] sm:$0xff]
      %v2139 = vld [vmem:[%s2061 + $0x268] sm:$0xff]
      %v2140 = vld [vmem:[%s2061 + $0x270] sm:$0xff]
      %v2141 = vld [vmem:[%s2061 + $0x278] sm:$0xff]
      %v2142 = vld [vmem:[%s2061 + $0x280] sm:$0xff]
      %v2143 = vld [vmem:[%s2061 + $0x288] sm:$0xff]
      %v2144 = vld [vmem:[%s2061 + $0x290] sm:$0xff]
      %v2145 = vld [vmem:[%s2061 + $0x298] sm:$0xff]
      %v2146 = vld [vmem:[%s2061 + $0x2a0] sm:$0xff]
      %v2147 = vld [vmem:[%s2061 + $0x2a8] sm:$0xff]
      %v2148 = vld [vmem:[%s2061 + $0x2b0] sm:$0xff]
      %v2149 = vld [vmem:[%s2061 + $0x2b8] sm:$0xff]
      %v2150 = vld [vmem:[%s2061 + $0x2c0] sm:$0xff]
      %v2151 = vld [vmem:[%s2061 + $0x2c8] sm:$0xff]
      %v2152 = vld [vmem:[%s2061 + $0x2d0] sm:$0xff]
      %v2153 = vld [vmem:[%s2061 + $0x2d8] sm:$0xff]
      %v2154 = vld [vmem:[%s2061 + $0x2e0] sm:$0xff]
      %v2155 = vld [vmem:[%s2061 + $0x2e8] sm:$0xff]
      %v2156 = vld [vmem:[%s2061 + $0x2f0] sm:$0xff]
      %v2157 = vld [vmem:[%s2061 + $0x2f8] sm:$0xff]
      %v2158 = vpack.c.bf16 %v2065, %v2062
      %v2159 = vpack.c.bf16 %v2066, %v2063
      %v2160 = vpack.c.bf16 %v2067, %v2064
      %v2161 = vpack.c.bf16 %v2071, %v2068
      %v2162 = vpack.c.bf16 %v2072, %v2069
      %v2163 = vpack.c.bf16 %v2073, %v2070
      %v2164 = vpack.c.bf16 %v2077, %v2074
      %v2165 = vpack.c.bf16 %v2078, %v2075
      %v2166 = vpack.c.bf16 %v2079, %v2076
      %v2167 = vpack.c.bf16 %v2083, %v2080
      %v2168 = vpack.c.bf16 %v2084, %v2081
      %v2169 = vpack.c.bf16 %v2085, %v2082
      %v2170 = vpack.c.bf16 %v2089, %v2086
      %v2171 = vpack.c.bf16 %v2090, %v2087
      %v2172 = vpack.c.bf16 %v2091, %v2088
      %v2173 = vpack.c.bf16 %v2095, %v2092
      %v2174 = vpack.c.bf16 %v2096, %v2093
      %v2175 = vpack.c.bf16 %v2097, %v2094
      %v2176 = vpack.c.bf16 %v2101, %v2098
      %v2177 = vpack.c.bf16 %v2102, %v2099
      %v2178 = vpack.c.bf16 %v2103, %v2100
      %v2179 = vpack.c.bf16 %v2107, %v2104
      %v2180 = vpack.c.bf16 %v2108, %v2105
      %v2181 = vpack.c.bf16 %v2109, %v2106
      %v2182 = vpack.c.bf16 %v2113, %v2110
      %v2183 = vpack.c.bf16 %v2114, %v2111
      %v2184 = vpack.c.bf16 %v2115, %v2112
      %v2185 = vpack.c.bf16 %v2119, %v2116
      %v2186 = vpack.c.bf16 %v2120, %v2117
      %v2187 = vpack.c.bf16 %v2121, %v2118
      %v2188 = vpack.c.bf16 %v2125, %v2122
      %v2189 = vpack.c.bf16 %v2126, %v2123
      %v2190 = vpack.c.bf16 %v2127, %v2124
      %v2191 = vpack.c.bf16 %v2131, %v2128
      %v2192 = vpack.c.bf16 %v2132, %v2129
      %v2193 = vpack.c.bf16 %v2133, %v2130
      %v2194 = vpack.c.bf16 %v2137, %v2134
      %v2195 = vpack.c.bf16 %v2138, %v2135
      %v2196 = vpack.c.bf16 %v2139, %v2136
      %v2197 = vpack.c.bf16 %v2143, %v2140
      %v2198 = vpack.c.bf16 %v2144, %v2141
      %v2199 = vpack.c.bf16 %v2145, %v2142
      %v2200 = vpack.c.bf16 %v2149, %v2146
      %v2201 = vpack.c.bf16 %v2150, %v2147
      %v2202 = vpack.c.bf16 %v2151, %v2148
      %v2203 = vpack.c.bf16 %v2155, %v2152
      %v2204 = vpack.c.bf16 %v2156, %v2153
      %v2205 = vpack.c.bf16 %v2157, %v2154
      %s2206 = scalar_lea.vmem %s3, 384
      %v2207 = vld [vmem:[%s2206] sm:$0xf]
      %v2208 = vld [vmem:[%s2206 + $0x4] sm:$0xf]
      %v2209 = vld [vmem:[%s2206 + $0x8] sm:$0xf]
      %v2210 = vld [vmem:[%s2206 + $0xc] sm:$0xf]
      %v2211 = vld [vmem:[%s2206 + $0x10] sm:$0xf]
      %v2212 = vld [vmem:[%s2206 + $0x14] sm:$0xf]
      %v2213 = vld [vmem:[%s2206 + $0x18] sm:$0xf]
      %v2214 = vld [vmem:[%s2206 + $0x1c] sm:$0xf]
      %v2215 = vld [vmem:[%s2206 + $0x20] sm:$0xf]
      %v2216 = vld [vmem:[%s2206 + $0x24] sm:$0xf]
      %v2217 = vld [vmem:[%s2206 + $0x28] sm:$0xf]
      %v2218 = vld [vmem:[%s2206 + $0x2c] sm:$0xf]
      %v2219 = vld [vmem:[%s2206 + $0x30] sm:$0xf]
      %v2220 = vld [vmem:[%s2206 + $0x34] sm:$0xf]
      %v2221 = vld [vmem:[%s2206 + $0x38] sm:$0xf]
      %v2222 = vld [vmem:[%s2206 + $0x3c] sm:$0xf]
      %v2223 = vld [vmem:[%s2206 + $0x40] sm:$0xf]
      %v2224 = vld [vmem:[%s2206 + $0x44] sm:$0xf]
      %v2225 = vld [vmem:[%s2206 + $0x48] sm:$0xf]
      %v2226 = vld [vmem:[%s2206 + $0x4c] sm:$0xf]
      %v2227 = vld [vmem:[%s2206 + $0x50] sm:$0xf]
      %v2228 = vld [vmem:[%s2206 + $0x54] sm:$0xf]
      %v2229 = vld [vmem:[%s2206 + $0x58] sm:$0xf]
      %v2230 = vld [vmem:[%s2206 + $0x5c] sm:$0xf]
      %v2231 = vld [vmem:[%s2206 + $0x60] sm:$0xf]
      %v2232 = vld [vmem:[%s2206 + $0x64] sm:$0xf]
      %v2233 = vld [vmem:[%s2206 + $0x68] sm:$0xf]
      %v2234 = vld [vmem:[%s2206 + $0x6c] sm:$0xf]
      %v2235 = vld [vmem:[%s2206 + $0x70] sm:$0xf]
      %v2236 = vld [vmem:[%s2206 + $0x74] sm:$0xf]
      %v2237 = vld [vmem:[%s2206 + $0x78] sm:$0xf]
      %v2238 = vld [vmem:[%s2206 + $0x7c] sm:$0xf]
      %v2239 = vld [vmem:[%s2206 + $0x80] sm:$0xf]
      %v2240 = vld [vmem:[%s2206 + $0x84] sm:$0xf]
      %v2241 = vld [vmem:[%s2206 + $0x88] sm:$0xf]
      %v2242 = vld [vmem:[%s2206 + $0x8c] sm:$0xf]
      %v2243 = vld [vmem:[%s2206 + $0x90] sm:$0xf]
      %v2244 = vld [vmem:[%s2206 + $0x94] sm:$0xf]
      %v2245 = vld [vmem:[%s2206 + $0x98] sm:$0xf]
      %v2246 = vld [vmem:[%s2206 + $0x9c] sm:$0xf]
      %v2247 = vld [vmem:[%s2206 + $0xa0] sm:$0xf]
      %v2248 = vld [vmem:[%s2206 + $0xa4] sm:$0xf]
      %v2249 = vld [vmem:[%s2206 + $0xa8] sm:$0xf]
      %v2250 = vld [vmem:[%s2206 + $0xac] sm:$0xf]
      %v2251 = vld [vmem:[%s2206 + $0xb0] sm:$0xf]
      %v2252 = vld [vmem:[%s2206 + $0xb4] sm:$0xf]
      %v2253 = vld [vmem:[%s2206 + $0xb8] sm:$0xf]
      %v2254 = vld [vmem:[%s2206 + $0xbc] sm:$0xf]
      %v2303 = vunpack.c.l.b16 %v2207
      %v2304 = vunpack.c.l.b16 %v2208
      %v2305 = vunpack.c.l.b16 %v2209
      %v2306 = vunpack.c.l.b16 %v2210
      %v2307 = vunpack.c.l.b16 %v2211
      %v2308 = vunpack.c.l.b16 %v2212
      %v2309 = vunpack.c.l.b16 %v2213
      %v2310 = vunpack.c.l.b16 %v2214
      %v2311 = vunpack.c.l.b16 %v2215
      %v2312 = vunpack.c.l.b16 %v2216
      %v2313 = vunpack.c.l.b16 %v2217
      %v2314 = vunpack.c.l.b16 %v2218
      %v2315 = vunpack.c.l.b16 %v2219
      %v2316 = vunpack.c.l.b16 %v2220
      %v2317 = vunpack.c.l.b16 %v2221
      %v2318 = vunpack.c.l.b16 %v2222
      %v2319 = vunpack.c.l.b16 %v2223
      %v2320 = vunpack.c.l.b16 %v2224
      %v2321 = vunpack.c.l.b16 %v2225
      %v2322 = vunpack.c.l.b16 %v2226
      %v2323 = vunpack.c.l.b16 %v2227
      %v2324 = vunpack.c.l.b16 %v2228
      %v2325 = vunpack.c.l.b16 %v2229
      %v2326 = vunpack.c.l.b16 %v2230
      %v2327 = vunpack.c.l.b16 %v2231
      %v2328 = vunpack.c.l.b16 %v2232
      %v2329 = vunpack.c.l.b16 %v2233
      %v2330 = vunpack.c.l.b16 %v2234
      %v2331 = vunpack.c.l.b16 %v2235
      %v2332 = vunpack.c.l.b16 %v2236
      %v2333 = vunpack.c.l.b16 %v2237
      %v2334 = vunpack.c.l.b16 %v2238
      %v2335 = vunpack.c.l.b16 %v2239
      %v2336 = vunpack.c.l.b16 %v2240
      %v2337 = vunpack.c.l.b16 %v2241
      %v2338 = vunpack.c.l.b16 %v2242
      %v2339 = vunpack.c.l.b16 %v2243
      %v2340 = vunpack.c.l.b16 %v2244
      %v2341 = vunpack.c.l.b16 %v2245
      %v2342 = vunpack.c.l.b16 %v2246
      %v2343 = vunpack.c.l.b16 %v2247
      %v2344 = vunpack.c.l.b16 %v2248
      %v2345 = vunpack.c.l.b16 %v2249
      %v2346 = vunpack.c.l.b16 %v2250
      %v2347 = vunpack.c.l.b16 %v2251
      %v2348 = vunpack.c.l.b16 %v2252
      %v2349 = vunpack.c.l.b16 %v2253
      %v2350 = vunpack.c.l.b16 %v2254
      %v2351 = vpack.c.b16 %v2304, %v2303
      %v2352 = vpack.c.b16 %v2306, %v2305
      %v2353 = vpack.c.b16 %v2308, %v2307
      %v2354 = vpack.c.b16 %v2310, %v2309
      %v2355 = vpack.c.b16 %v2312, %v2311
      %v2356 = vpack.c.b16 %v2314, %v2313
      %v2357 = vpack.c.b16 %v2316, %v2315
      %v2358 = vpack.c.b16 %v2318, %v2317
      %v2359 = vpack.c.b16 %v2320, %v2319
      %v2360 = vpack.c.b16 %v2322, %v2321
      %v2361 = vpack.c.b16 %v2324, %v2323
      %v2362 = vpack.c.b16 %v2326, %v2325
      %v2363 = vpack.c.b16 %v2328, %v2327
      %v2364 = vpack.c.b16 %v2330, %v2329
      %v2365 = vpack.c.b16 %v2332, %v2331
      %v2366 = vpack.c.b16 %v2334, %v2333
      %v2367 = vpack.c.b16 %v2336, %v2335
      %v2368 = vpack.c.b16 %v2338, %v2337
      %v2369 = vpack.c.b16 %v2340, %v2339
      %v2370 = vpack.c.b16 %v2342, %v2341
      %v2371 = vpack.c.b16 %v2344, %v2343
      %v2372 = vpack.c.b16 %v2346, %v2345
      %v2373 = vpack.c.b16 %v2348, %v2347
      %v2374 = vpack.c.b16 %v2350, %v2349
      %2399 = vmatprep.subr.bf16.mxu0 0
      %2400 = vmatpush1.bf16.msra.mxu0 %v2358
      %2401 = vmatprep.subr.bf16.mxu0 0
      %2402 = vmatpush1.bf16.msra.mxu0 %v2357
      %2403 = vmatprep.subr.bf16.mxu0 0
      %2404 = vmatpush1.bf16.msra.mxu0 %v2356
      %2405 = vmatprep.subr.bf16.mxu0 0
      %2406 = vmatpush1.bf16.msra.mxu0 %v2355
      %2407 = vmatprep.subr.bf16.mxu0 0
      %2408 = vmatpush1.bf16.msra.mxu0 %v2354
      %2409 = vmatprep.subr.bf16.mxu0 0
      %2410 = vmatpush1.bf16.msra.mxu0 %v2353
      %2411 = vmatprep.subr.bf16.mxu0 0
      %2412 = vmatpush1.bf16.msra.mxu0 %v2352
      %2413 = vmatprep.subr.bf16.mxu0 0
      %2414 = vmatpush1.bf16.msra.mxu0 %v2351
      %2415 = vmatprep.subr.bf16.mxu0 0
      %2416 = vmatpush2.bf16.msra.mxu0 %v2366
      %2417 = vmatprep.subr.bf16.mxu0 0
      %2418 = vmatpush2.bf16.msra.mxu0 %v2365
      %2419 = vmatprep.subr.bf16.mxu0 0
      %2420 = vmatpush2.bf16.msra.mxu0 %v2364
      %2421 = vmatprep.subr.bf16.mxu0 0
      %2422 = vmatpush2.bf16.msra.mxu0 %v2363
      %2423 = vmatprep.subr.bf16.mxu0 0
      %2424 = vmatpush2.bf16.msra.mxu0 %v2362
      %2425 = vmatprep.subr.bf16.mxu0 0
      %2426 = vmatpush2.bf16.msra.mxu0 %v2361
      %2427 = vmatprep.subr.bf16.mxu0 0
      %2428 = vmatpush2.bf16.msra.mxu0 %v2360
      %2429 = vmatprep.subr.bf16.mxu0 0
      %2430 = vmatpush2.bf16.msra.mxu0 %v2359
      %2431 = vmatprep.mubr.bf16.mxu0 %v2159
      %2432 = vmatmul.mubr.bf16.gmra.mxu0 %v2158
      %v2433 = vpop.f32.mrf.mxu0
      %v2434 = vadd.f32 0.0, %v2433
      %v2435 = vpop.f32.mrf.mxu0
      %v2436 = vpop.f32.mrf.mxu0
      %v2437 = vadd.f32 0.0, %v2436
      %v2438 = vpop.f32.mrf.mxu0
      %2439 = vmatprep.mubr.bf16.mxu0 %v2162
      %2440 = vmatmul.mubr.bf16.gmra.mxu0 %v2161
      %v2441 = vpop.f32.mrf.mxu0
      %v2442 = vadd.f32 0.0, %v2441
      %v2443 = vpop.f32.mrf.mxu0
      %v2444 = vpop.f32.mrf.mxu0
      %v2445 = vadd.f32 0.0, %v2444
      %v2446 = vpop.f32.mrf.mxu0
      %2447 = vmatprep.mubr.bf16.mxu0 %v2165
      %2448 = vmatmul.mubr.bf16.gmra.mxu0 %v2164
      %v2449 = vpop.f32.mrf.mxu0
      %v2450 = vadd.f32 0.0, %v2449
      %v2451 = vpop.f32.mrf.mxu0
      %v2452 = vpop.f32.mrf.mxu0
      %v2453 = vadd.f32 0.0, %v2452
      %v2454 = vpop.f32.mrf.mxu0
      %2455 = vmatprep.mubr.bf16.mxu0 %v2168
      %2456 = vmatmul.mubr.bf16.gmra.mxu0 %v2167
      %v2457 = vpop.f32.mrf.mxu0
      %v2458 = vadd.f32 0.0, %v2457
      %v2459 = vpop.f32.mrf.mxu0
      %v2460 = vpop.f32.mrf.mxu0
      %v2461 = vadd.f32 0.0, %v2460
      %v2462 = vpop.f32.mrf.mxu0
      %2463 = vmatprep.mubr.bf16.mxu0 %v2171
      %2464 = vmatmul.mubr.bf16.gmra.mxu0 %v2170
      %v2465 = vpop.f32.mrf.mxu0
      %v2466 = vadd.f32 0.0, %v2465
      %v2467 = vpop.f32.mrf.mxu0
      %v2468 = vpop.f32.mrf.mxu0
      %v2469 = vadd.f32 0.0, %v2468
      %v2470 = vpop.f32.mrf.mxu0
      %2471 = vmatprep.mubr.bf16.mxu0 %v2174
      %2472 = vmatmul.mubr.bf16.gmra.mxu0 %v2173
      %v2473 = vpop.f32.mrf.mxu0
      %v2474 = vadd.f32 0.0, %v2473
      %v2475 = vpop.f32.mrf.mxu0
      %v2476 = vpop.f32.mrf.mxu0
      %v2477 = vadd.f32 0.0, %v2476
      %v2478 = vpop.f32.mrf.mxu0
      %2479 = vmatprep.mubr.bf16.mxu0 %v2177
      %2480 = vmatmul.mubr.bf16.gmra.mxu0 %v2176
      %v2481 = vpop.f32.mrf.mxu0
      %v2482 = vadd.f32 0.0, %v2481
      %v2483 = vpop.f32.mrf.mxu0
      %v2484 = vpop.f32.mrf.mxu0
      %v2485 = vadd.f32 0.0, %v2484
      %v2486 = vpop.f32.mrf.mxu0
      %2487 = vmatprep.mubr.bf16.mxu0 %v2180
      %2488 = vmatmul.mubr.bf16.gmra.mxu0 %v2179
      %v2489 = vpop.f32.mrf.mxu0
      %v2490 = vadd.f32 0.0, %v2489
      %v2491 = vpop.f32.mrf.mxu0
      %v2492 = vpop.f32.mrf.mxu0
      %v2493 = vadd.f32 0.0, %v2492
      %v2494 = vpop.f32.mrf.mxu0
      %2495 = vmatprep.mubr.bf16.mxu0 %v2183
      %2496 = vmatmul.mubr.bf16.gmra.mxu0 %v2182
      %v2497 = vpop.f32.mrf.mxu0
      %v2498 = vadd.f32 0.0, %v2497
      %v2499 = vpop.f32.mrf.mxu0
      %v2500 = vpop.f32.mrf.mxu0
      %v2501 = vadd.f32 0.0, %v2500
      %v2502 = vpop.f32.mrf.mxu0
      %2503 = vmatprep.mubr.bf16.mxu0 %v2186
      %2504 = vmatmul.mubr.bf16.gmra.mxu0 %v2185
      %v2505 = vpop.f32.mrf.mxu0
      %v2506 = vadd.f32 0.0, %v2505
      %v2507 = vpop.f32.mrf.mxu0
      %v2508 = vpop.f32.mrf.mxu0
      %v2509 = vadd.f32 0.0, %v2508
      %v2510 = vpop.f32.mrf.mxu0
      %2511 = vmatprep.mubr.bf16.mxu0 %v2189
      %2512 = vmatmul.mubr.bf16.gmra.mxu0 %v2188
      %v2513 = vpop.f32.mrf.mxu0
      %v2514 = vadd.f32 0.0, %v2513
      %v2515 = vpop.f32.mrf.mxu0
      %v2516 = vpop.f32.mrf.mxu0
      %v2517 = vadd.f32 0.0, %v2516
      %v2518 = vpop.f32.mrf.mxu0
      %2519 = vmatprep.mubr.bf16.mxu0 %v2192
      %2520 = vmatmul.mubr.bf16.gmra.mxu0 %v2191
      %v2521 = vpop.f32.mrf.mxu0
      %v2522 = vadd.f32 0.0, %v2521
      %v2523 = vpop.f32.mrf.mxu0
      %v2524 = vpop.f32.mrf.mxu0
      %v2525 = vadd.f32 0.0, %v2524
      %v2526 = vpop.f32.mrf.mxu0
      %2527 = vmatprep.mubr.bf16.mxu0 %v2195
      %2528 = vmatmul.mubr.bf16.gmra.mxu0 %v2194
      %v2529 = vpop.f32.mrf.mxu0
      %v2530 = vadd.f32 0.0, %v2529
      %v2531 = vpop.f32.mrf.mxu0
      %v2532 = vpop.f32.mrf.mxu0
      %v2533 = vadd.f32 0.0, %v2532
      %v2534 = vpop.f32.mrf.mxu0
      %2535 = vmatprep.mubr.bf16.mxu0 %v2198
      %2536 = vmatmul.mubr.bf16.gmra.mxu0 %v2197
      %v2537 = vpop.f32.mrf.mxu0
      %v2538 = vadd.f32 0.0, %v2537
      %v2539 = vpop.f32.mrf.mxu0
      %v2540 = vpop.f32.mrf.mxu0
      %v2541 = vadd.f32 0.0, %v2540
      %v2542 = vpop.f32.mrf.mxu0
      %2543 = vmatprep.mubr.bf16.mxu0 %v2201
      %2544 = vmatmul.mubr.bf16.gmra.mxu0 %v2200
      %v2545 = vpop.f32.mrf.mxu0
      %v2546 = vadd.f32 0.0, %v2545
      %v2547 = vpop.f32.mrf.mxu0
      %v2548 = vpop.f32.mrf.mxu0
      %v2549 = vadd.f32 0.0, %v2548
      %v2550 = vpop.f32.mrf.mxu0
      %2551 = vmatprep.mubr.bf16.mxu0 %v2204
      %2552 = vmatmul.mubr.bf16.gmra.mxu0 %v2203
      %v2553 = vpop.f32.mrf.mxu0
      %v2554 = vadd.f32 0.0, %v2553
      %v2555 = vpop.f32.mrf.mxu0
      %v2556 = vpop.f32.mrf.mxu0
      %v2557 = vadd.f32 0.0, %v2556
      %v2558 = vpop.f32.mrf.mxu0
      %2559 = vdwg.mxu0
      %2560 = vmatprep.subr.bf16.mxu0 0
      %2561 = vmatpush1.bf16.msra.mxu0 %v2374
      %2562 = vmatprep.subr.bf16.mxu0 0
      %2563 = vmatpush1.bf16.msra.mxu0 %v2373
      %2564 = vmatprep.subr.bf16.mxu0 0
      %2565 = vmatpush1.bf16.msra.mxu0 %v2372
      %2566 = vmatprep.subr.bf16.mxu0 0
      %2567 = vmatpush1.bf16.msra.mxu0 %v2371
      %2568 = vmatprep.subr.bf16.mxu0 0
      %2569 = vmatpush1.bf16.msra.mxu0 %v2370
      %2570 = vmatprep.subr.bf16.mxu0 0
      %2571 = vmatpush1.bf16.msra.mxu0 %v2369
      %2572 = vmatprep.subr.bf16.mxu0 0
      %2573 = vmatpush1.bf16.msra.mxu0 %v2368
      %2574 = vmatprep.subr.bf16.mxu0 0
      %2575 = vmatpush1.bf16.msra.mxu0 %v2367
      %2576 = vmatprep.subr.bf16.mxu0 0
      %2577 = vmatpush2.bf16.msra.mxu0 0
      %2578 = vmatprep.subr.bf16.mxu0 0
      %2579 = vmatpush2.bf16.msra.mxu0 0
      %2580 = vmatprep.subr.bf16.mxu0 0
      %2581 = vmatpush2.bf16.msra.mxu0 0
      %2582 = vmatprep.subr.bf16.mxu0 0
      %2583 = vmatpush2.bf16.msra.mxu0 0
      %2584 = vmatprep.subr.bf16.mxu0 0
      %2585 = vmatpush2.bf16.msra.mxu0 0
      %2586 = vmatprep.subr.bf16.mxu0 0
      %2587 = vmatpush2.bf16.msra.mxu0 0
      %2588 = vmatprep.subr.bf16.mxu0 0
      %2589 = vmatpush2.bf16.msra.mxu0 0
      %2590 = vmatprep.subr.bf16.mxu0 0
      %2591 = vmatpush2.bf16.msra.mxu0 0
      %2592 = vmatprep.mubr.bf16.mxu0 0
      %2593 = vmatmul.mubr.bf16.gmra.mxu0 %v2160
      %v2594 = vpop.f32.mrf.mxu0
      %v2595 = vadd.f32 %v2434, %v2594
      %v2596 = vpop.f32.mrf.mxu0
      %v2597 = vpop.f32.mrf.mxu0
      %v2598 = vadd.f32 %v2437, %v2597
      %v2599 = vpop.f32.mrf.mxu0
      %2600 = vmatprep.mubr.bf16.mxu0 0
      %2601 = vmatmul.mubr.bf16.gmra.mxu0 %v2163
      %v2602 = vpop.f32.mrf.mxu0
      %v2603 = vadd.f32 %v2442, %v2602
      %v2604 = vpop.f32.mrf.mxu0
      %v2605 = vpop.f32.mrf.mxu0
      %v2606 = vadd.f32 %v2445, %v2605
      %v2607 = vpop.f32.mrf.mxu0
      %2608 = vmatprep.mubr.bf16.mxu0 0
      %2609 = vmatmul.mubr.bf16.gmra.mxu0 %v2166
      %v2610 = vpop.f32.mrf.mxu0
      %v2611 = vadd.f32 %v2450, %v2610
      %v2612 = vpop.f32.mrf.mxu0
      %v2613 = vpop.f32.mrf.mxu0
      %v2614 = vadd.f32 %v2453, %v2613
      %v2615 = vpop.f32.mrf.mxu0
      %2616 = vmatprep.mubr.bf16.mxu0 0
      %2617 = vmatmul.mubr.bf16.gmra.mxu0 %v2169
      %v2618 = vpop.f32.mrf.mxu0
      %v2619 = vadd.f32 %v2458, %v2618
      %v2620 = vpop.f32.mrf.mxu0
      %v2621 = vpop.f32.mrf.mxu0
      %v2622 = vadd.f32 %v2461, %v2621
      %v2623 = vpop.f32.mrf.mxu0
      %2624 = vmatprep.mubr.bf16.mxu0 0
      %2625 = vmatmul.mubr.bf16.gmra.mxu0 %v2172
      %v2626 = vpop.f32.mrf.mxu0
      %v2627 = vadd.f32 %v2466, %v2626
      %v2628 = vpop.f32.mrf.mxu0
      %v2629 = vpop.f32.mrf.mxu0
      %v2630 = vadd.f32 %v2469, %v2629
      %v2631 = vpop.f32.mrf.mxu0
      %2632 = vmatprep.mubr.bf16.mxu0 0
      %2633 = vmatmul.mubr.bf16.gmra.mxu0 %v2175
      %v2634 = vpop.f32.mrf.mxu0
      %v2635 = vadd.f32 %v2474, %v2634
      %v2636 = vpop.f32.mrf.mxu0
      %v2637 = vpop.f32.mrf.mxu0
      %v2638 = vadd.f32 %v2477, %v2637
      %v2639 = vpop.f32.mrf.mxu0
      %2640 = vmatprep.mubr.bf16.mxu0 0
      %2641 = vmatmul.mubr.bf16.gmra.mxu0 %v2178
      %v2642 = vpop.f32.mrf.mxu0
      %v2643 = vadd.f32 %v2482, %v2642
      %v2644 = vpop.f32.mrf.mxu0
      %v2645 = vpop.f32.mrf.mxu0
      %v2646 = vadd.f32 %v2485, %v2645
      %v2647 = vpop.f32.mrf.mxu0
      %2648 = vmatprep.mubr.bf16.mxu0 0
      %2649 = vmatmul.mubr.bf16.gmra.mxu0 %v2181
      %v2650 = vpop.f32.mrf.mxu0
      %v2651 = vadd.f32 %v2490, %v2650
      %v2652 = vpop.f32.mrf.mxu0
      %v2653 = vpop.f32.mrf.mxu0
      %v2654 = vadd.f32 %v2493, %v2653
      %v2655 = vpop.f32.mrf.mxu0
      %2656 = vmatprep.mubr.bf16.mxu0 0
      %2657 = vmatmul.mubr.bf16.gmra.mxu0 %v2184
      %v2658 = vpop.f32.mrf.mxu0
      %v2659 = vadd.f32 %v2498, %v2658
      %v2660 = vpop.f32.mrf.mxu0
      %v2661 = vpop.f32.mrf.mxu0
      %v2662 = vadd.f32 %v2501, %v2661
      %v2663 = vpop.f32.mrf.mxu0
      %2664 = vmatprep.mubr.bf16.mxu0 0
      %2665 = vmatmul.mubr.bf16.gmra.mxu0 %v2187
      %v2666 = vpop.f32.mrf.mxu0
      %v2667 = vadd.f32 %v2506, %v2666
      %v2668 = vpop.f32.mrf.mxu0
      %v2669 = vpop.f32.mrf.mxu0
      %v2670 = vadd.f32 %v2509, %v2669
      %v2671 = vpop.f32.mrf.mxu0
      %2672 = vmatprep.mubr.bf16.mxu0 0
      %2673 = vmatmul.mubr.bf16.gmra.mxu0 %v2190
      %v2674 = vpop.f32.mrf.mxu0
      %v2675 = vadd.f32 %v2514, %v2674
      %v2676 = vpop.f32.mrf.mxu0
      %v2677 = vpop.f32.mrf.mxu0
      %v2678 = vadd.f32 %v2517, %v2677
      %v2679 = vpop.f32.mrf.mxu0
      %2680 = vmatprep.mubr.bf16.mxu0 0
      %2681 = vmatmul.mubr.bf16.gmra.mxu0 %v2193
      %v2682 = vpop.f32.mrf.mxu0
      %v2683 = vadd.f32 %v2522, %v2682
      %v2684 = vpop.f32.mrf.mxu0
      %v2685 = vpop.f32.mrf.mxu0
      %v2686 = vadd.f32 %v2525, %v2685
      %v2687 = vpop.f32.mrf.mxu0
      %2688 = vmatprep.mubr.bf16.mxu0 0
      %2689 = vmatmul.mubr.bf16.gmra.mxu0 %v2196
      %v2690 = vpop.f32.mrf.mxu0
      %v2691 = vadd.f32 %v2530, %v2690
      %v2692 = vpop.f32.mrf.mxu0
      %v2693 = vpop.f32.mrf.mxu0
      %v2694 = vadd.f32 %v2533, %v2693
      %v2695 = vpop.f32.mrf.mxu0
      %2696 = vmatprep.mubr.bf16.mxu0 0
      %2697 = vmatmul.mubr.bf16.gmra.mxu0 %v2199
      %v2698 = vpop.f32.mrf.mxu0
      %v2699 = vadd.f32 %v2538, %v2698
      %v2700 = vpop.f32.mrf.mxu0
      %v2701 = vpop.f32.mrf.mxu0
      %v2702 = vadd.f32 %v2541, %v2701
      %v2703 = vpop.f32.mrf.mxu0
      %2704 = vmatprep.mubr.bf16.mxu0 0
      %2705 = vmatmul.mubr.bf16.gmra.mxu0 %v2202
      %v2706 = vpop.f32.mrf.mxu0
      %v2707 = vadd.f32 %v2546, %v2706
      %v2708 = vpop.f32.mrf.mxu0
      %v2709 = vpop.f32.mrf.mxu0
      %v2710 = vadd.f32 %v2549, %v2709
      %v2711 = vpop.f32.mrf.mxu0
      %2712 = vmatprep.mubr.bf16.mxu0 0
      %2713 = vmatmul.mubr.bf16.gmra.mxu0 %v2205
      %v2714 = vpop.f32.mrf.mxu0
      %v2715 = vadd.f32 %v2554, %v2714
      %v2716 = vpop.f32.mrf.mxu0
      %v2717 = vpop.f32.mrf.mxu0
      %v2718 = vadd.f32 %v2557, %v2717
      %v2719 = vpop.f32.mrf.mxu0
      %2720 = vdwg.mxu0
      %v2769 = vunpack.c.l.b16 %v1354
      %v2770 = vunpack.c.l.b16 %v1355
      %v2771 = vunpack.c.l.b16 %v1356
      %v2772 = vunpack.c.l.b16 %v1357
      %v2773 = vunpack.c.l.b16 %v1358
      %v2774 = vunpack.c.l.b16 %v1359
      %v2775 = vunpack.c.l.b16 %v1360
      %v2776 = vunpack.c.l.b16 %v1361
      %v2777 = vunpack.c.l.b16 %v1362
      %v2778 = vunpack.c.l.b16 %v1363
      %v2779 = vunpack.c.l.b16 %v1364
      %v2780 = vunpack.c.l.b16 %v1365
      %v2781 = vunpack.c.l.b16 %v1366
      %v2782 = vunpack.c.l.b16 %v1367
      %v2783 = vunpack.c.l.b16 %v1368
      %v2784 = vunpack.c.l.b16 %v1369
      %v2785 = vunpack.c.l.b16 %v1370
      %v2786 = vunpack.c.l.b16 %v1371
      %v2787 = vunpack.c.l.b16 %v1372
      %v2788 = vunpack.c.l.b16 %v1373
      %v2789 = vunpack.c.l.b16 %v1374
      %v2790 = vunpack.c.l.b16 %v1375
      %v2791 = vunpack.c.l.b16 %v1376
      %v2792 = vunpack.c.l.b16 %v1377
      %v2793 = vunpack.c.l.b16 %v1378
      %v2794 = vunpack.c.l.b16 %v1379
      %v2795 = vunpack.c.l.b16 %v1380
      %v2796 = vunpack.c.l.b16 %v1381
      %v2797 = vunpack.c.l.b16 %v1382
      %v2798 = vunpack.c.l.b16 %v1383
      %v2799 = vunpack.c.l.b16 %v1384
      %v2800 = vunpack.c.l.b16 %v1385
      %v2801 = vunpack.c.l.b16 %v1386
      %v2802 = vunpack.c.l.b16 %v1387
      %v2803 = vunpack.c.l.b16 %v1388
      %v2804 = vunpack.c.l.b16 %v1389
      %v2805 = vunpack.c.l.b16 %v1390
      %v2806 = vunpack.c.l.b16 %v1391
      %v2807 = vunpack.c.l.b16 %v1392
      %v2808 = vunpack.c.l.b16 %v1393
      %v2809 = vunpack.c.l.b16 %v1394
      %v2810 = vunpack.c.l.b16 %v1395
      %v2811 = vunpack.c.l.b16 %v1396
      %v2812 = vunpack.c.l.b16 %v1397
      %v2813 = vunpack.c.l.b16 %v1398
      %v2814 = vunpack.c.l.b16 %v1399
      %v2815 = vunpack.c.l.b16 %v1400
      %v2816 = vunpack.c.l.b16 %v1401
      %v2817 = vpack.c.b16 %v2770, %v2769
      %v2818 = vpack.c.b16 %v2772, %v2771
      %v2819 = vpack.c.b16 %v2774, %v2773
      %v2820 = vpack.c.b16 %v2776, %v2775
      %v2821 = vpack.c.b16 %v2778, %v2777
      %v2822 = vpack.c.b16 %v2780, %v2779
      %v2823 = vpack.c.b16 %v2782, %v2781
      %v2824 = vpack.c.b16 %v2784, %v2783
      %v2825 = vpack.c.b16 %v2786, %v2785
      %v2826 = vpack.c.b16 %v2788, %v2787
      %v2827 = vpack.c.b16 %v2790, %v2789
      %v2828 = vpack.c.b16 %v2792, %v2791
      %v2829 = vpack.c.b16 %v2794, %v2793
      %v2830 = vpack.c.b16 %v2796, %v2795
      %v2831 = vpack.c.b16 %v2798, %v2797
      %v2832 = vpack.c.b16 %v2800, %v2799
      %v2833 = vpack.c.b16 %v2802, %v2801
      %v2834 = vpack.c.b16 %v2804, %v2803
      %v2835 = vpack.c.b16 %v2806, %v2805
      %v2836 = vpack.c.b16 %v2808, %v2807
      %v2837 = vpack.c.b16 %v2810, %v2809
      %v2838 = vpack.c.b16 %v2812, %v2811
      %v2839 = vpack.c.b16 %v2814, %v2813
      %v2840 = vpack.c.b16 %v2816, %v2815
      %2865 = vmatprep.subr.bf16.mxu0 0
      %2866 = vmatpush1.bf16.msra.mxu0 %v2824
      %2867 = vmatprep.subr.bf16.mxu0 0
      %2868 = vmatpush1.bf16.msra.mxu0 %v2823
      %2869 = vmatprep.subr.bf16.mxu0 0
      %2870 = vmatpush1.bf16.msra.mxu0 %v2822
      %2871 = vmatprep.subr.bf16.mxu0 0
      %2872 = vmatpush1.bf16.msra.mxu0 %v2821
      %2873 = vmatprep.subr.bf16.mxu0 0
      %2874 = vmatpush1.bf16.msra.mxu0 %v2820
      %2875 = vmatprep.subr.bf16.mxu0 0
      %2876 = vmatpush1.bf16.msra.mxu0 %v2819
      %2877 = vmatprep.subr.bf16.mxu0 0
      %2878 = vmatpush1.bf16.msra.mxu0 %v2818
      %2879 = vmatprep.subr.bf16.mxu0 0
      %2880 = vmatpush1.bf16.msra.mxu0 %v2817
      %2881 = vmatprep.subr.bf16.mxu0 0
      %2882 = vmatpush2.bf16.msra.mxu0 %v2832
      %2883 = vmatprep.subr.bf16.mxu0 0
      %2884 = vmatpush2.bf16.msra.mxu0 %v2831
      %2885 = vmatprep.subr.bf16.mxu0 0
      %2886 = vmatpush2.bf16.msra.mxu0 %v2830
      %2887 = vmatprep.subr.bf16.mxu0 0
      %2888 = vmatpush2.bf16.msra.mxu0 %v2829
      %2889 = vmatprep.subr.bf16.mxu0 0
      %2890 = vmatpush2.bf16.msra.mxu0 %v2828
      %2891 = vmatprep.subr.bf16.mxu0 0
      %2892 = vmatpush2.bf16.msra.mxu0 %v2827
      %2893 = vmatprep.subr.bf16.mxu0 0
      %2894 = vmatpush2.bf16.msra.mxu0 %v2826
      %2895 = vmatprep.subr.bf16.mxu0 0
      %2896 = vmatpush2.bf16.msra.mxu0 %v2825
      %2897 = vmatprep.mubr.bf16.mxu0 %v1307
      %2898 = vmatmul.mubr.bf16.gmra.mxu0 %v1306
      %v2899 = vpop.f32.mrf.mxu0
      %v2900 = vadd.f32 %v1935, %v2899
      %v2901 = vpop.f32.mrf.mxu0
      %v2902 = vpop.f32.mrf.mxu0
      %v2903 = vadd.f32 %v1938, %v2902
      %v2904 = vpop.f32.mrf.mxu0
      %2905 = vmatprep.mubr.bf16.mxu0 %v1310
      %2906 = vmatmul.mubr.bf16.gmra.mxu0 %v1309
      %v2907 = vpop.f32.mrf.mxu0
      %v2908 = vadd.f32 %v1943, %v2907
      %v2909 = vpop.f32.mrf.mxu0
      %v2910 = vpop.f32.mrf.mxu0
      %v2911 = vadd.f32 %v1946, %v2910
      %v2912 = vpop.f32.mrf.mxu0
      %2913 = vmatprep.mubr.bf16.mxu0 %v1313
      %2914 = vmatmul.mubr.bf16.gmra.mxu0 %v1312
      %v2915 = vpop.f32.mrf.mxu0
      %v2916 = vadd.f32 %v1951, %v2915
      %v2917 = vpop.f32.mrf.mxu0
      %v2918 = vpop.f32.mrf.mxu0
      %v2919 = vadd.f32 %v1954, %v2918
      %v2920 = vpop.f32.mrf.mxu0
      %2921 = vmatprep.mubr.bf16.mxu0 %v1316
      %2922 = vmatmul.mubr.bf16.gmra.mxu0 %v1315
      %v2923 = vpop.f32.mrf.mxu0
      %v2924 = vadd.f32 %v1959, %v2923
      %v2925 = vpop.f32.mrf.mxu0
      %v2926 = vpop.f32.mrf.mxu0
      %v2927 = vadd.f32 %v1962, %v2926
      %v2928 = vpop.f32.mrf.mxu0
      %2929 = vmatprep.mubr.bf16.mxu0 %v1319
      %2930 = vmatmul.mubr.bf16.gmra.mxu0 %v1318
      %v2931 = vpop.f32.mrf.mxu0
      %v2932 = vadd.f32 %v1967, %v2931
      %v2933 = vpop.f32.mrf.mxu0
      %v2934 = vpop.f32.mrf.mxu0
      %v2935 = vadd.f32 %v1970, %v2934
      %v2936 = vpop.f32.mrf.mxu0
      %2937 = vmatprep.mubr.bf16.mxu0 %v1322
      %2938 = vmatmul.mubr.bf16.gmra.mxu0 %v1321
      %v2939 = vpop.f32.mrf.mxu0
      %v2940 = vadd.f32 %v1975, %v2939
      %v2941 = vpop.f32.mrf.mxu0
      %v2942 = vpop.f32.mrf.mxu0
      %v2943 = vadd.f32 %v1978, %v2942
      %v2944 = vpop.f32.mrf.mxu0
      %2945 = vmatprep.mubr.bf16.mxu0 %v1325
      %2946 = vmatmul.mubr.bf16.gmra.mxu0 %v1324
      %v2947 = vpop.f32.mrf.mxu0
      %v2948 = vadd.f32 %v1983, %v2947
      %v2949 = vpop.f32.mrf.mxu0
      %v2950 = vpop.f32.mrf.mxu0
      %v2951 = vadd.f32 %v1986, %v2950
      %v2952 = vpop.f32.mrf.mxu0
      %2953 = vmatprep.mubr.bf16.mxu0 %v1328
      %2954 = vmatmul.mubr.bf16.gmra.mxu0 %v1327
      %v2955 = vpop.f32.mrf.mxu0
      %v2956 = vadd.f32 %v1991, %v2955
      %v2957 = vpop.f32.mrf.mxu0
      %v2958 = vpop.f32.mrf.mxu0
      %v2959 = vadd.f32 %v1994, %v2958
      %v2960 = vpop.f32.mrf.mxu0
      %2961 = vmatprep.mubr.bf16.mxu0 %v1331
      %2962 = vmatmul.mubr.bf16.gmra.mxu0 %v1330
      %v2963 = vpop.f32.mrf.mxu0
      %v2964 = vadd.f32 %v1999, %v2963
      %v2965 = vpop.f32.mrf.mxu0
      %v2966 = vpop.f32.mrf.mxu0
      %v2967 = vadd.f32 %v2002, %v2966
      %v2968 = vpop.f32.mrf.mxu0
      %2969 = vmatprep.mubr.bf16.mxu0 %v1334
      %2970 = vmatmul.mubr.bf16.gmra.mxu0 %v1333
      %v2971 = vpop.f32.mrf.mxu0
      %v2972 = vadd.f32 %v2007, %v2971
      %v2973 = vpop.f32.mrf.mxu0
      %v2974 = vpop.f32.mrf.mxu0
      %v2975 = vadd.f32 %v2010, %v2974
      %v2976 = vpop.f32.mrf.mxu0
      %2977 = vmatprep.mubr.bf16.mxu0 %v1337
      %2978 = vmatmul.mubr.bf16.gmra.mxu0 %v1336
      %v2979 = vpop.f32.mrf.mxu0
      %v2980 = vadd.f32 %v2015, %v2979
      %v2981 = vpop.f32.mrf.mxu0
      %v2982 = vpop.f32.mrf.mxu0
      %v2983 = vadd.f32 %v2018, %v2982
      %v2984 = vpop.f32.mrf.mxu0
      %2985 = vmatprep.mubr.bf16.mxu0 %v1340
      %2986 = vmatmul.mubr.bf16.gmra.mxu0 %v1339
      %v2987 = vpop.f32.mrf.mxu0
      %v2988 = vadd.f32 %v2023, %v2987
      %v2989 = vpop.f32.mrf.mxu0
      %v2990 = vpop.f32.mrf.mxu0
      %v2991 = vadd.f32 %v2026, %v2990
      %v2992 = vpop.f32.mrf.mxu0
      %2993 = vmatprep.mubr.bf16.mxu0 %v1343
      %2994 = vmatmul.mubr.bf16.gmra.mxu0 %v1342
      %v2995 = vpop.f32.mrf.mxu0
      %v2996 = vadd.f32 %v2031, %v2995
      %v2997 = vpop.f32.mrf.mxu0
      %v2998 = vpop.f32.mrf.mxu0
      %v2999 = vadd.f32 %v2034, %v2998
      %v3000 = vpop.f32.mrf.mxu0
      %3001 = vmatprep.mubr.bf16.mxu0 %v1346
      %3002 = vmatmul.mubr.bf16.gmra.mxu0 %v1345
      %v3003 = vpop.f32.mrf.mxu0
      %v3004 = vadd.f32 %v2039, %v3003
      %v3005 = vpop.f32.mrf.mxu0
      %v3006 = vpop.f32.mrf.mxu0
      %v3007 = vadd.f32 %v2042, %v3006
      %v3008 = vpop.f32.mrf.mxu0
      %3009 = vmatprep.mubr.bf16.mxu0 %v1349
      %3010 = vmatmul.mubr.bf16.gmra.mxu0 %v1348
      %v3011 = vpop.f32.mrf.mxu0
      %v3012 = vadd.f32 %v2047, %v3011
      %v3013 = vpop.f32.mrf.mxu0
      %v3014 = vpop.f32.mrf.mxu0
      %v3015 = vadd.f32 %v2050, %v3014
      %v3016 = vpop.f32.mrf.mxu0
      %3017 = vmatprep.mubr.bf16.mxu0 %v1352
      %3018 = vmatmul.mubr.bf16.gmra.mxu0 %v1351
      %v3019 = vpop.f32.mrf.mxu0
      %v3020 = vadd.f32 %v2055, %v3019
      %v3021 = vpop.f32.mrf.mxu0
      %v3022 = vpop.f32.mrf.mxu0
      %v3023 = vadd.f32 %v2058, %v3022
      %v3024 = vpop.f32.mrf.mxu0
      %3025 = vdwg.mxu0
      %3026 = vmatprep.subr.bf16.mxu0 0
      %3027 = vmatpush1.bf16.msra.mxu0 %v2840
      %3028 = vmatprep.subr.bf16.mxu0 0
      %3029 = vmatpush1.bf16.msra.mxu0 %v2839
      %3030 = vmatprep.subr.bf16.mxu0 0
      %3031 = vmatpush1.bf16.msra.mxu0 %v2838
      %3032 = vmatprep.subr.bf16.mxu0 0
      %3033 = vmatpush1.bf16.msra.mxu0 %v2837
      %3034 = vmatprep.subr.bf16.mxu0 0
      %3035 = vmatpush1.bf16.msra.mxu0 %v2836
      %3036 = vmatprep.subr.bf16.mxu0 0
      %3037 = vmatpush1.bf16.msra.mxu0 %v2835
      %3038 = vmatprep.subr.bf16.mxu0 0
      %3039 = vmatpush1.bf16.msra.mxu0 %v2834
      %3040 = vmatprep.subr.bf16.mxu0 0
      %3041 = vmatpush1.bf16.msra.mxu0 %v2833
      %3042 = vmatprep.subr.bf16.mxu0 0
      %3043 = vmatpush2.bf16.msra.mxu0 0
      %3044 = vmatprep.subr.bf16.mxu0 0
      %3045 = vmatpush2.bf16.msra.mxu0 0
      %3046 = vmatprep.subr.bf16.mxu0 0
      %3047 = vmatpush2.bf16.msra.mxu0 0
      %3048 = vmatprep.subr.bf16.mxu0 0
      %3049 = vmatpush2.bf16.msra.mxu0 0
      %3050 = vmatprep.subr.bf16.mxu0 0
      %3051 = vmatpush2.bf16.msra.mxu0 0
      %3052 = vmatprep.subr.bf16.mxu0 0
      %3053 = vmatpush2.bf16.msra.mxu0 0
      %3054 = vmatprep.subr.bf16.mxu0 0
      %3055 = vmatpush2.bf16.msra.mxu0 0
      %3056 = vmatprep.subr.bf16.mxu0 0
      %3057 = vmatpush2.bf16.msra.mxu0 0
      %3058 = vmatprep.mubr.bf16.mxu0 0
      %3059 = vmatmul.mubr.bf16.gmra.mxu0 %v1308
      %v3060 = vpop.f32.mrf.mxu0
      %v3061 = vadd.f32 %v2900, %v3060
      %v3062 = vpop.f32.mrf.mxu0
      %v3063 = vpop.f32.mrf.mxu0
      %v3064 = vadd.f32 %v2903, %v3063
      %v3065 = vpop.f32.mrf.mxu0
      %3066 = vmatprep.mubr.bf16.mxu0 0
      %3067 = vmatmul.mubr.bf16.gmra.mxu0 %v1311
      %v3068 = vpop.f32.mrf.mxu0
      %v3069 = vadd.f32 %v2908, %v3068
      %v3070 = vpop.f32.mrf.mxu0
      %v3071 = vpop.f32.mrf.mxu0
      %v3072 = vadd.f32 %v2911, %v3071
      %v3073 = vpop.f32.mrf.mxu0
      %3074 = vmatprep.mubr.bf16.mxu0 0
      %3075 = vmatmul.mubr.bf16.gmra.mxu0 %v1314
      %v3076 = vpop.f32.mrf.mxu0
      %v3077 = vadd.f32 %v2916, %v3076
      %v3078 = vpop.f32.mrf.mxu0
      %v3079 = vpop.f32.mrf.mxu0
      %v3080 = vadd.f32 %v2919, %v3079
      %v3081 = vpop.f32.mrf.mxu0
      %3082 = vmatprep.mubr.bf16.mxu0 0
      %3083 = vmatmul.mubr.bf16.gmra.mxu0 %v1317
      %v3084 = vpop.f32.mrf.mxu0
      %v3085 = vadd.f32 %v2924, %v3084
      %v3086 = vpop.f32.mrf.mxu0
      %v3087 = vpop.f32.mrf.mxu0
      %v3088 = vadd.f32 %v2927, %v3087
      %v3089 = vpop.f32.mrf.mxu0
      %3090 = vmatprep.mubr.bf16.mxu0 0
      %3091 = vmatmul.mubr.bf16.gmra.mxu0 %v1320
      %v3092 = vpop.f32.mrf.mxu0
      %v3093 = vadd.f32 %v2932, %v3092
      %v3094 = vpop.f32.mrf.mxu0
      %v3095 = vpop.f32.mrf.mxu0
      %v3096 = vadd.f32 %v2935, %v3095
      %v3097 = vpop.f32.mrf.mxu0
      %3098 = vmatprep.mubr.bf16.mxu0 0
      %3099 = vmatmul.mubr.bf16.gmra.mxu0 %v1323
      %v3100 = vpop.f32.mrf.mxu0
      %v3101 = vadd.f32 %v2940, %v3100
      %v3102 = vpop.f32.mrf.mxu0
      %v3103 = vpop.f32.mrf.mxu0
      %v3104 = vadd.f32 %v2943, %v3103
      %v3105 = vpop.f32.mrf.mxu0
      %3106 = vmatprep.mubr.bf16.mxu0 0
      %3107 = vmatmul.mubr.bf16.gmra.mxu0 %v1326
      %v3108 = vpop.f32.mrf.mxu0
      %v3109 = vadd.f32 %v2948, %v3108
      %v3110 = vpop.f32.mrf.mxu0
      %v3111 = vpop.f32.mrf.mxu0
      %v3112 = vadd.f32 %v2951, %v3111
      %v3113 = vpop.f32.mrf.mxu0
      %3114 = vmatprep.mubr.bf16.mxu0 0
      %3115 = vmatmul.mubr.bf16.gmra.mxu0 %v1329
      %v3116 = vpop.f32.mrf.mxu0
      %v3117 = vadd.f32 %v2956, %v3116
      %v3118 = vpop.f32.mrf.mxu0
      %v3119 = vpop.f32.mrf.mxu0
      %v3120 = vadd.f32 %v2959, %v3119
      %v3121 = vpop.f32.mrf.mxu0
      %3122 = vmatprep.mubr.bf16.mxu0 0
      %3123 = vmatmul.mubr.bf16.gmra.mxu0 %v1332
      %v3124 = vpop.f32.mrf.mxu0
      %v3125 = vadd.f32 %v2964, %v3124
      %v3126 = vpop.f32.mrf.mxu0
      %v3127 = vpop.f32.mrf.mxu0
      %v3128 = vadd.f32 %v2967, %v3127
      %v3129 = vpop.f32.mrf.mxu0
      %3130 = vmatprep.mubr.bf16.mxu0 0
      %3131 = vmatmul.mubr.bf16.gmra.mxu0 %v1335
      %v3132 = vpop.f32.mrf.mxu0
      %v3133 = vadd.f32 %v2972, %v3132
      %v3134 = vpop.f32.mrf.mxu0
      %v3135 = vpop.f32.mrf.mxu0
      %v3136 = vadd.f32 %v2975, %v3135
      %v3137 = vpop.f32.mrf.mxu0
      %3138 = vmatprep.mubr.bf16.mxu0 0
      %3139 = vmatmul.mubr.bf16.gmra.mxu0 %v1338
      %v3140 = vpop.f32.mrf.mxu0
      %v3141 = vadd.f32 %v2980, %v3140
      %v3142 = vpop.f32.mrf.mxu0
      %v3143 = vpop.f32.mrf.mxu0
      %v3144 = vadd.f32 %v2983, %v3143
      %v3145 = vpop.f32.mrf.mxu0
      %3146 = vmatprep.mubr.bf16.mxu0 0
      %3147 = vmatmul.mubr.bf16.gmra.mxu0 %v1341
      %v3148 = vpop.f32.mrf.mxu0
      %v3149 = vadd.f32 %v2988, %v3148
      %v3150 = vpop.f32.mrf.mxu0
      %v3151 = vpop.f32.mrf.mxu0
      %v3152 = vadd.f32 %v2991, %v3151
      %v3153 = vpop.f32.mrf.mxu0
      %3154 = vmatprep.mubr.bf16.mxu0 0
      %3155 = vmatmul.mubr.bf16.gmra.mxu0 %v1344
      %v3156 = vpop.f32.mrf.mxu0
      %v3157 = vadd.f32 %v2996, %v3156
      %v3158 = vpop.f32.mrf.mxu0
      %v3159 = vpop.f32.mrf.mxu0
      %v3160 = vadd.f32 %v2999, %v3159
      %v3161 = vpop.f32.mrf.mxu0
      %3162 = vmatprep.mubr.bf16.mxu0 0
      %3163 = vmatmul.mubr.bf16.gmra.mxu0 %v1347
      %v3164 = vpop.f32.mrf.mxu0
      %v3165 = vadd.f32 %v3004, %v3164
      %v3166 = vpop.f32.mrf.mxu0
      %v3167 = vpop.f32.mrf.mxu0
      %v3168 = vadd.f32 %v3007, %v3167
      %v3169 = vpop.f32.mrf.mxu0
      %3170 = vmatprep.mubr.bf16.mxu0 0
      %3171 = vmatmul.mubr.bf16.gmra.mxu0 %v1350
      %v3172 = vpop.f32.mrf.mxu0
      %v3173 = vadd.f32 %v3012, %v3172
      %v3174 = vpop.f32.mrf.mxu0
      %v3175 = vpop.f32.mrf.mxu0
      %v3176 = vadd.f32 %v3015, %v3175
      %v3177 = vpop.f32.mrf.mxu0
      %3178 = vmatprep.mubr.bf16.mxu0 0
      %3179 = vmatmul.mubr.bf16.gmra.mxu0 %v1353
      %v3180 = vpop.f32.mrf.mxu0
      %v3181 = vadd.f32 %v3020, %v3180
      %v3182 = vpop.f32.mrf.mxu0
      %v3183 = vpop.f32.mrf.mxu0
      %v3184 = vadd.f32 %v3023, %v3183
      %v3185 = vpop.f32.mrf.mxu0
      %3186 = vdwg.mxu0
      %v3187 = vadd.f32 %v3061, %v2595
      %v3188 = vadd.f32 %v3064, %v2598
      %v3189 = vadd.f32 %v3069, %v2603
      %v3190 = vadd.f32 %v3072, %v2606
      %v3191 = vadd.f32 %v3077, %v2611
      %v3192 = vadd.f32 %v3080, %v2614
      %v3193 = vadd.f32 %v3085, %v2619
      %v3194 = vadd.f32 %v3088, %v2622
      %v3195 = vadd.f32 %v3093, %v2627
      %v3196 = vadd.f32 %v3096, %v2630
      %v3197 = vadd.f32 %v3101, %v2635
      %v3198 = vadd.f32 %v3104, %v2638
      %v3199 = vadd.f32 %v3109, %v2643
      %v3200 = vadd.f32 %v3112, %v2646
      %v3201 = vadd.f32 %v3117, %v2651
      %v3202 = vadd.f32 %v3120, %v2654
      %v3203 = vadd.f32 %v3125, %v2659
      %v3204 = vadd.f32 %v3128, %v2662
      %v3205 = vadd.f32 %v3133, %v2667
      %v3206 = vadd.f32 %v3136, %v2670
      %v3207 = vadd.f32 %v3141, %v2675
      %v3208 = vadd.f32 %v3144, %v2678
      %v3209 = vadd.f32 %v3149, %v2683
      %v3210 = vadd.f32 %v3152, %v2686
      %v3211 = vadd.f32 %v3157, %v2691
      %v3212 = vadd.f32 %v3160, %v2694
      %v3213 = vadd.f32 %v3165, %v2699
      %v3214 = vadd.f32 %v3168, %v2702
      %v3215 = vadd.f32 %v3173, %v2707
      %v3216 = vadd.f32 %v3176, %v2710
      %v3217 = vadd.f32 %v3181, %v2715
      %v3218 = vadd.f32 %v3184, %v2718
      %v3220 = vlaneseq
      %v3221 = vshrl.u32 %v3220, 7
      %v3222 = vsub.s32 0, %v3221
      %v3223 = vrot.slane %v309, %v3222
      %v3225 = vadd.f32 %v3187, %v3223
      %v3226 = vadd.f32 %v3188, %v3223
      %v3227 = vadd.f32 %v3189, %v3223
      %v3228 = vadd.f32 %v3190, %v3223
      %v3229 = vadd.f32 %v3191, %v3223
      %v3230 = vadd.f32 %v3192, %v3223
      %v3231 = vadd.f32 %v3193, %v3223
      %v3232 = vadd.f32 %v3194, %v3223
      %v3233 = vadd.f32 %v3195, %v3223
      %v3234 = vadd.f32 %v3196, %v3223
      %v3235 = vadd.f32 %v3197, %v3223
      %v3236 = vadd.f32 %v3198, %v3223
      %v3237 = vadd.f32 %v3199, %v3223
      %v3238 = vadd.f32 %v3200, %v3223
      %v3239 = vadd.f32 %v3201, %v3223
      %v3240 = vadd.f32 %v3202, %v3223
      %v3241 = vadd.f32 %v3203, %v3223
      %v3242 = vadd.f32 %v3204, %v3223
      %v3243 = vadd.f32 %v3205, %v3223
      %v3244 = vadd.f32 %v3206, %v3223
      %v3245 = vadd.f32 %v3207, %v3223
      %v3246 = vadd.f32 %v3208, %v3223
      %v3247 = vadd.f32 %v3209, %v3223
      %v3248 = vadd.f32 %v3210, %v3223
      %v3249 = vadd.f32 %v3211, %v3223
      %v3250 = vadd.f32 %v3212, %v3223
      %v3251 = vadd.f32 %v3213, %v3223
      %v3252 = vadd.f32 %v3214, %v3223
      %v3253 = vadd.f32 %v3215, %v3223
      %v3254 = vadd.f32 %v3216, %v3223
      %v3255 = vadd.f32 %v3217, %v3223
      %v3256 = vadd.f32 %v3218, %v3223
      %vm3257 = vcmp.gt.f32.partialorder %v3225, 0.0
      %vm3258 = vcmp.gt.f32.partialorder %v3226, 0.0
      %vm3259 = vcmp.gt.f32.partialorder %v3227, 0.0
      %vm3260 = vcmp.gt.f32.partialorder %v3228, 0.0
      %vm3261 = vcmp.gt.f32.partialorder %v3229, 0.0
      %vm3262 = vcmp.gt.f32.partialorder %v3230, 0.0
      %vm3263 = vcmp.gt.f32.partialorder %v3231, 0.0
      %vm3264 = vcmp.gt.f32.partialorder %v3232, 0.0
      %vm3265 = vcmp.gt.f32.partialorder %v3233, 0.0
      %vm3266 = vcmp.gt.f32.partialorder %v3234, 0.0
      %vm3267 = vcmp.gt.f32.partialorder %v3235, 0.0
      %vm3268 = vcmp.gt.f32.partialorder %v3236, 0.0
      %vm3269 = vcmp.gt.f32.partialorder %v3237, 0.0
      %vm3270 = vcmp.gt.f32.partialorder %v3238, 0.0
      %vm3271 = vcmp.gt.f32.partialorder %v3239, 0.0
      %vm3272 = vcmp.gt.f32.partialorder %v3240, 0.0
      %vm3273 = vcmp.gt.f32.partialorder %v3241, 0.0
      %vm3274 = vcmp.gt.f32.partialorder %v3242, 0.0
      %vm3275 = vcmp.gt.f32.partialorder %v3243, 0.0
      %vm3276 = vcmp.gt.f32.partialorder %v3244, 0.0
      %vm3277 = vcmp.gt.f32.partialorder %v3245, 0.0
      %vm3278 = vcmp.gt.f32.partialorder %v3246, 0.0
      %vm3279 = vcmp.gt.f32.partialorder %v3247, 0.0
      %vm3280 = vcmp.gt.f32.partialorder %v3248, 0.0
      %vm3281 = vcmp.gt.f32.partialorder %v3249, 0.0
      %vm3282 = vcmp.gt.f32.partialorder %v3250, 0.0
      %vm3283 = vcmp.gt.f32.partialorder %v3251, 0.0
      %vm3284 = vcmp.gt.f32.partialorder %v3252, 0.0
      %vm3285 = vcmp.gt.f32.partialorder %v3253, 0.0
      %vm3286 = vcmp.gt.f32.partialorder %v3254, 0.0
      %vm3287 = vcmp.gt.f32.partialorder %v3255, 0.0
      %vm3288 = vcmp.gt.f32.partialorder %v3256, 0.0
      %v3289 = vmul.f32 %v3225, 0.01
      %v3290 = vmul.f32 %v3226, 0.01
      %v3291 = vmul.f32 %v3227, 0.01
      %v3292 = vmul.f32 %v3228, 0.01
      %v3293 = vmul.f32 %v3229, 0.01
      %v3294 = vmul.f32 %v3230, 0.01
      %v3295 = vmul.f32 %v3231, 0.01
      %v3296 = vmul.f32 %v3232, 0.01
      %v3297 = vmul.f32 %v3233, 0.01
      %v3298 = vmul.f32 %v3234, 0.01
      %v3299 = vmul.f32 %v3235, 0.01
      %v3300 = vmul.f32 %v3236, 0.01
      %v3301 = vmul.f32 %v3237, 0.01
      %v3302 = vmul.f32 %v3238, 0.01
      %v3303 = vmul.f32 %v3239, 0.01
      %v3304 = vmul.f32 %v3240, 0.01
      %v3305 = vmul.f32 %v3241, 0.01
      %v3306 = vmul.f32 %v3242, 0.01
      %v3307 = vmul.f32 %v3243, 0.01
      %v3308 = vmul.f32 %v3244, 0.01
      %v3309 = vmul.f32 %v3245, 0.01
      %v3310 = vmul.f32 %v3246, 0.01
      %v3311 = vmul.f32 %v3247, 0.01
      %v3312 = vmul.f32 %v3248, 0.01
      %v3313 = vmul.f32 %v3249, 0.01
      %v3314 = vmul.f32 %v3250, 0.01
      %v3315 = vmul.f32 %v3251, 0.01
      %v3316 = vmul.f32 %v3252, 0.01
      %v3317 = vmul.f32 %v3253, 0.01
      %v3318 = vmul.f32 %v3254, 0.01
      %v3319 = vmul.f32 %v3255, 0.01
      %v3320 = vmul.f32 %v3256, 0.01
      %v3321 = vsel %vm3257, %v3225, %v3289
      %v3322 = vsel %vm3258, %v3226, %v3290
      %v3323 = vsel %vm3259, %v3227, %v3291
      %v3324 = vsel %vm3260, %v3228, %v3292
      %v3325 = vsel %vm3261, %v3229, %v3293
      %v3326 = vsel %vm3262, %v3230, %v3294
      %v3327 = vsel %vm3263, %v3231, %v3295
      %v3328 = vsel %vm3264, %v3232, %v3296
      %v3329 = vsel %vm3265, %v3233, %v3297
      %v3330 = vsel %vm3266, %v3234, %v3298
      %v3331 = vsel %vm3267, %v3235, %v3299
      %v3332 = vsel %vm3268, %v3236, %v3300
      %v3333 = vsel %vm3269, %v3237, %v3301
      %v3334 = vsel %vm3270, %v3238, %v3302
      %v3335 = vsel %vm3271, %v3239, %v3303
      %v3336 = vsel %vm3272, %v3240, %v3304
      %v3337 = vsel %vm3273, %v3241, %v3305
      %v3338 = vsel %vm3274, %v3242, %v3306
      %v3339 = vsel %vm3275, %v3243, %v3307
      %v3340 = vsel %vm3276, %v3244, %v3308
      %v3341 = vsel %vm3277, %v3245, %v3309
      %v3342 = vsel %vm3278, %v3246, %v3310
      %v3343 = vsel %vm3279, %v3247, %v3311
      %v3344 = vsel %vm3280, %v3248, %v3312
      %v3345 = vsel %vm3281, %v3249, %v3313
      %v3346 = vsel %vm3282, %v3250, %v3314
      %v3347 = vsel %vm3283, %v3251, %v3315
      %v3348 = vsel %vm3284, %v3252, %v3316
      %v3349 = vsel %vm3285, %v3253, %v3317
      %v3350 = vsel %vm3286, %v3254, %v3318
      %v3351 = vsel %vm3287, %v3255, %v3319
      %v3352 = vsel %vm3288, %v3256, %v3320
      %3353 = vxpose.xlu0.b32.start [1/16] %v3321, 128
      %3354 = vxpose.xlu0.b32.cont [2/16] %v3322, 128
      %3355 = vxpose.xlu0.b32.cont [3/16] %v3323, 128
      %3356 = vxpose.xlu0.b32.cont [4/16] %v3324, 128
      %3357 = vxpose.xlu0.b32.cont [5/16] %v3325, 128
      %3358 = vxpose.xlu0.b32.cont [6/16] %v3326, 128
      %3359 = vxpose.xlu0.b32.cont [7/16] %v3327, 128
      %3360 = vxpose.xlu0.b32.cont [8/16] %v3328, 128
      %3361 = vxpose.xlu0.b32.cont [9/16] %v3329, 128
      %3362 = vxpose.xlu0.b32.cont [10/16] %v3330, 128
      %3363 = vxpose.xlu0.b32.cont [11/16] %v3331, 128
      %3364 = vxpose.xlu0.b32.cont [12/16] %v3332, 128
      %3365 = vxpose.xlu0.b32.cont [13/16] %v3333, 128
      %3366 = vxpose.xlu0.b32.cont [14/16] %v3334, 128
      %3367 = vxpose.xlu0.b32.cont [15/16] %v3335, 128
      %3368 = vxpose.xlu0.b32.end [16/16] %v3336, 128
      %v3369 = vpop.trf.xlu0
      %v3370 = vpop.trf.xlu0
      %v3371 = vpop.trf.xlu0
      %v3372 = vpop.trf.xlu0
      %v3373 = vpop.trf.xlu0
      %v3374 = vpop.trf.xlu0
      %v3375 = vpop.trf.xlu0
      %v3376 = vpop.trf.xlu0
      %v3377 = vpop.trf.xlu0
      %v3378 = vpop.trf.xlu0
      %v3379 = vpop.trf.xlu0
      %v3380 = vpop.trf.xlu0
      %v3381 = vpop.trf.xlu0
      %v3382 = vpop.trf.xlu0
      %v3383 = vpop.trf.xlu0
      %v3384 = vpop.trf.xlu0
      %3385 = vxpose.xlu0.b32.start [1/16] %v3337, 128
      %3386 = vxpose.xlu0.b32.cont [2/16] %v3338, 128
      %3387 = vxpose.xlu0.b32.cont [3/16] %v3339, 128
      %3388 = vxpose.xlu0.b32.cont [4/16] %v3340, 128
      %3389 = vxpose.xlu0.b32.cont [5/16] %v3341, 128
      %3390 = vxpose.xlu0.b32.cont [6/16] %v3342, 128
      %3391 = vxpose.xlu0.b32.cont [7/16] %v3343, 128
      %3392 = vxpose.xlu0.b32.cont [8/16] %v3344, 128
      %3393 = vxpose.xlu0.b32.cont [9/16] %v3345, 128
      %3394 = vxpose.xlu0.b32.cont [10/16] %v3346, 128
      %3395 = vxpose.xlu0.b32.cont [11/16] %v3347, 128
      %3396 = vxpose.xlu0.b32.cont [12/16] %v3348, 128
      %3397 = vxpose.xlu0.b32.cont [13/16] %v3349, 128
      %3398 = vxpose.xlu0.b32.cont [14/16] %v3350, 128
      %3399 = vxpose.xlu0.b32.cont [15/16] %v3351, 128
      %3400 = vxpose.xlu0.b32.end [16/16] %v3352, 128
      %v3401 = vpop.trf.xlu0
      %v3402 = vpop.trf.xlu0
      %v3403 = vpop.trf.xlu0
      %v3404 = vpop.trf.xlu0
      %v3405 = vpop.trf.xlu0
      %v3406 = vpop.trf.xlu0
      %v3407 = vpop.trf.xlu0
      %v3408 = vpop.trf.xlu0
      %v3409 = vpop.trf.xlu0
      %v3410 = vpop.trf.xlu0
      %v3411 = vpop.trf.xlu0
      %v3412 = vpop.trf.xlu0
      %v3413 = vpop.trf.xlu0
      %v3414 = vpop.trf.xlu0
      %v3415 = vpop.trf.xlu0
      %v3416 = vpop.trf.xlu0
      %v3417 = vpack.c.bf16 %v3370, %v3369
      %v3418 = vpack.c.bf16 %v3402, %v3401
      %v3419 = vpack.c.bf16 %v3372, %v3371
      %v3420 = vpack.c.bf16 %v3404, %v3403
      %v3421 = vpack.c.bf16 %v3374, %v3373
      %v3422 = vpack.c.bf16 %v3406, %v3405
      %v3423 = vpack.c.bf16 %v3376, %v3375
      %v3424 = vpack.c.bf16 %v3408, %v3407
      %v3425 = vpack.c.bf16 %v3378, %v3377
      %v3426 = vpack.c.bf16 %v3410, %v3409
      %v3427 = vpack.c.bf16 %v3380, %v3379
      %v3428 = vpack.c.bf16 %v3412, %v3411
      %v3429 = vpack.c.bf16 %v3382, %v3381
      %v3430 = vpack.c.bf16 %v3414, %v3413
      %v3431 = vpack.c.bf16 %v3384, %v3383
      %v3432 = vpack.c.bf16 %v3416, %v3415
      %v3433 = vld [vmem:[%s5] sm:$0xf]
      %v3434 = vld [vmem:[%s5 + $0x4] sm:$0xf]
      %v3435 = vld [vmem:[%s5 + $0x8] sm:$0xf]
      %v3436 = vld [vmem:[%s5 + $0xc] sm:$0xf]
      %v3437 = vld [vmem:[%s5 + $0x10] sm:$0xf]
      %v3438 = vld [vmem:[%s5 + $0x14] sm:$0xf]
      %v3439 = vld [vmem:[%s5 + $0x18] sm:$0xf]
      %v3440 = vld [vmem:[%s5 + $0x1c] sm:$0xf]
      %v3441 = vld [vmem:[%s5 + $0x20] sm:$0xf]
      %v3442 = vld [vmem:[%s5 + $0x24] sm:$0xf]
      %v3443 = vld [vmem:[%s5 + $0x28] sm:$0xf]
      %v3444 = vld [vmem:[%s5 + $0x2c] sm:$0xf]
      %v3445 = vld [vmem:[%s5 + $0x30] sm:$0xf]
      %v3446 = vld [vmem:[%s5 + $0x34] sm:$0xf]
      %v3447 = vld [vmem:[%s5 + $0x38] sm:$0xf]
      %v3448 = vld [vmem:[%s5 + $0x3c] sm:$0xf]
      %v3449 = vld [vmem:[%s5 + $0x40] sm:$0xf]
      %v3450 = vld [vmem:[%s5 + $0x44] sm:$0xf]
      %v3451 = vld [vmem:[%s5 + $0x48] sm:$0xf]
      %v3452 = vld [vmem:[%s5 + $0x4c] sm:$0xf]
      %v3453 = vld [vmem:[%s5 + $0x50] sm:$0xf]
      %v3454 = vld [vmem:[%s5 + $0x54] sm:$0xf]
      %v3455 = vld [vmem:[%s5 + $0x58] sm:$0xf]
      %v3456 = vld [vmem:[%s5 + $0x5c] sm:$0xf]
      %v3457 = vld [vmem:[%s5 + $0x60] sm:$0xf]
      %v3458 = vld [vmem:[%s5 + $0x64] sm:$0xf]
      %v3459 = vld [vmem:[%s5 + $0x68] sm:$0xf]
      %v3460 = vld [vmem:[%s5 + $0x6c] sm:$0xf]
      %v3461 = vld [vmem:[%s5 + $0x70] sm:$0xf]
      %v3462 = vld [vmem:[%s5 + $0x74] sm:$0xf]
      %v3463 = vld [vmem:[%s5 + $0x78] sm:$0xf]
      %v3464 = vld [vmem:[%s5 + $0x7c] sm:$0xf]
      %3466 = vset.pattern.permute.xlu0 0
      %3467 = vperm.xlu0 %3466, %v310
      %v3468 = vpop.permute.xlu0 %3467
      %3471 = vset.pattern.permute.xlu0 0
      %3472 = vperm.xlu0 %3471, %v311
      %v3473 = vpop.permute.xlu0 %3472
      %3476 = vset.pattern.permute.xlu0 0
      %3477 = vperm.xlu0 %3476, %v312
      %v3478 = vpop.permute.xlu0 %3477
      %3481 = vset.pattern.permute.xlu0 0
      %3482 = vperm.xlu0 %3481, %v313
      %v3483 = vpop.permute.xlu0 %3482
      %3486 = vset.pattern.permute.xlu0 0
      %3487 = vperm.xlu0 %3486, %v314
      %v3488 = vpop.permute.xlu0 %3487
      %3491 = vset.pattern.permute.xlu0 0
      %3492 = vperm.xlu0 %3491, %v315
      %v3493 = vpop.permute.xlu0 %3492
      %3496 = vset.pattern.permute.xlu0 0
      %3497 = vperm.xlu0 %3496, %v316
      %v3498 = vpop.permute.xlu0 %3497
      %3501 = vset.pattern.permute.xlu0 0
      %3502 = vperm.xlu0 %3501, %v317
      %v3503 = vpop.permute.xlu0 %3502
      %3506 = vset.pattern.permute.xlu0 0
      %3507 = vperm.xlu0 %3506, %v318
      %v3508 = vpop.permute.xlu0 %3507
      %3511 = vset.pattern.permute.xlu0 0
      %3512 = vperm.xlu0 %3511, %v319
      %v3513 = vpop.permute.xlu0 %3512
      %3516 = vset.pattern.permute.xlu0 0
      %3517 = vperm.xlu0 %3516, %v320
      %v3518 = vpop.permute.xlu0 %3517
      %3521 = vset.pattern.permute.xlu0 0
      %3522 = vperm.xlu0 %3521, %v321
      %v3523 = vpop.permute.xlu0 %3522
      %3526 = vset.pattern.permute.xlu0 0
      %3527 = vperm.xlu0 %3526, %v322
      %v3528 = vpop.permute.xlu0 %3527
      %3531 = vset.pattern.permute.xlu0 0
      %3532 = vperm.xlu0 %3531, %v323
      %v3533 = vpop.permute.xlu0 %3532
      %3536 = vset.pattern.permute.xlu0 0
      %3537 = vperm.xlu0 %3536, %v324
      %v3538 = vpop.permute.xlu0 %3537
      %3541 = vset.pattern.permute.xlu0 0
      %3542 = vperm.xlu0 %3541, %v325
      %v3543 = vpop.permute.xlu0 %3542
      %3546 = vset.pattern.permute.xlu0 0
      %3547 = vperm.xlu0 %3546, %v326
      %v3548 = vpop.permute.xlu0 %3547
      %3551 = vset.pattern.permute.xlu0 0
      %3552 = vperm.xlu0 %3551, %v327
      %v3553 = vpop.permute.xlu0 %3552
      %3556 = vset.pattern.permute.xlu0 0
      %3557 = vperm.xlu0 %3556, %v328
      %v3558 = vpop.permute.xlu0 %3557
      %3561 = vset.pattern.permute.xlu0 0
      %3562 = vperm.xlu0 %3561, %v329
      %v3563 = vpop.permute.xlu0 %3562
      %3566 = vset.pattern.permute.xlu0 0
      %3567 = vperm.xlu0 %3566, %v330
      %v3568 = vpop.permute.xlu0 %3567
      %3571 = vset.pattern.permute.xlu0 0
      %3572 = vperm.xlu0 %3571, %v331
      %v3573 = vpop.permute.xlu0 %3572
      %3576 = vset.pattern.permute.xlu0 0
      %3577 = vperm.xlu0 %3576, %v332
      %v3578 = vpop.permute.xlu0 %3577
      %3581 = vset.pattern.permute.xlu0 0
      %3582 = vperm.xlu0 %3581, %v333
      %v3583 = vpop.permute.xlu0 %3582
      %3586 = vset.pattern.permute.xlu0 0
      %3587 = vperm.xlu0 %3586, %v334
      %v3588 = vpop.permute.xlu0 %3587
      %3591 = vset.pattern.permute.xlu0 0
      %3592 = vperm.xlu0 %3591, %v335
      %v3593 = vpop.permute.xlu0 %3592
      %3596 = vset.pattern.permute.xlu0 0
      %3597 = vperm.xlu0 %3596, %v336
      %v3598 = vpop.permute.xlu0 %3597
      %3601 = vset.pattern.permute.xlu0 0
      %3602 = vperm.xlu0 %3601, %v337
      %v3603 = vpop.permute.xlu0 %3602
      %3606 = vset.pattern.permute.xlu0 0
      %3607 = vperm.xlu0 %3606, %v338
      %v3608 = vpop.permute.xlu0 %3607
      %3611 = vset.pattern.permute.xlu0 0
      %3612 = vperm.xlu0 %3611, %v339
      %v3613 = vpop.permute.xlu0 %3612
      %3616 = vset.pattern.permute.xlu0 0
      %3617 = vperm.xlu0 %3616, %v340
      %v3618 = vpop.permute.xlu0 %3617
      %3621 = vset.pattern.permute.xlu0 0
      %3622 = vperm.xlu0 %3621, %v341
      %v3623 = vpop.permute.xlu0 %3622
      %v3657 = vunpack.c.l.b16 %v3433
      %v3658 = vunpack.c.l.b16 %v3434
      %v3659 = vunpack.c.l.b16 %v3435
      %v3660 = vunpack.c.l.b16 %v3436
      %v3661 = vunpack.c.l.b16 %v3437
      %v3662 = vunpack.c.l.b16 %v3438
      %v3663 = vunpack.c.l.b16 %v3439
      %v3664 = vunpack.c.l.b16 %v3440
      %v3665 = vunpack.c.l.b16 %v3441
      %v3666 = vunpack.c.l.b16 %v3442
      %v3667 = vunpack.c.l.b16 %v3443
      %v3668 = vunpack.c.l.b16 %v3444
      %v3669 = vunpack.c.l.b16 %v3445
      %v3670 = vunpack.c.l.b16 %v3446
      %v3671 = vunpack.c.l.b16 %v3447
      %v3672 = vunpack.c.l.b16 %v3448
      %v3673 = vunpack.c.l.b16 %v3449
      %v3674 = vunpack.c.l.b16 %v3450
      %v3675 = vunpack.c.l.b16 %v3451
      %v3676 = vunpack.c.l.b16 %v3452
      %v3677 = vunpack.c.l.b16 %v3453
      %v3678 = vunpack.c.l.b16 %v3454
      %v3679 = vunpack.c.l.b16 %v3455
      %v3680 = vunpack.c.l.b16 %v3456
      %v3681 = vunpack.c.l.b16 %v3457
      %v3682 = vunpack.c.l.b16 %v3458
      %v3683 = vunpack.c.l.b16 %v3459
      %v3684 = vunpack.c.l.b16 %v3460
      %v3685 = vunpack.c.l.b16 %v3461
      %v3686 = vunpack.c.l.b16 %v3462
      %v3687 = vunpack.c.l.b16 %v3463
      %v3688 = vunpack.c.l.b16 %v3464
      %v3689 = vpack.c.b16 %v3658, %v3657
      %v3690 = vpack.c.b16 %v3660, %v3659
      %v3691 = vpack.c.b16 %v3662, %v3661
      %v3692 = vpack.c.b16 %v3664, %v3663
      %v3693 = vpack.c.b16 %v3666, %v3665
      %v3694 = vpack.c.b16 %v3668, %v3667
      %v3695 = vpack.c.b16 %v3670, %v3669
      %v3696 = vpack.c.b16 %v3672, %v3671
      %v3697 = vpack.c.b16 %v3674, %v3673
      %v3698 = vpack.c.b16 %v3676, %v3675
      %v3699 = vpack.c.b16 %v3678, %v3677
      %v3700 = vpack.c.b16 %v3680, %v3679
      %v3701 = vpack.c.b16 %v3682, %v3681
      %v3702 = vpack.c.b16 %v3684, %v3683
      %v3703 = vpack.c.b16 %v3686, %v3685
      %v3704 = vpack.c.b16 %v3688, %v3687
      %3721 = vmatprep.subr.bf16.mxu0 %v3432
      %3722 = vmatpush1.bf16.msra.mxu0 %v3431
      %3723 = vmatprep.subr.bf16.mxu0 %v3430
      %3724 = vmatpush1.bf16.msra.mxu0 %v3429
      %3725 = vmatprep.subr.bf16.mxu0 %v3428
      %3726 = vmatpush1.bf16.msra.mxu0 %v3427
      %3727 = vmatprep.subr.bf16.mxu0 %v3426
      %3728 = vmatpush1.bf16.msra.mxu0 %v3425
      %3729 = vmatprep.subr.bf16.mxu0 %v3424
      %3730 = vmatpush1.bf16.msra.mxu0 %v3423
      %3731 = vmatprep.subr.bf16.mxu0 %v3422
      %3732 = vmatpush1.bf16.msra.mxu0 %v3421
      %3733 = vmatprep.subr.bf16.mxu0 %v3420
      %3734 = vmatpush1.bf16.msra.mxu0 %v3419
      %3735 = vmatprep.subr.bf16.mxu0 %v3418
      %3736 = vmatpush1.bf16.msra.mxu0 %v3417
      %3737 = vmatprep.subr.bf16.mxu0 0
      %3738 = vmatpush2.bf16.msra.mxu0 0
      %3739 = vmatprep.subr.bf16.mxu0 0
      %3740 = vmatpush2.bf16.msra.mxu0 0
      %3741 = vmatprep.subr.bf16.mxu0 0
      %3742 = vmatpush2.bf16.msra.mxu0 0
      %3743 = vmatprep.subr.bf16.mxu0 0
      %3744 = vmatpush2.bf16.msra.mxu0 0
      %3745 = vmatprep.subr.bf16.mxu0 0
      %3746 = vmatpush2.bf16.msra.mxu0 0
      %3747 = vmatprep.subr.bf16.mxu0 0
      %3748 = vmatpush2.bf16.msra.mxu0 0
      %3749 = vmatprep.subr.bf16.mxu0 0
      %3750 = vmatpush2.bf16.msra.mxu0 0
      %3751 = vmatprep.subr.bf16.mxu0 0
      %3752 = vmatpush2.bf16.msra.mxu0 0
      %3753 = vmatprep.mubr.bf16.mxu0 0
      %3754 = vmatmul.mubr.bf16.gmra.mxu0 %v3689
      %v3755 = vpop.f32.mrf.mxu0
      %v3756 = vadd.f32 %v3468, %v3755
      %v3757 = vpop.f32.mrf.mxu0
      %v3758 = vadd.f32 %v3468, %v3757
      %v3759 = vpop.f32.mrf.mxu0
      %v3760 = vadd.f32 %v3473, %v3759
      %v3761 = vpop.f32.mrf.mxu0
      %v3762 = vadd.f32 %v3473, %v3761
      %3763 = vmatprep.mubr.bf16.mxu0 0
      %3764 = vmatmul.mubr.bf16.gmra.mxu0 %v3690
      %v3765 = vpop.f32.mrf.mxu0
      %v3766 = vadd.f32 %v3478, %v3765
      %v3767 = vpop.f32.mrf.mxu0
      %v3768 = vadd.f32 %v3478, %v3767
      %v3769 = vpop.f32.mrf.mxu0
      %v3770 = vadd.f32 %v3483, %v3769
      %v3771 = vpop.f32.mrf.mxu0
      %v3772 = vadd.f32 %v3483, %v3771
      %3773 = vmatprep.mubr.bf16.mxu0 0
      %3774 = vmatmul.mubr.bf16.gmra.mxu0 %v3691
      %v3775 = vpop.f32.mrf.mxu0
      %v3776 = vadd.f32 %v3488, %v3775
      %v3777 = vpop.f32.mrf.mxu0
      %v3778 = vadd.f32 %v3488, %v3777
      %v3779 = vpop.f32.mrf.mxu0
      %v3780 = vadd.f32 %v3493, %v3779
      %v3781 = vpop.f32.mrf.mxu0
      %v3782 = vadd.f32 %v3493, %v3781
      %3783 = vmatprep.mubr.bf16.mxu0 0
      %3784 = vmatmul.mubr.bf16.gmra.mxu0 %v3692
      %v3785 = vpop.f32.mrf.mxu0
      %v3786 = vadd.f32 %v3498, %v3785
      %v3787 = vpop.f32.mrf.mxu0
      %v3788 = vadd.f32 %v3498, %v3787
      %v3789 = vpop.f32.mrf.mxu0
      %v3790 = vadd.f32 %v3503, %v3789
      %v3791 = vpop.f32.mrf.mxu0
      %v3792 = vadd.f32 %v3503, %v3791
      %3793 = vmatprep.mubr.bf16.mxu0 0
      %3794 = vmatmul.mubr.bf16.gmra.mxu0 %v3693
      %v3795 = vpop.f32.mrf.mxu0
      %v3796 = vadd.f32 %v3508, %v3795
      %v3797 = vpop.f32.mrf.mxu0
      %v3798 = vadd.f32 %v3508, %v3797
      %v3799 = vpop.f32.mrf.mxu0
      %v3800 = vadd.f32 %v3513, %v3799
      %v3801 = vpop.f32.mrf.mxu0
      %v3802 = vadd.f32 %v3513, %v3801
      %3803 = vmatprep.mubr.bf16.mxu0 0
      %3804 = vmatmul.mubr.bf16.gmra.mxu0 %v3694
      %v3805 = vpop.f32.mrf.mxu0
      %v3806 = vadd.f32 %v3518, %v3805
      %v3807 = vpop.f32.mrf.mxu0
      %v3808 = vadd.f32 %v3518, %v3807
      %v3809 = vpop.f32.mrf.mxu0
      %v3810 = vadd.f32 %v3523, %v3809
      %v3811 = vpop.f32.mrf.mxu0
      %v3812 = vadd.f32 %v3523, %v3811
      %3813 = vmatprep.mubr.bf16.mxu0 0
      %3814 = vmatmul.mubr.bf16.gmra.mxu0 %v3695
      %v3815 = vpop.f32.mrf.mxu0
      %v3816 = vadd.f32 %v3528, %v3815
      %v3817 = vpop.f32.mrf.mxu0
      %v3818 = vadd.f32 %v3528, %v3817
      %v3819 = vpop.f32.mrf.mxu0
      %v3820 = vadd.f32 %v3533, %v3819
      %v3821 = vpop.f32.mrf.mxu0
      %v3822 = vadd.f32 %v3533, %v3821
      %3823 = vmatprep.mubr.bf16.mxu0 0
      %3824 = vmatmul.mubr.bf16.gmra.mxu0 %v3696
      %v3825 = vpop.f32.mrf.mxu0
      %v3826 = vadd.f32 %v3538, %v3825
      %v3827 = vpop.f32.mrf.mxu0
      %v3828 = vadd.f32 %v3538, %v3827
      %v3829 = vpop.f32.mrf.mxu0
      %v3830 = vadd.f32 %v3543, %v3829
      %v3831 = vpop.f32.mrf.mxu0
      %v3832 = vadd.f32 %v3543, %v3831
      %3833 = vmatprep.mubr.bf16.mxu0 0
      %3834 = vmatmul.mubr.bf16.gmra.mxu0 %v3697
      %v3835 = vpop.f32.mrf.mxu0
      %v3836 = vadd.f32 %v3548, %v3835
      %v3837 = vpop.f32.mrf.mxu0
      %v3838 = vadd.f32 %v3548, %v3837
      %v3839 = vpop.f32.mrf.mxu0
      %v3840 = vadd.f32 %v3553, %v3839
      %v3841 = vpop.f32.mrf.mxu0
      %v3842 = vadd.f32 %v3553, %v3841
      %3843 = vmatprep.mubr.bf16.mxu0 0
      %3844 = vmatmul.mubr.bf16.gmra.mxu0 %v3698
      %v3845 = vpop.f32.mrf.mxu0
      %v3846 = vadd.f32 %v3558, %v3845
      %v3847 = vpop.f32.mrf.mxu0
      %v3848 = vadd.f32 %v3558, %v3847
      %v3849 = vpop.f32.mrf.mxu0
      %v3850 = vadd.f32 %v3563, %v3849
      %v3851 = vpop.f32.mrf.mxu0
      %v3852 = vadd.f32 %v3563, %v3851
      %3853 = vmatprep.mubr.bf16.mxu0 0
      %3854 = vmatmul.mubr.bf16.gmra.mxu0 %v3699
      %v3855 = vpop.f32.mrf.mxu0
      %v3856 = vadd.f32 %v3568, %v3855
      %v3857 = vpop.f32.mrf.mxu0
      %v3858 = vadd.f32 %v3568, %v3857
      %v3859 = vpop.f32.mrf.mxu0
      %v3860 = vadd.f32 %v3573, %v3859
      %v3861 = vpop.f32.mrf.mxu0
      %v3862 = vadd.f32 %v3573, %v3861
      %3863 = vmatprep.mubr.bf16.mxu0 0
      %3864 = vmatmul.mubr.bf16.gmra.mxu0 %v3700
      %v3865 = vpop.f32.mrf.mxu0
      %v3866 = vadd.f32 %v3578, %v3865
      %v3867 = vpop.f32.mrf.mxu0
      %v3868 = vadd.f32 %v3578, %v3867
      %v3869 = vpop.f32.mrf.mxu0
      %v3870 = vadd.f32 %v3583, %v3869
      %v3871 = vpop.f32.mrf.mxu0
      %v3872 = vadd.f32 %v3583, %v3871
      %3873 = vmatprep.mubr.bf16.mxu0 0
      %3874 = vmatmul.mubr.bf16.gmra.mxu0 %v3701
      %v3875 = vpop.f32.mrf.mxu0
      %v3876 = vadd.f32 %v3588, %v3875
      %v3877 = vpop.f32.mrf.mxu0
      %v3878 = vadd.f32 %v3588, %v3877
      %v3879 = vpop.f32.mrf.mxu0
      %v3880 = vadd.f32 %v3593, %v3879
      %v3881 = vpop.f32.mrf.mxu0
      %v3882 = vadd.f32 %v3593, %v3881
      %3883 = vmatprep.mubr.bf16.mxu0 0
      %3884 = vmatmul.mubr.bf16.gmra.mxu0 %v3702
      %v3885 = vpop.f32.mrf.mxu0
      %v3886 = vadd.f32 %v3598, %v3885
      %v3887 = vpop.f32.mrf.mxu0
      %v3888 = vadd.f32 %v3598, %v3887
      %v3889 = vpop.f32.mrf.mxu0
      %v3890 = vadd.f32 %v3603, %v3889
      %v3891 = vpop.f32.mrf.mxu0
      %v3892 = vadd.f32 %v3603, %v3891
      %3893 = vmatprep.mubr.bf16.mxu0 0
      %3894 = vmatmul.mubr.bf16.gmra.mxu0 %v3703
      %v3895 = vpop.f32.mrf.mxu0
      %v3896 = vadd.f32 %v3608, %v3895
      %v3897 = vpop.f32.mrf.mxu0
      %v3898 = vadd.f32 %v3608, %v3897
      %v3899 = vpop.f32.mrf.mxu0
      %v3900 = vadd.f32 %v3613, %v3899
      %v3901 = vpop.f32.mrf.mxu0
      %v3902 = vadd.f32 %v3613, %v3901
      %3903 = vmatprep.mubr.bf16.mxu0 0
      %3904 = vmatmul.mubr.bf16.gmra.mxu0 %v3704
      %v3905 = vpop.f32.mrf.mxu0
      %v3906 = vadd.f32 %v3618, %v3905
      %v3907 = vpop.f32.mrf.mxu0
      %v3908 = vadd.f32 %v3618, %v3907
      %v3909 = vpop.f32.mrf.mxu0
      %v3910 = vadd.f32 %v3623, %v3909
      %v3911 = vpop.f32.mrf.mxu0
      %v3912 = vadd.f32 %v3623, %v3911
      %3913 = vdwg.mxu0
      %v3914 = vld [vmem:[%s273] sm:$0xff]
      %v3915 = vld [vmem:[%s273 + $0x8] sm:$0xff]
      %v3916 = vld [vmem:[%s273 + $0x10] sm:$0xff]
      %v3917 = vld [vmem:[%s273 + $0x18] sm:$0xff]
      %v3918 = vld [vmem:[%s273 + $0x20] sm:$0xff]
      %v3919 = vld [vmem:[%s273 + $0x28] sm:$0xff]
      %v3920 = vld [vmem:[%s273 + $0x30] sm:$0xff]
      %v3921 = vld [vmem:[%s273 + $0x38] sm:$0xff]
      %v3922 = vld [vmem:[%s273 + $0x40] sm:$0xff]
      %v3923 = vld [vmem:[%s273 + $0x48] sm:$0xff]
      %v3924 = vld [vmem:[%s273 + $0x50] sm:$0xff]
      %v3925 = vld [vmem:[%s273 + $0x58] sm:$0xff]
      %v3926 = vld [vmem:[%s273 + $0x60] sm:$0xff]
      %v3927 = vld [vmem:[%s273 + $0x68] sm:$0xff]
      %v3928 = vld [vmem:[%s273 + $0x70] sm:$0xff]
      %v3929 = vld [vmem:[%s273 + $0x78] sm:$0xff]
      %v3930 = vld [vmem:[%s273 + $0x80] sm:$0xff]
      %v3931 = vld [vmem:[%s273 + $0x88] sm:$0xff]
      %v3932 = vld [vmem:[%s273 + $0x90] sm:$0xff]
      %v3933 = vld [vmem:[%s273 + $0x98] sm:$0xff]
      %v3934 = vld [vmem:[%s273 + $0xa0] sm:$0xff]
      %v3935 = vld [vmem:[%s273 + $0xa8] sm:$0xff]
      %v3936 = vld [vmem:[%s273 + $0xb0] sm:$0xff]
      %v3937 = vld [vmem:[%s273 + $0xb8] sm:$0xff]
      %v3938 = vld [vmem:[%s273 + $0xc0] sm:$0xff]
      %v3939 = vld [vmem:[%s273 + $0xc8] sm:$0xff]
      %v3940 = vld [vmem:[%s273 + $0xd0] sm:$0xff]
      %v3941 = vld [vmem:[%s273 + $0xd8] sm:$0xff]
      %v3942 = vld [vmem:[%s273 + $0xe0] sm:$0xff]
      %v3943 = vld [vmem:[%s273 + $0xe8] sm:$0xff]
      %v3944 = vld [vmem:[%s273 + $0xf0] sm:$0xff]
      %v3945 = vld [vmem:[%s273 + $0xf8] sm:$0xff]
      %v3946 = vld [vmem:[%s273 + $0x100] sm:$0xff]
      %v3947 = vld [vmem:[%s273 + $0x108] sm:$0xff]
      %v3948 = vld [vmem:[%s273 + $0x110] sm:$0xff]
      %v3949 = vld [vmem:[%s273 + $0x118] sm:$0xff]
      %v3950 = vld [vmem:[%s273 + $0x120] sm:$0xff]
      %v3951 = vld [vmem:[%s273 + $0x128] sm:$0xff]
      %v3952 = vld [vmem:[%s273 + $0x130] sm:$0xff]
      %v3953 = vld [vmem:[%s273 + $0x138] sm:$0xff]
      %v3954 = vld [vmem:[%s273 + $0x140] sm:$0xff]
      %v3955 = vld [vmem:[%s273 + $0x148] sm:$0xff]
      %v3956 = vld [vmem:[%s273 + $0x150] sm:$0xff]
      %v3957 = vld [vmem:[%s273 + $0x158] sm:$0xff]
      %v3958 = vld [vmem:[%s273 + $0x160] sm:$0xff]
      %v3959 = vld [vmem:[%s273 + $0x168] sm:$0xff]
      %v3960 = vld [vmem:[%s273 + $0x170] sm:$0xff]
      %v3961 = vld [vmem:[%s273 + $0x178] sm:$0xff]
      %v3962 = vld [vmem:[%s273 + $0x180] sm:$0xff]
      %v3963 = vld [vmem:[%s273 + $0x188] sm:$0xff]
      %v3964 = vld [vmem:[%s273 + $0x190] sm:$0xff]
      %v3965 = vld [vmem:[%s273 + $0x198] sm:$0xff]
      %v3966 = vld [vmem:[%s273 + $0x1a0] sm:$0xff]
      %v3967 = vld [vmem:[%s273 + $0x1a8] sm:$0xff]
      %v3968 = vld [vmem:[%s273 + $0x1b0] sm:$0xff]
      %v3969 = vld [vmem:[%s273 + $0x1b8] sm:$0xff]
      %v3970 = vld [vmem:[%s273 + $0x1c0] sm:$0xff]
      %v3971 = vld [vmem:[%s273 + $0x1c8] sm:$0xff]
      %v3972 = vld [vmem:[%s273 + $0x1d0] sm:$0xff]
      %v3973 = vld [vmem:[%s273 + $0x1d8] sm:$0xff]
      %v3974 = vld [vmem:[%s273 + $0x1e0] sm:$0xff]
      %v3975 = vld [vmem:[%s273 + $0x1e8] sm:$0xff]
      %v3976 = vld [vmem:[%s273 + $0x1f0] sm:$0xff]
      %v3977 = vld [vmem:[%s273 + $0x1f8] sm:$0xff]
      %v3978 = vadd.f32 %v3756, %v3914
      %v3979 = vadd.f32 %v3758, %v3915
      %v3980 = vadd.f32 %v3760, %v3916
      %v3981 = vadd.f32 %v3762, %v3917
      %v3982 = vadd.f32 %v3766, %v3918
      %v3983 = vadd.f32 %v3768, %v3919
      %v3984 = vadd.f32 %v3770, %v3920
      %v3985 = vadd.f32 %v3772, %v3921
      %v3986 = vadd.f32 %v3776, %v3922
      %v3987 = vadd.f32 %v3778, %v3923
      %v3988 = vadd.f32 %v3780, %v3924
      %v3989 = vadd.f32 %v3782, %v3925
      %v3990 = vadd.f32 %v3786, %v3926
      %v3991 = vadd.f32 %v3788, %v3927
      %v3992 = vadd.f32 %v3790, %v3928
      %v3993 = vadd.f32 %v3792, %v3929
      %v3994 = vadd.f32 %v3796, %v3930
      %v3995 = vadd.f32 %v3798, %v3931
      %v3996 = vadd.f32 %v3800, %v3932
      %v3997 = vadd.f32 %v3802, %v3933
      %v3998 = vadd.f32 %v3806, %v3934
      %v3999 = vadd.f32 %v3808, %v3935
      %v4000 = vadd.f32 %v3810, %v3936
      %v4001 = vadd.f32 %v3812, %v3937
      %v4002 = vadd.f32 %v3816, %v3938
      %v4003 = vadd.f32 %v3818, %v3939
      %v4004 = vadd.f32 %v3820, %v3940
      %v4005 = vadd.f32 %v3822, %v3941
      %v4006 = vadd.f32 %v3826, %v3942
      %v4007 = vadd.f32 %v3828, %v3943
      %v4008 = vadd.f32 %v3830, %v3944
      %v4009 = vadd.f32 %v3832, %v3945
      %v4010 = vadd.f32 %v3836, %v3946
      %v4011 = vadd.f32 %v3838, %v3947
      %v4012 = vadd.f32 %v3840, %v3948
      %v4013 = vadd.f32 %v3842, %v3949
      %v4014 = vadd.f32 %v3846, %v3950
      %v4015 = vadd.f32 %v3848, %v3951
      %v4016 = vadd.f32 %v3850, %v3952
      %v4017 = vadd.f32 %v3852, %v3953
      %v4018 = vadd.f32 %v3856, %v3954
      %v4019 = vadd.f32 %v3858, %v3955
      %v4020 = vadd.f32 %v3860, %v3956
      %v4021 = vadd.f32 %v3862, %v3957
      %v4022 = vadd.f32 %v3866, %v3958
      %v4023 = vadd.f32 %v3868, %v3959
      %v4024 = vadd.f32 %v3870, %v3960
      %v4025 = vadd.f32 %v3872, %v3961
      %v4026 = vadd.f32 %v3876, %v3962
      %v4027 = vadd.f32 %v3878, %v3963
      %v4028 = vadd.f32 %v3880, %v3964
      %v4029 = vadd.f32 %v3882, %v3965
      %v4030 = vadd.f32 %v3886, %v3966
      %v4031 = vadd.f32 %v3888, %v3967
      %v4032 = vadd.f32 %v3890, %v3968
      %v4033 = vadd.f32 %v3892, %v3969
      %v4034 = vadd.f32 %v3896, %v3970
      %v4035 = vadd.f32 %v3898, %v3971
      %v4036 = vadd.f32 %v3900, %v3972
      %v4037 = vadd.f32 %v3902, %v3973
      %v4038 = vadd.f32 %v3906, %v3974
      %v4039 = vadd.f32 %v3908, %v3975
      %v4040 = vadd.f32 %v3910, %v3976
      %v4041 = vadd.f32 %v3912, %v3977
      %vm4042 = vcmp.gt.f32.partialorder %v3978, 0.0
      %vm4043 = vcmp.gt.f32.partialorder %v3979, 0.0
      %vm4044 = vcmp.gt.f32.partialorder %v3980, 0.0
      %vm4045 = vcmp.gt.f32.partialorder %v3981, 0.0
      %vm4046 = vcmp.gt.f32.partialorder %v3982, 0.0
      %vm4047 = vcmp.gt.f32.partialorder %v3983, 0.0
      %vm4048 = vcmp.gt.f32.partialorder %v3984, 0.0
      %vm4049 = vcmp.gt.f32.partialorder %v3985, 0.0
      %vm4050 = vcmp.gt.f32.partialorder %v3986, 0.0
      %vm4051 = vcmp.gt.f32.partialorder %v3987, 0.0
      %vm4052 = vcmp.gt.f32.partialorder %v3988, 0.0
      %vm4053 = vcmp.gt.f32.partialorder %v3989, 0.0
      %vm4054 = vcmp.gt.f32.partialorder %v3990, 0.0
      %vm4055 = vcmp.gt.f32.partialorder %v3991, 0.0
      %vm4056 = vcmp.gt.f32.partialorder %v3992, 0.0
      %vm4057 = vcmp.gt.f32.partialorder %v3993, 0.0
      %vm4058 = vcmp.gt.f32.partialorder %v3994, 0.0
      %vm4059 = vcmp.gt.f32.partialorder %v3995, 0.0
      %vm4060 = vcmp.gt.f32.partialorder %v3996, 0.0
      %vm4061 = vcmp.gt.f32.partialorder %v3997, 0.0
      %vm4062 = vcmp.gt.f32.partialorder %v3998, 0.0
      %vm4063 = vcmp.gt.f32.partialorder %v3999, 0.0
      %vm4064 = vcmp.gt.f32.partialorder %v4000, 0.0
      %vm4065 = vcmp.gt.f32.partialorder %v4001, 0.0
      %vm4066 = vcmp.gt.f32.partialorder %v4002, 0.0
      %vm4067 = vcmp.gt.f32.partialorder %v4003, 0.0
      %vm4068 = vcmp.gt.f32.partialorder %v4004, 0.0
      %vm4069 = vcmp.gt.f32.partialorder %v4005, 0.0
      %vm4070 = vcmp.gt.f32.partialorder %v4006, 0.0
      %vm4071 = vcmp.gt.f32.partialorder %v4007, 0.0
      %vm4072 = vcmp.gt.f32.partialorder %v4008, 0.0
      %vm4073 = vcmp.gt.f32.partialorder %v4009, 0.0
      %vm4074 = vcmp.gt.f32.partialorder %v4010, 0.0
      %vm4075 = vcmp.gt.f32.partialorder %v4011, 0.0
      %vm4076 = vcmp.gt.f32.partialorder %v4012, 0.0
      %vm4077 = vcmp.gt.f32.partialorder %v4013, 0.0
      %vm4078 = vcmp.gt.f32.partialorder %v4014, 0.0
      %vm4079 = vcmp.gt.f32.partialorder %v4015, 0.0
      %vm4080 = vcmp.gt.f32.partialorder %v4016, 0.0
      %vm4081 = vcmp.gt.f32.partialorder %v4017, 0.0
      %vm4082 = vcmp.gt.f32.partialorder %v4018, 0.0
      %vm4083 = vcmp.gt.f32.partialorder %v4019, 0.0
      %vm4084 = vcmp.gt.f32.partialorder %v4020, 0.0
      %vm4085 = vcmp.gt.f32.partialorder %v4021, 0.0
      %vm4086 = vcmp.gt.f32.partialorder %v4022, 0.0
      %vm4087 = vcmp.gt.f32.partialorder %v4023, 0.0
      %vm4088 = vcmp.gt.f32.partialorder %v4024, 0.0
      %vm4089 = vcmp.gt.f32.partialorder %v4025, 0.0
      %vm4090 = vcmp.gt.f32.partialorder %v4026, 0.0
      %vm4091 = vcmp.gt.f32.partialorder %v4027, 0.0
      %vm4092 = vcmp.gt.f32.partialorder %v4028, 0.0
      %vm4093 = vcmp.gt.f32.partialorder %v4029, 0.0
      %vm4094 = vcmp.gt.f32.partialorder %v4030, 0.0
      %vm4095 = vcmp.gt.f32.partialorder %v4031, 0.0
      %vm4096 = vcmp.gt.f32.partialorder %v4032, 0.0
      %vm4097 = vcmp.gt.f32.partialorder %v4033, 0.0
      %vm4098 = vcmp.gt.f32.partialorder %v4034, 0.0
      %vm4099 = vcmp.gt.f32.partialorder %v4035, 0.0
      %vm4100 = vcmp.gt.f32.partialorder %v4036, 0.0
      %vm4101 = vcmp.gt.f32.partialorder %v4037, 0.0
      %vm4102 = vcmp.gt.f32.partialorder %v4038, 0.0
      %vm4103 = vcmp.gt.f32.partialorder %v4039, 0.0
      %vm4104 = vcmp.gt.f32.partialorder %v4040, 0.0
      %vm4105 = vcmp.gt.f32.partialorder %v4041, 0.0
      %v4106 = vmul.f32 %v3978, 0.01
      %v4107 = vmul.f32 %v3979, 0.01
      %v4108 = vmul.f32 %v3980, 0.01
      %v4109 = vmul.f32 %v3981, 0.01
      %v4110 = vmul.f32 %v3982, 0.01
      %v4111 = vmul.f32 %v3983, 0.01
      %v4112 = vmul.f32 %v3984, 0.01
      %v4113 = vmul.f32 %v3985, 0.01
      %v4114 = vmul.f32 %v3986, 0.01
      %v4115 = vmul.f32 %v3987, 0.01
      %v4116 = vmul.f32 %v3988, 0.01
      %v4117 = vmul.f32 %v3989, 0.01
      %v4118 = vmul.f32 %v3990, 0.01
      %v4119 = vmul.f32 %v3991, 0.01
      %v4120 = vmul.f32 %v3992, 0.01
      %v4121 = vmul.f32 %v3993, 0.01
      %v4122 = vmul.f32 %v3994, 0.01
      %v4123 = vmul.f32 %v3995, 0.01
      %v4124 = vmul.f32 %v3996, 0.01
      %v4125 = vmul.f32 %v3997, 0.01
      %v4126 = vmul.f32 %v3998, 0.01
      %v4127 = vmul.f32 %v3999, 0.01
      %v4128 = vmul.f32 %v4000, 0.01
      %v4129 = vmul.f32 %v4001, 0.01
      %v4130 = vmul.f32 %v4002, 0.01
      %v4131 = vmul.f32 %v4003, 0.01
      %v4132 = vmul.f32 %v4004, 0.01
      %v4133 = vmul.f32 %v4005, 0.01
      %v4134 = vmul.f32 %v4006, 0.01
      %v4135 = vmul.f32 %v4007, 0.01
      %v4136 = vmul.f32 %v4008, 0.01
      %v4137 = vmul.f32 %v4009, 0.01
      %v4138 = vmul.f32 %v4010, 0.01
      %v4139 = vmul.f32 %v4011, 0.01
      %v4140 = vmul.f32 %v4012, 0.01
      %v4141 = vmul.f32 %v4013, 0.01
      %v4142 = vmul.f32 %v4014, 0.01
      %v4143 = vmul.f32 %v4015, 0.01
      %v4144 = vmul.f32 %v4016, 0.01
      %v4145 = vmul.f32 %v4017, 0.01
      %v4146 = vmul.f32 %v4018, 0.01
      %v4147 = vmul.f32 %v4019, 0.01
      %v4148 = vmul.f32 %v4020, 0.01
      %v4149 = vmul.f32 %v4021, 0.01
      %v4150 = vmul.f32 %v4022, 0.01
      %v4151 = vmul.f32 %v4023, 0.01
      %v4152 = vmul.f32 %v4024, 0.01
      %v4153 = vmul.f32 %v4025, 0.01
      %v4154 = vmul.f32 %v4026, 0.01
      %v4155 = vmul.f32 %v4027, 0.01
      %v4156 = vmul.f32 %v4028, 0.01
      %v4157 = vmul.f32 %v4029, 0.01
      %v4158 = vmul.f32 %v4030, 0.01
      %v4159 = vmul.f32 %v4031, 0.01
      %v4160 = vmul.f32 %v4032, 0.01
      %v4161 = vmul.f32 %v4033, 0.01
      %v4162 = vmul.f32 %v4034, 0.01
      %v4163 = vmul.f32 %v4035, 0.01
      %v4164 = vmul.f32 %v4036, 0.01
      %v4165 = vmul.f32 %v4037, 0.01
      %v4166 = vmul.f32 %v4038, 0.01
      %v4167 = vmul.f32 %v4039, 0.01
      %v4168 = vmul.f32 %v4040, 0.01
      %v4169 = vmul.f32 %v4041, 0.01
      %v4170 = vsel %vm4042, %v3978, %v4106
      %v4171 = vsel %vm4043, %v3979, %v4107
      %v4172 = vsel %vm4044, %v3980, %v4108
      %v4173 = vsel %vm4045, %v3981, %v4109
      %v4174 = vsel %vm4046, %v3982, %v4110
      %v4175 = vsel %vm4047, %v3983, %v4111
      %v4176 = vsel %vm4048, %v3984, %v4112
      %v4177 = vsel %vm4049, %v3985, %v4113
      %v4178 = vsel %vm4050, %v3986, %v4114
      %v4179 = vsel %vm4051, %v3987, %v4115
      %v4180 = vsel %vm4052, %v3988, %v4116
      %v4181 = vsel %vm4053, %v3989, %v4117
      %v4182 = vsel %vm4054, %v3990, %v4118
      %v4183 = vsel %vm4055, %v3991, %v4119
      %v4184 = vsel %vm4056, %v3992, %v4120
      %v4185 = vsel %vm4057, %v3993, %v4121
      %v4186 = vsel %vm4058, %v3994, %v4122
      %v4187 = vsel %vm4059, %v3995, %v4123
      %v4188 = vsel %vm4060, %v3996, %v4124
      %v4189 = vsel %vm4061, %v3997, %v4125
      %v4190 = vsel %vm4062, %v3998, %v4126
      %v4191 = vsel %vm4063, %v3999, %v4127
      %v4192 = vsel %vm4064, %v4000, %v4128
      %v4193 = vsel %vm4065, %v4001, %v4129
      %v4194 = vsel %vm4066, %v4002, %v4130
      %v4195 = vsel %vm4067, %v4003, %v4131
      %v4196 = vsel %vm4068, %v4004, %v4132
      %v4197 = vsel %vm4069, %v4005, %v4133
      %v4198 = vsel %vm4070, %v4006, %v4134
      %v4199 = vsel %vm4071, %v4007, %v4135
      %v4200 = vsel %vm4072, %v4008, %v4136
      %v4201 = vsel %vm4073, %v4009, %v4137
      %v4202 = vsel %vm4074, %v4010, %v4138
      %v4203 = vsel %vm4075, %v4011, %v4139
      %v4204 = vsel %vm4076, %v4012, %v4140
      %v4205 = vsel %vm4077, %v4013, %v4141
      %v4206 = vsel %vm4078, %v4014, %v4142
      %v4207 = vsel %vm4079, %v4015, %v4143
      %v4208 = vsel %vm4080, %v4016, %v4144
      %v4209 = vsel %vm4081, %v4017, %v4145
      %v4210 = vsel %vm4082, %v4018, %v4146
      %v4211 = vsel %vm4083, %v4019, %v4147
      %v4212 = vsel %vm4084, %v4020, %v4148
      %v4213 = vsel %vm4085, %v4021, %v4149
      %v4214 = vsel %vm4086, %v4022, %v4150
      %v4215 = vsel %vm4087, %v4023, %v4151
      %v4216 = vsel %vm4088, %v4024, %v4152
      %v4217 = vsel %vm4089, %v4025, %v4153
      %v4218 = vsel %vm4090, %v4026, %v4154
      %v4219 = vsel %vm4091, %v4027, %v4155
      %v4220 = vsel %vm4092, %v4028, %v4156
      %v4221 = vsel %vm4093, %v4029, %v4157
      %v4222 = vsel %vm4094, %v4030, %v4158
      %v4223 = vsel %vm4095, %v4031, %v4159
      %v4224 = vsel %vm4096, %v4032, %v4160
      %v4225 = vsel %vm4097, %v4033, %v4161
      %v4226 = vsel %vm4098, %v4034, %v4162
      %v4227 = vsel %vm4099, %v4035, %v4163
      %v4228 = vsel %vm4100, %v4036, %v4164
      %v4229 = vsel %vm4101, %v4037, %v4165
      %v4230 = vsel %vm4102, %v4038, %v4166
      %v4231 = vsel %vm4103, %v4039, %v4167
      %v4232 = vsel %vm4104, %v4040, %v4168
      %v4233 = vsel %vm4105, %v4041, %v4169
      %4234 = vst [vmem:[%s278] sm:$0xff] %v4170
      %4235 = vst [vmem:[%s278 + $0x8] sm:$0xff] %v4171
      %4236 = vst [vmem:[%s278 + $0x10] sm:$0xff] %v4172
      %4237 = vst [vmem:[%s278 + $0x18] sm:$0xff] %v4173
      %4238 = vst [vmem:[%s278 + $0x20] sm:$0xff] %v4174
      %4239 = vst [vmem:[%s278 + $0x28] sm:$0xff] %v4175
      %4240 = vst [vmem:[%s278 + $0x30] sm:$0xff] %v4176
      %4241 = vst [vmem:[%s278 + $0x38] sm:$0xff] %v4177
      %4242 = vst [vmem:[%s278 + $0x40] sm:$0xff] %v4178
      %4243 = vst [vmem:[%s278 + $0x48] sm:$0xff] %v4179
      %4244 = vst [vmem:[%s278 + $0x50] sm:$0xff] %v4180
      %4245 = vst [vmem:[%s278 + $0x58] sm:$0xff] %v4181
      %4246 = vst [vmem:[%s278 + $0x60] sm:$0xff] %v4182
      %4247 = vst [vmem:[%s278 + $0x68] sm:$0xff] %v4183
      %4248 = vst [vmem:[%s278 + $0x70] sm:$0xff] %v4184
      %4249 = vst [vmem:[%s278 + $0x78] sm:$0xff] %v4185
      %4250 = vst [vmem:[%s278 + $0x80] sm:$0xff] %v4186
      %4251 = vst [vmem:[%s278 + $0x88] sm:$0xff] %v4187
      %4252 = vst [vmem:[%s278 + $0x90] sm:$0xff] %v4188
      %4253 = vst [vmem:[%s278 + $0x98] sm:$0xff] %v4189
      %4254 = vst [vmem:[%s278 + $0xa0] sm:$0xff] %v4190
      %4255 = vst [vmem:[%s278 + $0xa8] sm:$0xff] %v4191
      %4256 = vst [vmem:[%s278 + $0xb0] sm:$0xff] %v4192
      %4257 = vst [vmem:[%s278 + $0xb8] sm:$0xff] %v4193
      %4258 = vst [vmem:[%s278 + $0xc0] sm:$0xff] %v4194
      %4259 = vst [vmem:[%s278 + $0xc8] sm:$0xff] %v4195
      %4260 = vst [vmem:[%s278 + $0xd0] sm:$0xff] %v4196
      %4261 = vst [vmem:[%s278 + $0xd8] sm:$0xff] %v4197
      %4262 = vst [vmem:[%s278 + $0xe0] sm:$0xff] %v4198
      %4263 = vst [vmem:[%s278 + $0xe8] sm:$0xff] %v4199
      %4264 = vst [vmem:[%s278 + $0xf0] sm:$0xff] %v4200
      %4265 = vst [vmem:[%s278 + $0xf8] sm:$0xff] %v4201
      %4266 = vst [vmem:[%s278 + $0x100] sm:$0xff] %v4202
      %4267 = vst [vmem:[%s278 + $0x108] sm:$0xff] %v4203
      %4268 = vst [vmem:[%s278 + $0x110] sm:$0xff] %v4204
      %4269 = vst [vmem:[%s278 + $0x118] sm:$0xff] %v4205
      %4270 = vst [vmem:[%s278 + $0x120] sm:$0xff] %v4206
      %4271 = vst [vmem:[%s278 + $0x128] sm:$0xff] %v4207
      %4272 = vst [vmem:[%s278 + $0x130] sm:$0xff] %v4208
      %4273 = vst [vmem:[%s278 + $0x138] sm:$0xff] %v4209
      %4274 = vst [vmem:[%s278 + $0x140] sm:$0xff] %v4210
      %4275 = vst [vmem:[%s278 + $0x148] sm:$0xff] %v4211
      %4276 = vst [vmem:[%s278 + $0x150] sm:$0xff] %v4212
      %4277 = vst [vmem:[%s278 + $0x158] sm:$0xff] %v4213
      %4278 = vst [vmem:[%s278 + $0x160] sm:$0xff] %v4214
      %4279 = vst [vmem:[%s278 + $0x168] sm:$0xff] %v4215
      %4280 = vst [vmem:[%s278 + $0x170] sm:$0xff] %v4216
      %4281 = vst [vmem:[%s278 + $0x178] sm:$0xff] %v4217
      %4282 = vst [vmem:[%s278 + $0x180] sm:$0xff] %v4218
      %4283 = vst [vmem:[%s278 + $0x188] sm:$0xff] %v4219
      %4284 = vst [vmem:[%s278 + $0x190] sm:$0xff] %v4220
      %4285 = vst [vmem:[%s278 + $0x198] sm:$0xff] %v4221
      %4286 = vst [vmem:[%s278 + $0x1a0] sm:$0xff] %v4222
      %4287 = vst [vmem:[%s278 + $0x1a8] sm:$0xff] %v4223
      %4288 = vst [vmem:[%s278 + $0x1b0] sm:$0xff] %v4224
      %4289 = vst [vmem:[%s278 + $0x1b8] sm:$0xff] %v4225
      %4290 = vst [vmem:[%s278 + $0x1c0] sm:$0xff] %v4226
      %4291 = vst [vmem:[%s278 + $0x1c8] sm:$0xff] %v4227
      %4292 = vst [vmem:[%s278 + $0x1d0] sm:$0xff] %v4228
      %4293 = vst [vmem:[%s278 + $0x1d8] sm:$0xff] %v4229
      %4294 = vst [vmem:[%s278 + $0x1e0] sm:$0xff] %v4230
      %4295 = vst [vmem:[%s278 + $0x1e8] sm:$0xff] %v4231
      %4296 = vst [vmem:[%s278 + $0x1f0] sm:$0xff] %v4232
      %4297 = vst [vmem:[%s278 + $0x1f8] sm:$0xff] %v4233
      %p4298 = scmp.lt.s32.totalorder %s18, 3
      %s4299 = scalar_select %p4298, %s18, 3
      %s4300 = smul.addr %s4299, 64
      %s4301 = smul.addr %s4300, 8
      %s4302 = scalar_lea.vmem %s7, %s4301
      // Predicated region
      $region49: #{block_forward.1} parent=47 // pred_check
        %p4303 = pneg %p188
      $region50: #{block_forward.1} parent=47 // pred_check_branch
        %4305 = sbr.rel (%p4303) target = $region52
      $region51: #{block_forward.1} parent=47 // pred_region
        _
      $region52: #{block_forward.1} parent=47 // pred_fallthru
        _
    $region48: #{block_forward.1} parent=5 // pred_fallthru
      _
    %p4306 = scmp.le.s32.totalorder 2, %s13
    // Predicated region
    $region53: #{block_forward.1} parent=5 // pred_check
      %p4307 = pneg %p4306
    $region54: #{block_forward.1} parent=5 // pred_check_branch
      %4309 = sbr.rel (%p4307) target = $region56
    $region55: #{block_forward.1} parent=5 // pred_region
      %s4310 = ssub.s32 %s13, 2
      // Predicated region
      $region57: #{block_forward.1} parent=55 // pred_check
        %p4311 = pneg %p194
      $region58: #{block_forward.1} parent=55 // pred_check_branch
        %4313 = sbr.rel (%p4311) target = $region60
      $region59: #{block_forward.1} parent=55 // pred_region
        %p4314 = scmp.lt.s32.totalorder %s19, 3
        %s4315 = scalar_select %p4314, %s19, 3
        %s4316 = smul.addr %s4315, 64
        %s4317 = smul.addr %s4316, 8
        %s4318 = scalar_lea.vmem %s7, %s4317
      $region60: #{block_forward.1} parent=55 // pred_fallthru
        _
    $region56: #{block_forward.1} parent=5 // pred_fallthru
      _
  $region6: #{block_forward.1} parent=0 // loop_footer
    %s17 = sadd.s32 1, %s13
  $region7: #{block_forward.1} parent=0 // loop_footer_branch
    %12 = sbr.rel target = $region3
  $region8: #{block_forward.1} parent=0 // loop_exit
    _

</llo_original>
